<compile_context>
chip_gen: v6e
topology: v6e:2x2x1
jax: 0.10.0
libtpu: 0.0.40
codegen_flags: <defaults>
</compile_context>

<pallas_src>
import functools

import jax
import jax.numpy as jnp
from jax.experimental import pallas as pl
from jax.experimental.pallas import tpu as pltpu

LANE = 128      # TPU lane width: all feature/channel dims are padded to this
SUBLANE = 8     # sublane width: tiny leading dims (graphs, bias slabs) padded to this
NUM_LAYERS = 5


def _round_up(n, m):
    return ((n + m - 1) // m) * m


# ----------------------------------------------------------------------------
# Fused Pallas kernel: 5x (aggregate -> MLP -> ReLU -> BN) -> pool -> fc1 -> fc2
# ----------------------------------------------------------------------------
def gin_fused_kernel(a_ref, x_ref, p_ref, w1_ref, w2_ref, vec_ref,
                     wf1_ref, wf2_ref, hvec_ref, o_ref, h_scr):
    """Whole GIN forward in one kernel.

    a_ref   : (Np, Np)  bf16  A_hat = A + (1+eps)*I (zero-padded rows/cols)
    x_ref   : (Np, 128) bf16  node features (feature dim zero-padded)
    p_ref   : (Gp, Np)  bf16  global_add_pool matrix (one-hot rows per graph)
    w1_ref  : (5, 128, 128) bf16  first Linear of each layer's MLP (zero-padded)
    w2_ref  : (5, 128, 128) bf16  second Linear with BN scale folded in
    vec_ref : (5, 8, 128)   f32   per-layer rows: 0 = b1, 1 = b2*scale, 2 = bn_shift
    wf1_ref : (128, 128)    bf16  fc1 weight
    wf2_ref : (128, 128)    bf16  fc2 weight, output dim padded 1 -> 128
    hvec_ref: (8, 128)      f32   row 0 = bf1, row 1 = bf2 (padded)
    o_ref   : (Gp, 128)     f32   head output; graph g scalar lives at [g, 0]
    h_scr   : (Np, 128)     bf16  VMEM-resident intermediate node features
    """
    for layer in range(NUM_LAYERS):  # static unroll: 5 layers
        # Layer 0 reads the input directly (no init copy); later layers read h.
        h_in = x_ref[...] if layer == 0 else h_scr[...]          # bf16 (Np, 128)
        # GINConv aggregation: (1+eps)*x_i + sum_{j in N(i)} x_j == A_hat @ h
        # bf16 x bf16 on the MXU with f32 accumulation.
        agg = jnp.dot(a_ref[...], h_in, preferred_element_type=jnp.float32)
        lvec = vec_ref[layer]           # (8, 128) slab of per-layer vectors (f32)
        b1 = lvec[0:1, :]
        b2s = lvec[1:2, :]              # b2 * bn_scale
        shift = lvec[2:3, :]            # beta - running_mean * bn_scale
        # MLP = Linear -> ReLU -> Linear (BN scale folded into w2/b2); all dots bf16.
        t = jnp.dot(agg.astype(jnp.bfloat16), w1_ref[layer],
                    preferred_element_type=jnp.float32) + b1
        t = jnp.maximum(t, 0.0)
        z = jnp.dot(t.astype(jnp.bfloat16), w2_ref[layer],
                    preferred_element_type=jnp.float32) + b2s
        # F.relu + BatchNorm(eval): scale*relu(z0)+shift == relu(z0*scale)+shift
        # (requires scale > 0; scale already folded, so only relu + shift remain).
        h_scr[...] = (jnp.maximum(z, 0.0) + shift).astype(jnp.bfloat16)

    # Head: global_add_pool (P @ h) -> fc1 -> ReLU -> (dropout=id, eval) -> fc2
    pooled = jnp.dot(p_ref[...], h_scr[...], preferred_element_type=jnp.float32)
    hvec = hvec_ref[...]
    t = jnp.dot(pooled.astype(jnp.bfloat16), wf1_ref[...],
                preferred_element_type=jnp.float32) + hvec[0:1, :]
    t = jnp.maximum(t, 0.0)
    o_ref[...] = jnp.dot(t.astype(jnp.bfloat16), wf2_ref[...],
                         preferred_element_type=jnp.float32) + hvec[1:2, :]


_VMEM = pl.BlockSpec(memory_space=pltpu.MemorySpace.VMEM)


def gin_fused(a_hat, x_pad, pool_mat, w1, w2, vec, wf1, wf2, hvec):
    n_pad = a_hat.shape[0]
    g_pad = pool_mat.shape[0]
    return pl.pallas_call(
        gin_fused_kernel,
        out_shape=jax.ShapeDtypeStruct((g_pad, LANE), jnp.float32),
        in_specs=[_VMEM] * 9,
        out_specs=_VMEM,
        scratch_shapes=[pltpu.VMEM((n_pad, LANE), jnp.bfloat16)],
        compiler_params=pltpu.CompilerParams(vmem_limit_bytes=64 * 1024 * 1024),
    )(a_hat, x_pad, pool_mat, w1, w2, vec, wf1, wf2, hvec)


# ----------------------------------------------------------------------------
# Parameter construction (deterministic, in-script; logical shapes)
# ----------------------------------------------------------------------------
def init_params(key, num_features, hidden_dim):
    params = {}
    dims_in = [num_features] + [hidden_dim] * (NUM_LAYERS - 1)
    for layer in range(NUM_LAYERS):
        f_in = dims_in[layer]
        k1, k2, key = jax.random.split(key, 3)
        params[f"w1_{layer}"] = 0.1 * jax.random.normal(k1, (f_in, hidden_dim), jnp.float32)
        params[f"b1_{layer}"] = jnp.zeros((hidden_dim,), jnp.float32)
        params[f"w2_{layer}"] = 0.1 * jax.random.normal(k2, (hidden_dim, hidden_dim), jnp.float32)
        params[f"b2_{layer}"] = jnp.zeros((hidden_dim,), jnp.float32)
        # BatchNorm1d init: gamma=1, beta=0, running_mean=0, running_var=1
        params[f"bn_gamma_{layer}"] = jnp.ones((hidden_dim,), jnp.float32)
        params[f"bn_beta_{layer}"] = jnp.zeros((hidden_dim,), jnp.float32)
        params[f"bn_mean_{layer}"] = jnp.zeros((hidden_dim,), jnp.float32)
        params[f"bn_var_{layer}"] = jnp.ones((hidden_dim,), jnp.float32)
    k1, k2, key = jax.random.split(key, 3)
    params["wf1"] = 0.1 * jax.random.normal(k1, (hidden_dim, hidden_dim), jnp.float32)
    params["bf1"] = jnp.zeros((hidden_dim,), jnp.float32)
    params["wf2"] = 0.1 * jax.random.normal(k2, (hidden_dim, 1), jnp.float32)
    params["bf2"] = jnp.zeros((1,), jnp.float32)
    return params


def _pad2(a, shape, dtype):
    out = jnp.zeros(shape, dtype)
    return out.at[:a.shape[0], :a.shape[1]].set(a.astype(dtype))


def prepare_params(params, hidden_dim):
    """Pad to lane width, fold eval-BatchNorm into the second Linear, stack layers.

    Weights are emitted in bf16 (MXU-native); biases/shift slabs stay f32 for
    the VPU adds.
    """
    w1s, w2s, vecs = [], [], []
    for layer in range(NUM_LAYERS):
        # TODO(synk): the relu/scale fold requires bn_scale > 0 (true for this
        #             init, gamma=1/var=1); add an unfused fallback for trained
        #             checkpoints with negative gamma.
        scale = params[f"bn_gamma_{layer}"] * jax.lax.rsqrt(params[f"bn_var_{layer}"] + 1e-5)
        shift = params[f"bn_beta_{layer}"] - params[f"bn_mean_{layer}"] * scale
        w1s.append(_pad2(params[f"w1_{layer}"], (LANE, LANE), jnp.bfloat16))
        w2s.append(_pad2(params[f"w2_{layer}"] * scale[None, :], (LANE, LANE), jnp.bfloat16))
        vec = jnp.zeros((SUBLANE, LANE), jnp.float32)
        vec = vec.at[0, :hidden_dim].set(params[f"b1_{layer}"])
        vec = vec.at[1, :hidden_dim].set(params[f"b2_{layer}"] * scale)
        vec = vec.at[2, :hidden_dim].set(shift)
        vecs.append(vec)
    w1 = jnp.stack(w1s)                      # (5, 128, 128) bf16
    w2 = jnp.stack(w2s)                      # (5, 128, 128) bf16
    vec = jnp.stack(vecs)                    # (5, 8, 128)   f32
    wf1 = _pad2(params["wf1"], (LANE, LANE), jnp.bfloat16)
    wf2 = _pad2(params["wf2"], (LANE, LANE), jnp.bfloat16)
    hvec = jnp.zeros((SUBLANE, LANE), jnp.float32)
    hvec = hvec.at[0, :hidden_dim].set(params["bf1"])
    hvec = hvec.at[1, 0].set(params["bf2"][0])
    return w1, w2, vec, wf1, wf2, hvec


# ----------------------------------------------------------------------------
# Full forward (glue in plain JAX, all hot compute in the single Pallas call)
# ----------------------------------------------------------------------------
@functools.partial(jax.jit, static_argnames=("num_graphs",))
def gin_forward(params, x, edge_index, batch, num_graphs):
    n, f = x.shape
    hidden_dim = params["wf1"].shape[0]
    eps = 0.0  # GINConv default (train_eps=False)

    n_pad = max(_round_up(n, LANE), LANE)
    g_pad = max(_round_up(num_graphs, SUBLANE), SUBLANE)

    src, dst = edge_index[0], edge_index[1]
    # Dense adjacency with the (1+eps) self-loop folded into the same scatter:
    # A_hat[dst, src] += 1, A_hat[i, i] += (1+eps). bf16 is exact for the small
    # integer entries here; the aggregation accumulates in f32 on the MXU.
    node_idx = jnp.arange(n, dtype=src.dtype)
    a_hat = (jnp.zeros((n_pad, n_pad), jnp.float32)
             .at[dst, src].add(1.0)
             .at[node_idx, node_idx].add(1.0 + eps)).astype(jnp.bfloat16)

    # Node features, zero-padded to the lane width, bf16 (MXU operand).
    x_pad = jnp.zeros((n_pad, LANE), jnp.bfloat16).at[:n, :f].set(x.astype(jnp.bfloat16))

    # Pooling matrix: P[g, i] = 1 if batch[i] == g (padded graphs/nodes are zero
    # rows/cols); exact in bf16 (0/1 entries).
    pool = (batch[None, :] == jnp.arange(g_pad, dtype=batch.dtype)[:, None]).astype(jnp.bfloat16)
    pool_mat = jnp.zeros((g_pad, n_pad), jnp.bfloat16).at[:, :n].set(pool)

    w1, w2, vec, wf1, wf2, hvec = prepare_params(params, hidden_dim)
    out = gin_fused(a_hat, x_pad, pool_mat, w1, w2, vec, wf1, wf2, hvec)
    return out[:num_graphs, 0]  # .view(-1): one scalar per graph


if __name__ == "__main__":
    num_features = 16
    hidden_dim = 32
    num_nodes = 32
    num_graphs = 2

    key = jax.random.PRNGKey(0)
    k_x, k_e, k_p = jax.random.split(key, 3)

    # Node features
    x = jax.random.normal(k_x, (num_nodes, num_features), jnp.float32)
    # Deterministic small graph: a ring over all nodes + some random edges
    ring_src = jnp.arange(num_nodes, dtype=jnp.int32)
    ring_dst = (ring_src + 1) % num_nodes
    rand_src = jax.random.randint(k_e, (num_nodes,), 0, num_nodes, dtype=jnp.int32)
    rand_dst = jax.random.randint(jax.random.fold_in(k_e, 1), (num_nodes,), 0,
                                  num_nodes, dtype=jnp.int32)
    edge_index = jnp.stack([jnp.concatenate([ring_src, rand_src]),
                            jnp.concatenate([ring_dst, rand_dst])], axis=0)
    # Batch vector: first half of nodes -> graph 0, second half -> graph 1
    batch = jnp.concatenate([jnp.zeros(num_nodes // 2, jnp.int32),
                             jnp.ones(num_nodes - num_nodes // 2, jnp.int32)])

    params = init_params(k_p, num_features, hidden_dim)

    out = gin_forward(params, x, edge_index, batch, num_graphs)
    out = jax.block_until_ready(out)
    assert out.shape == (num_graphs,)
    assert bool(jnp.all(jnp.isfinite(out)))
    print("KERNEL_OK")
</pallas_src>

<mosaic_0001>
module attributes {stable_mosaic.version = 11 : i64} {
  func.func private @main(%arg0: i32) attributes {dimension_semantics = [#tpu.dimension_semantics<core_parallel>], iteration_bounds = array<i64: 2>, tpu.core_type = #tpu.core_type<sc_scalar_subcore>, window_params = []} {
    return
  }
}

module attributes {stable_mosaic.version = 11 : i64} {
  func.func private @main(%arg0: i32) attributes {dimension_semantics = [#tpu.dimension_semantics<core_parallel>], iteration_bounds = array<i64: 2>, tpu.core_type = #tpu.core_type<sc_scalar_subcore>, window_params = []} {
    return
  }
}

module attributes {stable_mosaic.version = 11 : i64} {
  func.func @gin_fused_kernel(%arg0: memref<128x128xbf16, #tpu.memory_space<vmem>>, %arg1: memref<128x128xbf16, #tpu.memory_space<vmem>>, %arg2: memref<8x128xbf16, #tpu.memory_space<vmem>>, %arg3: memref<5x128x128xbf16, #tpu.memory_space<vmem>>, %arg4: memref<5x128x128xbf16, #tpu.memory_space<vmem>>, %arg5: memref<5x8x128xf32, #tpu.memory_space<vmem>>, %arg6: memref<128x128xbf16, #tpu.memory_space<vmem>>, %arg7: memref<128x128xbf16, #tpu.memory_space<vmem>>, %arg8: memref<8x128xf32, #tpu.memory_space<vmem>>, %arg9: memref<8x128xf32, #tpu.memory_space<vmem>>, %arg10: memref<128x128xbf16, #tpu.memory_space<vmem>>) attributes {dimension_semantics = [], scalar_prefetch = 0 : i64, scratch_operands = 1 : i64, tpu.core_type = #tpu.core_type<tc>} {
    %c0 = arith.constant 0 : index
    %c0_0 = arith.constant 0 : index
    %0 = vector.load %arg1[%c0, %c0_0] : memref<128x128xbf16, #tpu.memory_space<vmem>>, vector<128x128xbf16>
    %c0_1 = arith.constant 0 : index
    %c0_2 = arith.constant 0 : index
    %1 = vector.load %arg0[%c0_1, %c0_2] : memref<128x128xbf16, #tpu.memory_space<vmem>>, vector<128x128xbf16>
    %cst = arith.constant dense<0.000000e+00> : vector<128x128xf32>
    %2 = tpu.matmul %1, %0, %cst {dimension_numbers = #tpu.dot_dimension_numbers<[1], [0], [0], [1], [0, 0, 1, 1], [], []>} : vector<128x128xbf16>, vector<128x128xbf16>, vector<128x128xf32> -> vector<128x128xf32>
    %c0_3 = arith.constant 0 : index
    %c0_4 = arith.constant 0 : index
    %c0_5 = arith.constant 0 : index
    %3 = vector.load %arg5[%c0_3, %c0_4, %c0_5] : memref<5x8x128xf32, #tpu.memory_space<vmem>>, vector<1x8x128xf32>
    %4 = vector.shape_cast %3 : vector<1x8x128xf32> to vector<8x128xf32>
    %5 = vector.extract_strided_slice %4 {offsets = [0, 0], sizes = [1, 128], strides = [1, 1]} : vector<8x128xf32> to vector<1x128xf32>
    %6 = vector.extract_strided_slice %4 {offsets = [1, 0], sizes = [1, 128], strides = [1, 1]} : vector<8x128xf32> to vector<1x128xf32>
    %7 = vector.extract_strided_slice %4 {offsets = [2, 0], sizes = [1, 128], strides = [1, 1]} : vector<8x128xf32> to vector<1x128xf32>
    %8 = arith.truncf %2 : vector<128x128xf32> to vector<128x128xbf16>
    %c0_6 = arith.constant 0 : index
    %c0_7 = arith.constant 0 : index
    %c0_8 = arith.constant 0 : index
    %9 = vector.load %arg3[%c0_6, %c0_7, %c0_8] : memref<5x128x128xbf16, #tpu.memory_space<vmem>>, vector<1x128x128xbf16>
    %10 = vector.shape_cast %9 : vector<1x128x128xbf16> to vector<128x128xbf16>
    %cst_9 = arith.constant dense<0.000000e+00> : vector<128x128xf32>
    %11 = tpu.matmul %8, %10, %cst_9 {dimension_numbers = #tpu.dot_dimension_numbers<[1], [0], [0], [1], [0, 0, 1, 1], [], []>} : vector<128x128xbf16>, vector<128x128xbf16>, vector<128x128xf32> -> vector<128x128xf32>
    %12 = vector.broadcast %5 : vector<1x128xf32> to vector<128x128xf32>
    %13 = arith.addf %11, %12 : vector<128x128xf32>
    %cst_10 = arith.constant 0.000000e+00 : f32
    %14 = vector.broadcast %cst_10 : f32 to vector<128x128xf32>
    %15 = arith.maximumf %13, %14 : vector<128x128xf32>
    %16 = arith.truncf %15 : vector<128x128xf32> to vector<128x128xbf16>
    %c0_11 = arith.constant 0 : index
    %c0_12 = arith.constant 0 : index
    %c0_13 = arith.constant 0 : index
    %17 = vector.load %arg4[%c0_11, %c0_12, %c0_13] : memref<5x128x128xbf16, #tpu.memory_space<vmem>>, vector<1x128x128xbf16>
    %18 = vector.shape_cast %17 : vector<1x128x128xbf16> to vector<128x128xbf16>
    %cst_14 = arith.constant dense<0.000000e+00> : vector<128x128xf32>
    %19 = tpu.matmul %16, %18, %cst_14 {dimension_numbers = #tpu.dot_dimension_numbers<[1], [0], [0], [1], [0, 0, 1, 1], [], []>} : vector<128x128xbf16>, vector<128x128xbf16>, vector<128x128xf32> -> vector<128x128xf32>
    %20 = vector.broadcast %6 : vector<1x128xf32> to vector<128x128xf32>
    %21 = arith.addf %19, %20 : vector<128x128xf32>
    %cst_15 = arith.constant 0.000000e+00 : f32
    %22 = vector.broadcast %cst_15 : f32 to vector<128x128xf32>
    %23 = arith.maximumf %21, %22 : vector<128x128xf32>
    %24 = vector.broadcast %7 : vector<1x128xf32> to vector<128x128xf32>
    %25 = arith.addf %23, %24 : vector<128x128xf32>
    %26 = arith.truncf %25 : vector<128x128xf32> to vector<128x128xbf16>
    %c0_16 = arith.constant 0 : index
    %c0_17 = arith.constant 0 : index
    %27 = vector.load %arg10[%c0_16, %c0_17] : memref<128x128xbf16, #tpu.memory_space<vmem>>, vector<128x128xbf16>
    tpu.vector_store %arg10[%c0_16, %c0_17], %26 {strides = array<i32>} : memref<128x128xbf16, #tpu.memory_space<vmem>>, vector<128x128xbf16>,
    %c0_18 = arith.constant 0 : index
    %c0_19 = arith.constant 0 : index
    %28 = vector.load %arg10[%c0_18, %c0_19] : memref<128x128xbf16, #tpu.memory_space<vmem>>, vector<128x128xbf16>
    %c0_20 = arith.constant 0 : index
    %c0_21 = arith.constant 0 : index
    %29 = vector.load %arg0[%c0_20, %c0_21] : memref<128x128xbf16, #tpu.memory_space<vmem>>, vector<128x128xbf16>
    %cst_22 = arith.constant dense<0.000000e+00> : vector<128x128xf32>
    %30 = tpu.matmul %29, %28, %cst_22 {dimension_numbers = #tpu.dot_dimension_numbers<[1], [0], [0], [1], [0, 0, 1, 1], [], []>} : vector<128x128xbf16>, vector<128x128xbf16>, vector<128x128xf32> -> vector<128x128xf32>
    %c1 = arith.constant 1 : index
    %c0_23 = arith.constant 0 : index
    %c0_24 = arith.constant 0 : index
    %31 = vector.load %arg5[%c1, %c0_23, %c0_24] : memref<5x8x128xf32, #tpu.memory_space<vmem>>, vector<1x8x128xf32>
    %32 = vector.shape_cast %31 : vector<1x8x128xf32> to vector<8x128xf32>
    %33 = vector.extract_strided_slice %32 {offsets = [0, 0], sizes = [1, 128], strides = [1, 1]} : vector<8x128xf32> to vector<1x128xf32>
    %34 = vector.extract_strided_slice %32 {offsets = [1, 0], sizes = [1, 128], strides = [1, 1]} : vector<8x128xf32> to vector<1x128xf32>
    %35 = vector.extract_strided_slice %32 {offsets = [2, 0], sizes = [1, 128], strides = [1, 1]} : vector<8x128xf32> to vector<1x128xf32>
    %36 = arith.truncf %30 : vector<128x128xf32> to vector<128x128xbf16>
    %c1_25 = arith.constant 1 : index
    %c0_26 = arith.constant 0 : index
    %c0_27 = arith.constant 0 : index
    %37 = vector.load %arg3[%c1_25, %c0_26, %c0_27] : memref<5x128x128xbf16, #tpu.memory_space<vmem>>, vector<1x128x128xbf16>
    %38 = vector.shape_cast %37 : vector<1x128x128xbf16> to vector<128x128xbf16>
    %cst_28 = arith.constant dense<0.000000e+00> : vector<128x128xf32>
    %39 = tpu.matmul %36, %38, %cst_28 {dimension_numbers = #tpu.dot_dimension_numbers<[1], [0], [0], [1], [0, 0, 1, 1], [], []>} : vector<128x128xbf16>, vector<128x128xbf16>, vector<128x128xf32> -> vector<128x128xf32>
    %40 = vector.broadcast %33 : vector<1x128xf32> to vector<128x128xf32>
    %41 = arith.addf %39, %40 : vector<128x128xf32>
    %cst_29 = arith.constant 0.000000e+00 : f32
    %42 = vector.broadcast %cst_29 : f32 to vector<128x128xf32>
    %43 = arith.maximumf %41, %42 : vector<128x128xf32>
    %44 = arith.truncf %43 : vector<128x128xf32> to vector<128x128xbf16>
    %c1_30 = arith.constant 1 : index
    %c0_31 = arith.constant 0 : index
    %c0_32 = arith.constant 0 : index
    %45 = vector.load %arg4[%c1_30, %c0_31, %c0_32] : memref<5x128x128xbf16, #tpu.memory_space<vmem>>, vector<1x128x128xbf16>
    %46 = vector.shape_cast %45 : vector<1x128x128xbf16> to vector<128x128xbf16>
    %cst_33 = arith.constant dense<0.000000e+00> : vector<128x128xf32>
    %47 = tpu.matmul %44, %46, %cst_33 {dimension_numbers = #tpu.dot_dimension_numbers<[1], [0], [0], [1], [0, 0, 1, 1], [], []>} : vector<128x128xbf16>, vector<128x128xbf16>, vector<128x128xf32> -> vector<128x128xf32>
    %48 = vector.broadcast %34 : vector<1x128xf32> to vector<128x128xf32>
    %49 = arith.addf %47, %48 : vector<128x128xf32>
    %cst_34 = arith.constant 0.000000e+00 : f32
    %50 = vector.broadcast %cst_34 : f32 to vector<128x128xf32>
    %51 = arith.maximumf %49, %50 : vector<128x128xf32>
    %52 = vector.broadcast %35 : vector<1x128xf32> to vector<128x128xf32>
    %53 = arith.addf %51, %52 : vector<128x128xf32>
    %54 = arith.truncf %53 : vector<128x128xf32> to vector<128x128xbf16>
    %c0_35 = arith.constant 0 : index
    %c0_36 = arith.constant 0 : index
    %55 = vector.load %arg10[%c0_35, %c0_36] : memref<128x128xbf16, #tpu.memory_space<vmem>>, vector<128x128xbf16>
    tpu.vector_store %arg10[%c0_35, %c0_36], %54 {strides = array<i32>} : memref<128x128xbf16, #tpu.memory_space<vmem>>, vector<128x128xbf16>,
    %c0_37 = arith.constant 0 : index
    %c0_38 = arith.constant 0 : index
    %56 = vector.load %arg10[%c0_37, %c0_38] : memref<128x128xbf16, #tpu.memory_space<vmem>>, vector<128x128xbf16>
    %c0_39 = arith.constant 0 : index
    %c0_40 = arith.constant 0 : index
    %57 = vector.load %arg0[%c0_39, %c0_40] : memref<128x128xbf16, #tpu.memory_space<vmem>>, vector<128x128xbf16>
    %cst_41 = arith.constant dense<0.000000e+00> : vector<128x128xf32>
    %58 = tpu.matmul %57, %56, %cst_41 {dimension_numbers = #tpu.dot_dimension_numbers<[1], [0], [0], [1], [0, 0, 1, 1], [], []>} : vector<128x128xbf16>, vector<128x128xbf16>, vector<128x128xf32> -> vector<128x128xf32>
    %c2 = arith.constant 2 : index
    %c0_42 = arith.constant 0 : index
    %c0_43 = arith.constant 0 : index
    %59 = vector.load %arg5[%c2, %c0_42, %c0_43] : memref<5x8x128xf32, #tpu.memory_space<vmem>>, vector<1x8x128xf32>
    %60 = vector.shape_cast %59 : vector<1x8x128xf32> to vector<8x128xf32>
    %61 = vector.extract_strided_slice %60 {offsets = [0, 0], sizes = [1, 128], strides = [1, 1]} : vector<8x128xf32> to vector<1x128xf32>
    %62 = vector.extract_strided_slice %60 {offsets = [1, 0], sizes = [1, 128], strides = [1, 1]} : vector<8x128xf32> to vector<1x128xf32>
    %63 = vector.extract_strided_slice %60 {offsets = [2, 0], sizes = [1, 128], strides = [1, 1]} : vector<8x128xf32> to vector<1x128xf32>
    %64 = arith.truncf %58 : vector<128x128xf32> to vector<128x128xbf16>
    %c2_44 = arith.constant 2 : index
    %c0_45 = arith.constant 0 : index
    %c0_46 = arith.constant 0 : index
    %65 = vector.load %arg3[%c2_44, %c0_45, %c0_46] : memref<5x128x128xbf16, #tpu.memory_space<vmem>>, vector<1x128x128xbf16>
    %66 = vector.shape_cast %65 : vector<1x128x128xbf16> to vector<128x128xbf16>
    %cst_47 = arith.constant dense<0.000000e+00> : vector<128x128xf32>
    %67 = tpu.matmul %64, %66, %cst_47 {dimension_numbers = #tpu.dot_dimension_numbers<[1], [0], [0], [1], [0, 0, 1, 1], [], []>} : vector<128x128xbf16>, vector<128x128xbf16>, vector<128x128xf32> -> vector<128x128xf32>
    %68 = vector.broadcast %61 : vector<1x128xf32> to vector<128x128xf32>
    %69 = arith.addf %67, %68 : vector<128x128xf32>
    %cst_48 = arith.constant 0.000000e+00 : f32
    %70 = vector.broadcast %cst_48 : f32 to vector<128x128xf32>
    %71 = arith.maximumf %69, %70 : vector<128x128xf32>
    %72 = arith.truncf %71 : vector<128x128xf32> to vector<128x128xbf16>
    %c2_49 = arith.constant 2 : index
    %c0_50 = arith.constant 0 : index
    %c0_51 = arith.constant 0 : index
    %73 = vector.load %arg4[%c2_49, %c0_50, %c0_51] : memref<5x128x128xbf16, #tpu.memory_space<vmem>>, vector<1x128x128xbf16>
    %74 = vector.shape_cast %73 : vector<1x128x128xbf16> to vector<128x128xbf16>
    %cst_52 = arith.constant dense<0.000000e+00> : vector<128x128xf32>
    %75 = tpu.matmul %72, %74, %cst_52 {dimension_numbers = #tpu.dot_dimension_numbers<[1], [0], [0], [1], [0, 0, 1, 1], [], []>} : vector<128x128xbf16>, vector<128x128xbf16>, vector<128x128xf32> -> vector<128x128xf32>
    %76 = vector.broadcast %62 : vector<1x128xf32> to vector<128x128xf32>
    %77 = arith.addf %75, %76 : vector<128x128xf32>
    %cst_53 = arith.constant 0.000000e+00 : f32
    %78 = vector.broadcast %cst_53 : f32 to vector<128x128xf32>
    %79 = arith.maximumf %77, %78 : vector<128x128xf32>
    %80 = vector.broadcast %63 : vector<1x128xf32> to vector<128x128xf32>
    %81 = arith.addf %79, %80 : vector<128x128xf32>
    %82 = arith.truncf %81 : vector<128x128xf32> to vector<128x128xbf16>
    %c0_54 = arith.constant 0 : index
    %c0_55 = arith.constant 0 : index
    %83 = vector.load %arg10[%c0_54, %c0_55] : memref<128x128xbf16, #tpu.memory_space<vmem>>, vector<128x128xbf16>
    tpu.vector_store %arg10[%c0_54, %c0_55], %82 {strides = array<i32>} : memref<128x128xbf16, #tpu.memory_space<vmem>>, vector<128x128xbf16>,
    %c0_56 = arith.constant 0 : index
    %c0_57 = arith.constant 0 : index
    %84 = vector.load %arg10[%c0_56, %c0_57] : memref<128x128xbf16, #tpu.memory_space<vmem>>, vector<128x128xbf16>
    %c0_58 = arith.constant 0 : index
    %c0_59 = arith.constant 0 : index
    %85 = vector.load %arg0[%c0_58, %c0_59] : memref<128x128xbf16, #tpu.memory_space<vmem>>, vector<128x128xbf16>
    %cst_60 = arith.constant dense<0.000000e+00> : vector<128x128xf32>
    %86 = tpu.matmul %85, %84, %cst_60 {dimension_numbers = #tpu.dot_dimension_numbers<[1], [0], [0], [1], [0, 0, 1, 1], [], []>} : vector<128x128xbf16>, vector<128x128xbf16>, vector<128x128xf32> -> vector<128x128xf32>
    %c3 = arith.constant 3 : index
    %c0_61 = arith.constant 0 : index
    %c0_62 = arith.constant 0 : index
    %87 = vector.load %arg5[%c3, %c0_61, %c0_62] : memref<5x8x128xf32, #tpu.memory_space<vmem>>, vector<1x8x128xf32>
    %88 = vector.shape_cast %87 : vector<1x8x128xf32> to vector<8x128xf32>
    %89 = vector.extract_strided_slice %88 {offsets = [0, 0], sizes = [1, 128], strides = [1, 1]} : vector<8x128xf32> to vector<1x128xf32>
    %90 = vector.extract_strided_slice %88 {offsets = [1, 0], sizes = [1, 128], strides = [1, 1]} : vector<8x128xf32> to vector<1x128xf32>
    %91 = vector.extract_strided_slice %88 {offsets = [2, 0], sizes = [1, 128], strides = [1, 1]} : vector<8x128xf32> to vector<1x128xf32>
    %92 = arith.truncf %86 : vector<128x128xf32> to vector<128x128xbf16>
    %c3_63 = arith.constant 3 : index
    %c0_64 = arith.constant 0 : index
    %c0_65 = arith.constant 0 : index
    %93 = vector.load %arg3[%c3_63, %c0_64, %c0_65] : memref<5x128x128xbf16, #tpu.memory_space<vmem>>, vector<1x128x128xbf16>
    %94 = vector.shape_cast %93 : vector<1x128x128xbf16> to vector<128x128xbf16>
    %cst_66 = arith.constant dense<0.000000e+00> : vector<128x128xf32>
    %95 = tpu.matmul %92, %94, %cst_66 {dimension_numbers = #tpu.dot_dimension_numbers<[1], [0], [0], [1], [0, 0, 1, 1], [], []>} : vector<128x128xbf16>, vector<128x128xbf16>, vector<128x128xf32> -> vector<128x128xf32>
    %96 = vector.broadcast %89 : vector<1x128xf32> to vector<128x128xf32>
    %97 = arith.addf %95, %96 : vector<128x128xf32>
    %cst_67 = arith.constant 0.000000e+00 : f32
    %98 = vector.broadcast %cst_67 : f32 to vector<128x128xf32>
    %99 = arith.maximumf %97, %98 : vector<128x128xf32>
    %100 = arith.truncf %99 : vector<128x128xf32> to vector<128x128xbf16>
    %c3_68 = arith.constant 3 : index
    %c0_69 = arith.constant 0 : index
    %c0_70 = arith.constant 0 : index
    %101 = vector.load %arg4[%c3_68, %c0_69, %c0_70] : memref<5x128x128xbf16, #tpu.memory_space<vmem>>, vector<1x128x128xbf16>
    %102 = vector.shape_cast %101 : vector<1x128x128xbf16> to vector<128x128xbf16>
    %cst_71 = arith.constant dense<0.000000e+00> : vector<128x128xf32>
    %103 = tpu.matmul %100, %102, %cst_71 {dimension_numbers = #tpu.dot_dimension_numbers<[1], [0], [0], [1], [0, 0, 1, 1], [], []>} : vector<128x128xbf16>, vector<128x128xbf16>, vector<128x128xf32> -> vector<128x128xf32>
    %104 = vector.broadcast %90 : vector<1x128xf32> to vector<128x128xf32>
    %105 = arith.addf %103, %104 : vector<128x128xf32>
    %cst_72 = arith.constant 0.000000e+00 : f32
    %106 = vector.broadcast %cst_72 : f32 to vector<128x128xf32>
    %107 = arith.maximumf %105, %106 : vector<128x128xf32>
    %108 = vector.broadcast %91 : vector<1x128xf32> to vector<128x128xf32>
    %109 = arith.addf %107, %108 : vector<128x128xf32>
    %110 = arith.truncf %109 : vector<128x128xf32> to vector<128x128xbf16>
    %c0_73 = arith.constant 0 : index
    %c0_74 = arith.constant 0 : index
    %111 = vector.load %arg10[%c0_73, %c0_74] : memref<128x128xbf16, #tpu.memory_space<vmem>>, vector<128x128xbf16>
    tpu.vector_store %arg10[%c0_73, %c0_74], %110 {strides = array<i32>} : memref<128x128xbf16, #tpu.memory_space<vmem>>, vector<128x128xbf16>,
    %c0_75 = arith.constant 0 : index
    %c0_76 = arith.constant 0 : index
    %112 = vector.load %arg10[%c0_75, %c0_76] : memref<128x128xbf16, #tpu.memory_space<vmem>>, vector<128x128xbf16>
    %c0_77 = arith.constant 0 : index
    %c0_78 = arith.constant 0 : index
    %113 = vector.load %arg0[%c0_77, %c0_78] : memref<128x128xbf16, #tpu.memory_space<vmem>>, vector<128x128xbf16>
    %cst_79 = arith.constant dense<0.000000e+00> : vector<128x128xf32>
    %114 = tpu.matmul %113, %112, %cst_79 {dimension_numbers = #tpu.dot_dimension_numbers<[1], [0], [0], [1], [0, 0, 1, 1], [], []>} : vector<128x128xbf16>, vector<128x128xbf16>, vector<128x128xf32> -> vector<128x128xf32>
    %c4 = arith.constant 4 : index
    %c0_80 = arith.constant 0 : index
    %c0_81 = arith.constant 0 : index
    %115 = vector.load %arg5[%c4, %c0_80, %c0_81] : memref<5x8x128xf32, #tpu.memory_space<vmem>>, vector<1x8x128xf32>
    %116 = vector.shape_cast %115 : vector<1x8x128xf32> to vector<8x128xf32>
    %117 = vector.extract_strided_slice %116 {offsets = [0, 0], sizes = [1, 128], strides = [1, 1]} : vector<8x128xf32> to vector<1x128xf32>
    %118 = vector.extract_strided_slice %116 {offsets = [1, 0], sizes = [1, 128], strides = [1, 1]} : vector<8x128xf32> to vector<1x128xf32>
    %119 = vector.extract_strided_slice %116 {offsets = [2, 0], sizes = [1, 128], strides = [1, 1]} : vector<8x128xf32> to vector<1x128xf32>
    %120 = arith.truncf %114 : vector<128x128xf32> to vector<128x128xbf16>
    %c4_82 = arith.constant 4 : index
    %c0_83 = arith.constant 0 : index
    %c0_84 = arith.constant 0 : index
    %121 = vector.load %arg3[%c4_82, %c0_83, %c0_84] : memref<5x128x128xbf16, #tpu.memory_space<vmem>>, vector<1x128x128xbf16>
    %122 = vector.shape_cast %121 : vector<1x128x128xbf16> to vector<128x128xbf16>
    %cst_85 = arith.constant dense<0.000000e+00> : vector<128x128xf32>
    %123 = tpu.matmul %120, %122, %cst_85 {dimension_numbers = #tpu.dot_dimension_numbers<[1], [0], [0], [1], [0, 0, 1, 1], [], []>} : vector<128x128xbf16>, vector<128x128xbf16>, vector<128x128xf32> -> vector<128x128xf32>
    %124 = vector.broadcast %117 : vector<1x128xf32> to vector<128x128xf32>
    %125 = arith.addf %123, %124 : vector<128x128xf32>
    %cst_86 = arith.constant 0.000000e+00 : f32
    %126 = vector.broadcast %cst_86 : f32 to vector<128x128xf32>
    %127 = arith.maximumf %125, %126 : vector<128x128xf32>
    %128 = arith.truncf %127 : vector<128x128xf32> to vector<128x128xbf16>
    %c4_87 = arith.constant 4 : index
    %c0_88 = arith.constant 0 : index
    %c0_89 = arith.constant 0 : index
    %129 = vector.load %arg4[%c4_87, %c0_88, %c0_89] : memref<5x128x128xbf16, #tpu.memory_space<vmem>>, vector<1x128x128xbf16>
    %130 = vector.shape_cast %129 : vector<1x128x128xbf16> to vector<128x128xbf16>
    %cst_90 = arith.constant dense<0.000000e+00> : vector<128x128xf32>
    %131 = tpu.matmul %128, %130, %cst_90 {dimension_numbers = #tpu.dot_dimension_numbers<[1], [0], [0], [1], [0, 0, 1, 1], [], []>} : vector<128x128xbf16>, vector<128x128xbf16>, vector<128x128xf32> -> vector<128x128xf32>
    %132 = vector.broadcast %118 : vector<1x128xf32> to vector<128x128xf32>
    %133 = arith.addf %131, %132 : vector<128x128xf32>
    %cst_91 = arith.constant 0.000000e+00 : f32
    %134 = vector.broadcast %cst_91 : f32 to vector<128x128xf32>
    %135 = arith.maximumf %133, %134 : vector<128x128xf32>
    %136 = vector.broadcast %119 : vector<1x128xf32> to vector<128x128xf32>
    %137 = arith.addf %135, %136 : vector<128x128xf32>
    %138 = arith.truncf %137 : vector<128x128xf32> to vector<128x128xbf16>
    %c0_92 = arith.constant 0 : index
    %c0_93 = arith.constant 0 : index
    %139 = vector.load %arg10[%c0_92, %c0_93] : memref<128x128xbf16, #tpu.memory_space<vmem>>, vector<128x128xbf16>
    tpu.vector_store %arg10[%c0_92, %c0_93], %138 {strides = array<i32>} : memref<128x128xbf16, #tpu.memory_space<vmem>>, vector<128x128xbf16>,
    %c0_94 = arith.constant 0 : index
    %c0_95 = arith.constant 0 : index
    %140 = vector.load %arg2[%c0_94, %c0_95] : memref<8x128xbf16, #tpu.memory_space<vmem>>, vector<8x128xbf16>
    %c0_96 = arith.constant 0 : index
    %c0_97 = arith.constant 0 : index
    %141 = vector.load %arg10[%c0_96, %c0_97] : memref<128x128xbf16, #tpu.memory_space<vmem>>, vector<128x128xbf16>
    %cst_98 = arith.constant dense<0.000000e+00> : vector<8x128xf32>
    %142 = tpu.matmul %140, %141, %cst_98 {dimension_numbers = #tpu.dot_dimension_numbers<[1], [0], [0], [1], [0, 0, 1, 1], [], []>} : vector<8x128xbf16>, vector<128x128xbf16>, vector<8x128xf32> -> vector<8x128xf32>
    %c0_99 = arith.constant 0 : index
    %c0_100 = arith.constant 0 : index
    %143 = vector.load %arg8[%c0_99, %c0_100] : memref<8x128xf32, #tpu.memory_space<vmem>>, vector<8x128xf32>
    %144 = arith.truncf %142 : vector<8x128xf32> to vector<8x128xbf16>
    %c0_101 = arith.constant 0 : index
    %c0_102 = arith.constant 0 : index
    %145 = vector.load %arg6[%c0_101, %c0_102] : memref<128x128xbf16, #tpu.memory_space<vmem>>, vector<128x128xbf16>
    %cst_103 = arith.constant dense<0.000000e+00> : vector<8x128xf32>
    %146 = tpu.matmul %144, %145, %cst_103 {dimension_numbers = #tpu.dot_dimension_numbers<[1], [0], [0], [1], [0, 0, 1, 1], [], []>} : vector<8x128xbf16>, vector<128x128xbf16>, vector<8x128xf32> -> vector<8x128xf32>
    %147 = vector.extract_strided_slice %143 {offsets = [0, 0], sizes = [1, 128], strides = [1, 1]} : vector<8x128xf32> to vector<1x128xf32>
    %148 = vector.broadcast %147 : vector<1x128xf32> to vector<8x128xf32>
    %149 = arith.addf %146, %148 : vector<8x128xf32>
    %cst_104 = arith.constant 0.000000e+00 : f32
    %150 = vector.broadcast %cst_104 : f32 to vector<8x128xf32>
    %151 = arith.maximumf %149, %150 : vector<8x128xf32>
    %152 = arith.truncf %151 : vector<8x128xf32> to vector<8x128xbf16>
    %c0_105 = arith.constant 0 : index
    %c0_106 = arith.constant 0 : index
    %153 = vector.load %arg7[%c0_105, %c0_106] : memref<128x128xbf16, #tpu.memory_space<vmem>>, vector<128x128xbf16>
    %cst_107 = arith.constant dense<0.000000e+00> : vector<8x128xf32>
    %154 = tpu.matmul %152, %153, %cst_107 {dimension_numbers = #tpu.dot_dimension_numbers<[1], [0], [0], [1], [0, 0, 1, 1], [], []>} : vector<8x128xbf16>, vector<128x128xbf16>, vector<8x128xf32> -> vector<8x128xf32>
    %155 = vector.extract_strided_slice %143 {offsets = [1, 0], sizes = [1, 128], strides = [1, 1]} : vector<8x128xf32> to vector<1x128xf32>
    %156 = vector.broadcast %155 : vector<1x128xf32> to vector<8x128xf32>
    %157 = arith.addf %154, %156 : vector<8x128xf32>
    %c0_108 = arith.constant 0 : index
    %c0_109 = arith.constant 0 : index
    %158 = vector.load %arg9[%c0_108, %c0_109] : memref<8x128xf32, #tpu.memory_space<vmem>>, vector<8x128xf32>
    tpu.vector_store %arg9[%c0_108, %c0_109], %157 {strides = array<i32>} : memref<8x128xf32, #tpu.memory_space<vmem>>, vector<8x128xf32>,
    return
  }
}

</mosaic_0001>

<llo_original>
// kernel: gin_forward.1
$region0: #{gin_forward.1}
  #allocation0 [shape = 'u32[]', space=smem, size = 0x4, offset = 0x4, fixed_abs, tag = 'smem constant byte address 0x4 - core index']
  #allocation1 [shape = 'u32[144,128]{1,0:T(1,128)}', space=vmem, size = 0x12000, scoped, tag = 'internal scratch']
  #allocation2 [shape = 'bf16[128,128]{1,0:T(8,128)(2,1)}', space=vmem, size = 0x8000, scoped, tag = 'scratch operand']
  %s0 = inlined_call_operand.vmem [shape: bf16[128,128], index: 0, kind: input, shape index: {}]
  %s1 = inlined_call_operand.vmem [shape: bf16[128,128], index: 1, kind: input, shape index: {}]
  %s2 = inlined_call_operand.vmem [shape: bf16[8,128], index: 2, kind: input, shape index: {}]
  %s3 = inlined_call_operand.vmem [shape: bf16[5,128,128], index: 3, kind: input, shape index: {}]
  %s4 = inlined_call_operand.vmem [shape: bf16[5,128,128], index: 4, kind: input, shape index: {}]
  %s5 = inlined_call_operand.vmem [shape: f32[5,8,128], index: 5, kind: input, shape index: {}]
  %s6 = inlined_call_operand.vmem [shape: bf16[128,128], index: 6, kind: input, shape index: {}]
  %s7 = inlined_call_operand.vmem [shape: bf16[128,128], index: 7, kind: input, shape index: {}]
  %s8 = inlined_call_operand.vmem [shape: f32[8,128], index: 8, kind: input, shape index: {}]
  %s9 = inlined_call_operand.vmem [shape: f32[8,128], index: 9, kind: output, shape index: {}]
  %s10 = sld [smem:[#allocation0]]
  $region46: #{gin_forward.1} parent=0
    _
  %s12 = ssub.s32 1, %s10
  %s13 = scalar_select 0, %s12, %s10
  // Predicated region
  $region2: #{gin_forward.1} parent=0 // pred_check
    _
  $region3: #{gin_forward.1} parent=0 // pred_check_branch
    %15 = sbr.rel (0) target = $region5
  $region4: #{gin_forward.1} parent=0 // pred_region
    _
  $region5: #{gin_forward.1} parent=0 // pred_fallthru
    _
  // Predicated region
  $region6: #{gin_forward.1} parent=0 // pred_check
    _
  $region7: #{gin_forward.1} parent=0 // pred_check_branch
    %17 = sbr.rel (0) target = $region9
  $region8: #{gin_forward.1} parent=0 // pred_region
    _
  $region9: #{gin_forward.1} parent=0 // pred_fallthru
    _
  // Predicated region
  $region10: #{gin_forward.1} parent=0 // pred_check
    _
  $region11: #{gin_forward.1} parent=0 // pred_check_branch
    %19 = sbr.rel (0) target = $region13
  $region12: #{gin_forward.1} parent=0 // pred_region
    _
  $region13: #{gin_forward.1} parent=0 // pred_fallthru
    _
  // Predicated region
  $region14: #{gin_forward.1} parent=0 // pred_check
    _
  $region15: #{gin_forward.1} parent=0 // pred_check_branch
    %21 = sbr.rel (0) target = $region17
  $region16: #{gin_forward.1} parent=0 // pred_region
    _
  $region17: #{gin_forward.1} parent=0 // pred_fallthru
    _
  // Predicated region
  $region18: #{gin_forward.1} parent=0 // pred_check
    _
  $region19: #{gin_forward.1} parent=0 // pred_check_branch
    %23 = sbr.rel (0) target = $region21
  $region20: #{gin_forward.1} parent=0 // pred_region
    _
  $region21: #{gin_forward.1} parent=0 // pred_fallthru
    _
  // Predicated region
  $region22: #{gin_forward.1} parent=0 // pred_check
    _
  $region23: #{gin_forward.1} parent=0 // pred_check_branch
    %25 = sbr.rel (0) target = $region25
  $region24: #{gin_forward.1} parent=0 // pred_region
    _
  $region25: #{gin_forward.1} parent=0 // pred_fallthru
    _
  // Predicated region
  $region26: #{gin_forward.1} parent=0 // pred_check
    _
  $region27: #{gin_forward.1} parent=0 // pred_check_branch
    %27 = sbr.rel (0) target = $region29
  $region28: #{gin_forward.1} parent=0 // pred_region
    _
  $region29: #{gin_forward.1} parent=0 // pred_fallthru
    _
  // Predicated region
  $region30: #{gin_forward.1} parent=0 // pred_check
    _
  $region31: #{gin_forward.1} parent=0 // pred_check_branch
    %29 = sbr.rel (0) target = $region33
  $region32: #{gin_forward.1} parent=0 // pred_region
    _
  $region33: #{gin_forward.1} parent=0 // pred_fallthru
    _
  // Predicated region
  $region34: #{gin_forward.1} parent=0 // pred_check
    _
  $region35: #{gin_forward.1} parent=0 // pred_check_branch
    %31 = sbr.rel (0) target = $region37
  $region36: #{gin_forward.1} parent=0 // pred_region
    _
  $region37: #{gin_forward.1} parent=0 // pred_fallthru
    _
  %v33 = vld [vmem:[%s1] sm:$0xf]
  %v34 = vld [vmem:[%s1 + $0x4] sm:$0xf]
  %v35 = vld [vmem:[%s1 + $0x8] sm:$0xf]
  %v36 = vld [vmem:[%s1 + $0xc] sm:$0xf]
  %v37 = vld [vmem:[%s1 + $0x10] sm:$0xf]
  %v38 = vld [vmem:[%s1 + $0x14] sm:$0xf]
  %v39 = vld [vmem:[%s1 + $0x18] sm:$0xf]
  %v40 = vld [vmem:[%s1 + $0x1c] sm:$0xf]
  %v41 = vld [vmem:[%s1 + $0x20] sm:$0xf]
  %v42 = vld [vmem:[%s1 + $0x24] sm:$0xf]
  %v43 = vld [vmem:[%s1 + $0x28] sm:$0xf]
  %v44 = vld [vmem:[%s1 + $0x2c] sm:$0xf]
  %v45 = vld [vmem:[%s1 + $0x30] sm:$0xf]
  %v46 = vld [vmem:[%s1 + $0x34] sm:$0xf]
  %v47 = vld [vmem:[%s1 + $0x38] sm:$0xf]
  %v48 = vld [vmem:[%s1 + $0x3c] sm:$0xf]
  %v49 = vld [vmem:[%s0] sm:$0xf]
  %v50 = vld [vmem:[%s0 + $0x4] sm:$0xf]
  %v51 = vld [vmem:[%s0 + $0x8] sm:$0xf]
  %v52 = vld [vmem:[%s0 + $0xc] sm:$0xf]
  %v53 = vld [vmem:[%s0 + $0x10] sm:$0xf]
  %v54 = vld [vmem:[%s0 + $0x14] sm:$0xf]
  %v55 = vld [vmem:[%s0 + $0x18] sm:$0xf]
  %v56 = vld [vmem:[%s0 + $0x1c] sm:$0xf]
  %v57 = vld [vmem:[%s0 + $0x20] sm:$0xf]
  %v58 = vld [vmem:[%s0 + $0x24] sm:$0xf]
  %v59 = vld [vmem:[%s0 + $0x28] sm:$0xf]
  %v60 = vld [vmem:[%s0 + $0x2c] sm:$0xf]
  %v61 = vld [vmem:[%s0 + $0x30] sm:$0xf]
  %v62 = vld [vmem:[%s0 + $0x34] sm:$0xf]
  %v63 = vld [vmem:[%s0 + $0x38] sm:$0xf]
  %v64 = vld [vmem:[%s0 + $0x3c] sm:$0xf]
  %v81 = vunpack.c.l.b16 %v49
  %v82 = vunpack.c.l.b16 %v50
  %v83 = vunpack.c.l.b16 %v51
  %v84 = vunpack.c.l.b16 %v52
  %v85 = vunpack.c.l.b16 %v53
  %v86 = vunpack.c.l.b16 %v54
  %v87 = vunpack.c.l.b16 %v55
  %v88 = vunpack.c.l.b16 %v56
  %v89 = vunpack.c.l.b16 %v57
  %v90 = vunpack.c.l.b16 %v58
  %v91 = vunpack.c.l.b16 %v59
  %v92 = vunpack.c.l.b16 %v60
  %v93 = vunpack.c.l.b16 %v61
  %v94 = vunpack.c.l.b16 %v62
  %v95 = vunpack.c.l.b16 %v63
  %v96 = vunpack.c.l.b16 %v64
  %v97 = vpack.c.b16 %v82, %v81
  %v98 = vpack.c.b16 %v84, %v83
  %v99 = vpack.c.b16 %v86, %v85
  %v100 = vpack.c.b16 %v88, %v87
  %v101 = vpack.c.b16 %v90, %v89
  %v102 = vpack.c.b16 %v92, %v91
  %v103 = vpack.c.b16 %v94, %v93
  %v104 = vpack.c.b16 %v96, %v95
  %v129 = vunpack.c.l.b16 %v33
  %v130 = vunpack.c.l.b16 %v34
  %v131 = vunpack.c.l.b16 %v35
  %v132 = vunpack.c.l.b16 %v36
  %v133 = vunpack.c.l.b16 %v37
  %v134 = vunpack.c.l.b16 %v38
  %v135 = vunpack.c.l.b16 %v39
  %v136 = vunpack.c.l.b16 %v40
  %v137 = vunpack.c.l.b16 %v41
  %v138 = vunpack.c.l.b16 %v42
  %v139 = vunpack.c.l.b16 %v43
  %v140 = vunpack.c.l.b16 %v44
  %v141 = vunpack.c.l.b16 %v45
  %v142 = vunpack.c.l.b16 %v46
  %v143 = vunpack.c.l.b16 %v47
  %v144 = vunpack.c.l.b16 %v48
  %v145 = vpack.c.b16 %v130, %v129
  %v146 = vpack.c.b16 %v132, %v131
  %v147 = vpack.c.b16 %v134, %v133
  %v148 = vpack.c.b16 %v136, %v135
  %v149 = vpack.c.b16 %v138, %v137
  %v150 = vpack.c.b16 %v140, %v139
  %v151 = vpack.c.b16 %v142, %v141
  %v152 = vpack.c.b16 %v144, %v143
  %161 = vmatprep.subr.bf16.mxu0 0
  %162 = vmatpush1.bf16.msra.mxu0 %v152
  %163 = vmatprep.subr.bf16.mxu0 0
  %164 = vmatpush1.bf16.msra.mxu0 %v151
  %165 = vmatprep.subr.bf16.mxu0 0
  %166 = vmatpush1.bf16.msra.mxu0 %v150
  %167 = vmatprep.subr.bf16.mxu0 0
  %168 = vmatpush1.bf16.msra.mxu0 %v149
  %169 = vmatprep.subr.bf16.mxu0 0
  %170 = vmatpush1.bf16.msra.mxu0 %v148
  %171 = vmatprep.subr.bf16.mxu0 0
  %172 = vmatpush1.bf16.msra.mxu0 %v147
  %173 = vmatprep.subr.bf16.mxu0 0
  %174 = vmatpush1.bf16.msra.mxu0 %v146
  %175 = vmatprep.subr.bf16.mxu0 0
  %176 = vmatpush1.bf16.msra.mxu0 %v145
  %177 = vmatprep.subr.bf16.mxu0 0
  %178 = vmatpush2.bf16.msra.mxu0 0
  %179 = vmatprep.subr.bf16.mxu0 0
  %180 = vmatpush2.bf16.msra.mxu0 0
  %181 = vmatprep.subr.bf16.mxu0 0
  %182 = vmatpush2.bf16.msra.mxu0 0
  %183 = vmatprep.subr.bf16.mxu0 0
  %184 = vmatpush2.bf16.msra.mxu0 0
  %185 = vmatprep.subr.bf16.mxu0 0
  %186 = vmatpush2.bf16.msra.mxu0 0
  %187 = vmatprep.subr.bf16.mxu0 0
  %188 = vmatpush2.bf16.msra.mxu0 0
  %189 = vmatprep.subr.bf16.mxu0 0
  %190 = vmatpush2.bf16.msra.mxu0 0
  %191 = vmatprep.subr.bf16.mxu0 0
  %192 = vmatpush2.bf16.msra.mxu0 0
  %193 = vmatprep.mubr.bf16.mxu0 0
  %194 = vmatmul.mubr.bf16.gmra.mxu0 %v97
  %v195 = vpop.f32.mrf.mxu0
  %v196 = vadd.f32 0.0, %v195
  %v197 = vpop.f32.mrf.mxu0
  %v198 = vpop.f32.mrf.mxu0
  %v199 = vadd.f32 0.0, %v198
  %v200 = vpop.f32.mrf.mxu0
  %201 = vmatprep.mubr.bf16.mxu0 0
  %202 = vmatmul.mubr.bf16.gmra.mxu0 %v98
  %v203 = vpop.f32.mrf.mxu0
  %v204 = vadd.f32 0.0, %v203
  %v205 = vpop.f32.mrf.mxu0
  %v206 = vpop.f32.mrf.mxu0
  %v207 = vadd.f32 0.0, %v206
  %v208 = vpop.f32.mrf.mxu0
  %209 = vmatprep.mubr.bf16.mxu0 0
  %210 = vmatmul.mubr.bf16.gmra.mxu0 %v99
  %v211 = vpop.f32.mrf.mxu0
  %v212 = vadd.f32 0.0, %v211
  %v213 = vpop.f32.mrf.mxu0
  %v214 = vpop.f32.mrf.mxu0
  %v215 = vadd.f32 0.0, %v214
  %v216 = vpop.f32.mrf.mxu0
  %217 = vmatprep.mubr.bf16.mxu0 0
  %218 = vmatmul.mubr.bf16.gmra.mxu0 %v100
  %v219 = vpop.f32.mrf.mxu0
  %v220 = vadd.f32 0.0, %v219
  %v221 = vpop.f32.mrf.mxu0
  %v222 = vpop.f32.mrf.mxu0
  %v223 = vadd.f32 0.0, %v222
  %v224 = vpop.f32.mrf.mxu0
  %225 = vmatprep.mubr.bf16.mxu0 0
  %226 = vmatmul.mubr.bf16.gmra.mxu0 %v101
  %v227 = vpop.f32.mrf.mxu0
  %v228 = vadd.f32 0.0, %v227
  %v229 = vpop.f32.mrf.mxu0
  %v230 = vpop.f32.mrf.mxu0
  %v231 = vadd.f32 0.0, %v230
  %v232 = vpop.f32.mrf.mxu0
  %233 = vmatprep.mubr.bf16.mxu0 0
  %234 = vmatmul.mubr.bf16.gmra.mxu0 %v102
  %v235 = vpop.f32.mrf.mxu0
  %v236 = vadd.f32 0.0, %v235
  %v237 = vpop.f32.mrf.mxu0
  %v238 = vpop.f32.mrf.mxu0
  %v239 = vadd.f32 0.0, %v238
  %v240 = vpop.f32.mrf.mxu0
  %241 = vmatprep.mubr.bf16.mxu0 0
  %242 = vmatmul.mubr.bf16.gmra.mxu0 %v103
  %v243 = vpop.f32.mrf.mxu0
  %v244 = vadd.f32 0.0, %v243
  %v245 = vpop.f32.mrf.mxu0
  %v246 = vpop.f32.mrf.mxu0
  %v247 = vadd.f32 0.0, %v246
  %v248 = vpop.f32.mrf.mxu0
  %249 = vmatprep.mubr.bf16.mxu0 0
  %250 = vmatmul.mubr.bf16.gmra.mxu0 %v104
  %v251 = vpop.f32.mrf.mxu0
  %v252 = vadd.f32 0.0, %v251
  %v253 = vpop.f32.mrf.mxu0
  %v254 = vpop.f32.mrf.mxu0
  %v255 = vadd.f32 0.0, %v254
  %v256 = vpop.f32.mrf.mxu0
  %257 = vdwg.mxu0
  %v258 = vld [vmem:[%s5] sm:$0xff]
  %v259 = vpack.c.bf16 %v199, %v196
  %v260 = vpack.c.bf16 %v207, %v204
  %v261 = vpack.c.bf16 %v215, %v212
  %v262 = vpack.c.bf16 %v223, %v220
  %v263 = vpack.c.bf16 %v231, %v228
  %v264 = vpack.c.bf16 %v239, %v236
  %v265 = vpack.c.bf16 %v247, %v244
  %v266 = vpack.c.bf16 %v255, %v252
  %v267 = vld [vmem:[%s3] sm:$0xf]
  %v268 = vld [vmem:[%s3 + $0x4] sm:$0xf]
  %v269 = vld [vmem:[%s3 + $0x8] sm:$0xf]
  %v270 = vld [vmem:[%s3 + $0xc] sm:$0xf]
  %v271 = vld [vmem:[%s3 + $0x10] sm:$0xf]
  %v272 = vld [vmem:[%s3 + $0x14] sm:$0xf]
  %v273 = vld [vmem:[%s3 + $0x18] sm:$0xf]
  %v274 = vld [vmem:[%s3 + $0x1c] sm:$0xf]
  %v275 = vld [vmem:[%s3 + $0x20] sm:$0xf]
  %v276 = vld [vmem:[%s3 + $0x24] sm:$0xf]
  %v277 = vld [vmem:[%s3 + $0x28] sm:$0xf]
  %v278 = vld [vmem:[%s3 + $0x2c] sm:$0xf]
  %v279 = vld [vmem:[%s3 + $0x30] sm:$0xf]
  %v280 = vld [vmem:[%s3 + $0x34] sm:$0xf]
  %v281 = vld [vmem:[%s3 + $0x38] sm:$0xf]
  %v282 = vld [vmem:[%s3 + $0x3c] sm:$0xf]
  %v283 = vlaneseq
  %v284 = vshrl.u32 %v283, 7
  %v285 = vsub.s32 0, %v284
  %v286 = vrot.slane %v258, %v285
  %v303 = vunpack.c.l.b16 %v267
  %v304 = vunpack.c.l.b16 %v268
  %v305 = vunpack.c.l.b16 %v269
  %v306 = vunpack.c.l.b16 %v270
  %v307 = vunpack.c.l.b16 %v271
  %v308 = vunpack.c.l.b16 %v272
  %v309 = vunpack.c.l.b16 %v273
  %v310 = vunpack.c.l.b16 %v274
  %v311 = vunpack.c.l.b16 %v275
  %v312 = vunpack.c.l.b16 %v276
  %v313 = vunpack.c.l.b16 %v277
  %v314 = vunpack.c.l.b16 %v278
  %v315 = vunpack.c.l.b16 %v279
  %v316 = vunpack.c.l.b16 %v280
  %v317 = vunpack.c.l.b16 %v281
  %v318 = vunpack.c.l.b16 %v282
  %v319 = vpack.c.b16 %v304, %v303
  %v320 = vpack.c.b16 %v306, %v305
  %v321 = vpack.c.b16 %v308, %v307
  %v322 = vpack.c.b16 %v310, %v309
  %v323 = vpack.c.b16 %v312, %v311
  %v324 = vpack.c.b16 %v314, %v313
  %v325 = vpack.c.b16 %v316, %v315
  %v326 = vpack.c.b16 %v318, %v317
  %335 = vmatprep.subr.bf16.mxu0 0
  %336 = vmatpush1.bf16.msra.mxu0 %v326
  %337 = vmatprep.subr.bf16.mxu0 0
  %338 = vmatpush1.bf16.msra.mxu0 %v325
  %339 = vmatprep.subr.bf16.mxu0 0
  %340 = vmatpush1.bf16.msra.mxu0 %v324
  %341 = vmatprep.subr.bf16.mxu0 0
  %342 = vmatpush1.bf16.msra.mxu0 %v323
  %343 = vmatprep.subr.bf16.mxu0 0
  %344 = vmatpush1.bf16.msra.mxu0 %v322
  %345 = vmatprep.subr.bf16.mxu0 0
  %346 = vmatpush1.bf16.msra.mxu0 %v321
  %347 = vmatprep.subr.bf16.mxu0 0
  %348 = vmatpush1.bf16.msra.mxu0 %v320
  %349 = vmatprep.subr.bf16.mxu0 0
  %350 = vmatpush1.bf16.msra.mxu0 %v319
  %351 = vmatprep.subr.bf16.mxu0 0
  %352 = vmatpush2.bf16.msra.mxu0 0
  %353 = vmatprep.subr.bf16.mxu0 0
  %354 = vmatpush2.bf16.msra.mxu0 0
  %355 = vmatprep.subr.bf16.mxu0 0
  %356 = vmatpush2.bf16.msra.mxu0 0
  %357 = vmatprep.subr.bf16.mxu0 0
  %358 = vmatpush2.bf16.msra.mxu0 0
  %359 = vmatprep.subr.bf16.mxu0 0
  %360 = vmatpush2.bf16.msra.mxu0 0
  %361 = vmatprep.subr.bf16.mxu0 0
  %362 = vmatpush2.bf16.msra.mxu0 0
  %363 = vmatprep.subr.bf16.mxu0 0
  %364 = vmatpush2.bf16.msra.mxu0 0
  %365 = vmatprep.subr.bf16.mxu0 0
  %366 = vmatpush2.bf16.msra.mxu0 0
  %367 = vmatprep.mubr.bf16.mxu0 0
  %368 = vmatmul.mubr.bf16.gmra.mxu0 %v259
  %v369 = vpop.f32.mrf.mxu0
  %v370 = vadd.f32 %v286, %v369
  %v371 = vpop.f32.mrf.mxu0
  %v372 = vpop.f32.mrf.mxu0
  %v373 = vadd.f32 %v286, %v372
  %v374 = vpop.f32.mrf.mxu0
  %375 = vmatprep.mubr.bf16.mxu0 0
  %376 = vmatmul.mubr.bf16.gmra.mxu0 %v260
  %v377 = vpop.f32.mrf.mxu0
  %v378 = vadd.f32 %v286, %v377
  %v379 = vpop.f32.mrf.mxu0
  %v380 = vpop.f32.mrf.mxu0
  %v381 = vadd.f32 %v286, %v380
  %v382 = vpop.f32.mrf.mxu0
  %383 = vmatprep.mubr.bf16.mxu0 0
  %384 = vmatmul.mubr.bf16.gmra.mxu0 %v261
  %v385 = vpop.f32.mrf.mxu0
  %v386 = vadd.f32 %v286, %v385
  %v387 = vpop.f32.mrf.mxu0
  %v388 = vpop.f32.mrf.mxu0
  %v389 = vadd.f32 %v286, %v388
  %v390 = vpop.f32.mrf.mxu0
  %391 = vmatprep.mubr.bf16.mxu0 0
  %392 = vmatmul.mubr.bf16.gmra.mxu0 %v262
  %v393 = vpop.f32.mrf.mxu0
  %v394 = vadd.f32 %v286, %v393
  %v395 = vpop.f32.mrf.mxu0
  %v396 = vpop.f32.mrf.mxu0
  %v397 = vadd.f32 %v286, %v396
  %v398 = vpop.f32.mrf.mxu0
  %399 = vmatprep.mubr.bf16.mxu0 0
  %400 = vmatmul.mubr.bf16.gmra.mxu0 %v263
  %v401 = vpop.f32.mrf.mxu0
  %v402 = vadd.f32 %v286, %v401
  %v403 = vpop.f32.mrf.mxu0
  %v404 = vpop.f32.mrf.mxu0
  %v405 = vadd.f32 %v286, %v404
  %v406 = vpop.f32.mrf.mxu0
  %407 = vmatprep.mubr.bf16.mxu0 0
  %408 = vmatmul.mubr.bf16.gmra.mxu0 %v264
  %v409 = vpop.f32.mrf.mxu0
  %v410 = vadd.f32 %v286, %v409
  %v411 = vpop.f32.mrf.mxu0
  %v412 = vpop.f32.mrf.mxu0
  %v413 = vadd.f32 %v286, %v412
  %v414 = vpop.f32.mrf.mxu0
  %415 = vmatprep.mubr.bf16.mxu0 0
  %416 = vmatmul.mubr.bf16.gmra.mxu0 %v265
  %v417 = vpop.f32.mrf.mxu0
  %v418 = vadd.f32 %v286, %v417
  %v419 = vpop.f32.mrf.mxu0
  %v420 = vpop.f32.mrf.mxu0
  %v421 = vadd.f32 %v286, %v420
  %v422 = vpop.f32.mrf.mxu0
  %423 = vmatprep.mubr.bf16.mxu0 0
  %424 = vmatmul.mubr.bf16.gmra.mxu0 %v266
  %v425 = vpop.f32.mrf.mxu0
  %v426 = vadd.f32 %v286, %v425
  %v427 = vpop.f32.mrf.mxu0
  %v428 = vpop.f32.mrf.mxu0
  %v429 = vadd.f32 %v286, %v428
  %v430 = vpop.f32.mrf.mxu0
  %431 = vdwg.mxu0
  %v432 = vmax.f32 %v370, 0.0
  %v433 = vmax.f32 %v373, 0.0
  %v434 = vmax.f32 %v378, 0.0
  %v435 = vmax.f32 %v381, 0.0
  %v436 = vmax.f32 %v386, 0.0
  %v437 = vmax.f32 %v389, 0.0
  %v438 = vmax.f32 %v394, 0.0
  %v439 = vmax.f32 %v397, 0.0
  %v440 = vmax.f32 %v402, 0.0
  %v441 = vmax.f32 %v405, 0.0
  %v442 = vmax.f32 %v410, 0.0
  %v443 = vmax.f32 %v413, 0.0
  %v444 = vmax.f32 %v418, 0.0
  %v445 = vmax.f32 %v421, 0.0
  %v446 = vmax.f32 %v426, 0.0
  %v447 = vmax.f32 %v429, 0.0
  %v448 = vpack.c.bf16 %v433, %v432
  %v449 = vpack.c.bf16 %v435, %v434
  %v450 = vpack.c.bf16 %v437, %v436
  %v451 = vpack.c.bf16 %v439, %v438
  %v452 = vpack.c.bf16 %v441, %v440
  %v453 = vpack.c.bf16 %v443, %v442
  %v454 = vpack.c.bf16 %v445, %v444
  %v455 = vpack.c.bf16 %v447, %v446
  %v456 = vld [vmem:[%s4] sm:$0xf]
  %v457 = vld [vmem:[%s4 + $0x4] sm:$0xf]
  %v458 = vld [vmem:[%s4 + $0x8] sm:$0xf]
  %v459 = vld [vmem:[%s4 + $0xc] sm:$0xf]
  %v460 = vld [vmem:[%s4 + $0x10] sm:$0xf]
  %v461 = vld [vmem:[%s4 + $0x14] sm:$0xf]
  %v462 = vld [vmem:[%s4 + $0x18] sm:$0xf]
  %v463 = vld [vmem:[%s4 + $0x1c] sm:$0xf]
  %v464 = vld [vmem:[%s4 + $0x20] sm:$0xf]
  %v465 = vld [vmem:[%s4 + $0x24] sm:$0xf]
  %v466 = vld [vmem:[%s4 + $0x28] sm:$0xf]
  %v467 = vld [vmem:[%s4 + $0x2c] sm:$0xf]
  %v468 = vld [vmem:[%s4 + $0x30] sm:$0xf]
  %v469 = vld [vmem:[%s4 + $0x34] sm:$0xf]
  %v470 = vld [vmem:[%s4 + $0x38] sm:$0xf]
  %v471 = vld [vmem:[%s4 + $0x3c] sm:$0xf]
  %v472 = vlaneseq
  %v473 = vshrl.u32 %v472, 7
  %v474 = vsub.s32 1, %v473
  %v475 = vrot.slane %v258, %v474
  %v492 = vunpack.c.l.b16 %v456
  %v493 = vunpack.c.l.b16 %v457
  %v494 = vunpack.c.l.b16 %v458
  %v495 = vunpack.c.l.b16 %v459
  %v496 = vunpack.c.l.b16 %v460
  %v497 = vunpack.c.l.b16 %v461
  %v498 = vunpack.c.l.b16 %v462
  %v499 = vunpack.c.l.b16 %v463
  %v500 = vunpack.c.l.b16 %v464
  %v501 = vunpack.c.l.b16 %v465
  %v502 = vunpack.c.l.b16 %v466
  %v503 = vunpack.c.l.b16 %v467
  %v504 = vunpack.c.l.b16 %v468
  %v505 = vunpack.c.l.b16 %v469
  %v506 = vunpack.c.l.b16 %v470
  %v507 = vunpack.c.l.b16 %v471
  %v508 = vpack.c.b16 %v493, %v492
  %v509 = vpack.c.b16 %v495, %v494
  %v510 = vpack.c.b16 %v497, %v496
  %v511 = vpack.c.b16 %v499, %v498
  %v512 = vpack.c.b16 %v501, %v500
  %v513 = vpack.c.b16 %v503, %v502
  %v514 = vpack.c.b16 %v505, %v504
  %v515 = vpack.c.b16 %v507, %v506
  %524 = vmatprep.subr.bf16.mxu0 0
  %525 = vmatpush1.bf16.msra.mxu0 %v515
  %526 = vmatprep.subr.bf16.mxu0 0
  %527 = vmatpush1.bf16.msra.mxu0 %v514
  %528 = vmatprep.subr.bf16.mxu0 0
  %529 = vmatpush1.bf16.msra.mxu0 %v513
  %530 = vmatprep.subr.bf16.mxu0 0
  %531 = vmatpush1.bf16.msra.mxu0 %v512
  %532 = vmatprep.subr.bf16.mxu0 0
  %533 = vmatpush1.bf16.msra.mxu0 %v511
  %534 = vmatprep.subr.bf16.mxu0 0
  %535 = vmatpush1.bf16.msra.mxu0 %v510
  %536 = vmatprep.subr.bf16.mxu0 0
  %537 = vmatpush1.bf16.msra.mxu0 %v509
  %538 = vmatprep.subr.bf16.mxu0 0
  %539 = vmatpush1.bf16.msra.mxu0 %v508
  %540 = vmatprep.subr.bf16.mxu0 0
  %541 = vmatpush2.bf16.msra.mxu0 0
  %542 = vmatprep.subr.bf16.mxu0 0
  %543 = vmatpush2.bf16.msra.mxu0 0
  %544 = vmatprep.subr.bf16.mxu0 0
  %545 = vmatpush2.bf16.msra.mxu0 0
  %546 = vmatprep.subr.bf16.mxu0 0
  %547 = vmatpush2.bf16.msra.mxu0 0
  %548 = vmatprep.subr.bf16.mxu0 0
  %549 = vmatpush2.bf16.msra.mxu0 0
  %550 = vmatprep.subr.bf16.mxu0 0
  %551 = vmatpush2.bf16.msra.mxu0 0
  %552 = vmatprep.subr.bf16.mxu0 0
  %553 = vmatpush2.bf16.msra.mxu0 0
  %554 = vmatprep.subr.bf16.mxu0 0
  %555 = vmatpush2.bf16.msra.mxu0 0
  %556 = vmatprep.mubr.bf16.mxu0 0
  %557 = vmatmul.mubr.bf16.gmra.mxu0 %v448
  %v558 = vpop.f32.mrf.mxu0
  %v559 = vadd.f32 %v475, %v558
  %v560 = vpop.f32.mrf.mxu0
  %v561 = vpop.f32.mrf.mxu0
  %v562 = vadd.f32 %v475, %v561
  %v563 = vpop.f32.mrf.mxu0
  %564 = vmatprep.mubr.bf16.mxu0 0
  %565 = vmatmul.mubr.bf16.gmra.mxu0 %v449
  %v566 = vpop.f32.mrf.mxu0
  %v567 = vadd.f32 %v475, %v566
  %v568 = vpop.f32.mrf.mxu0
  %v569 = vpop.f32.mrf.mxu0
  %v570 = vadd.f32 %v475, %v569
  %v571 = vpop.f32.mrf.mxu0
  %572 = vmatprep.mubr.bf16.mxu0 0
  %573 = vmatmul.mubr.bf16.gmra.mxu0 %v450
  %v574 = vpop.f32.mrf.mxu0
  %v575 = vadd.f32 %v475, %v574
  %v576 = vpop.f32.mrf.mxu0
  %v577 = vpop.f32.mrf.mxu0
  %v578 = vadd.f32 %v475, %v577
  %v579 = vpop.f32.mrf.mxu0
  %580 = vmatprep.mubr.bf16.mxu0 0
  %581 = vmatmul.mubr.bf16.gmra.mxu0 %v451
  %v582 = vpop.f32.mrf.mxu0
  %v583 = vadd.f32 %v475, %v582
  %v584 = vpop.f32.mrf.mxu0
  %v585 = vpop.f32.mrf.mxu0
  %v586 = vadd.f32 %v475, %v585
  %v587 = vpop.f32.mrf.mxu0
  %588 = vmatprep.mubr.bf16.mxu0 0
  %589 = vmatmul.mubr.bf16.gmra.mxu0 %v452
  %v590 = vpop.f32.mrf.mxu0
  %v591 = vadd.f32 %v475, %v590
  %v592 = vpop.f32.mrf.mxu0
  %v593 = vpop.f32.mrf.mxu0
  %v594 = vadd.f32 %v475, %v593
  %v595 = vpop.f32.mrf.mxu0
  %596 = vmatprep.mubr.bf16.mxu0 0
  %597 = vmatmul.mubr.bf16.gmra.mxu0 %v453
  %v598 = vpop.f32.mrf.mxu0
  %v599 = vadd.f32 %v475, %v598
  %v600 = vpop.f32.mrf.mxu0
  %v601 = vpop.f32.mrf.mxu0
  %v602 = vadd.f32 %v475, %v601
  %v603 = vpop.f32.mrf.mxu0
  %604 = vmatprep.mubr.bf16.mxu0 0
  %605 = vmatmul.mubr.bf16.gmra.mxu0 %v454
  %v606 = vpop.f32.mrf.mxu0
  %v607 = vadd.f32 %v475, %v606
  %v608 = vpop.f32.mrf.mxu0
  %v609 = vpop.f32.mrf.mxu0
  %v610 = vadd.f32 %v475, %v609
  %v611 = vpop.f32.mrf.mxu0
  %612 = vmatprep.mubr.bf16.mxu0 0
  %613 = vmatmul.mubr.bf16.gmra.mxu0 %v455
  %v614 = vpop.f32.mrf.mxu0
  %v615 = vadd.f32 %v475, %v614
  %v616 = vpop.f32.mrf.mxu0
  %v617 = vpop.f32.mrf.mxu0
  %v618 = vadd.f32 %v475, %v617
  %v619 = vpop.f32.mrf.mxu0
  %620 = vdwg.mxu0
  %v621 = vmax.f32 %v559, 0.0
  %v622 = vmax.f32 %v562, 0.0
  %v623 = vmax.f32 %v567, 0.0
  %v624 = vmax.f32 %v570, 0.0
  %v625 = vmax.f32 %v575, 0.0
  %v626 = vmax.f32 %v578, 0.0
  %v627 = vmax.f32 %v583, 0.0
  %v628 = vmax.f32 %v586, 0.0
  %v629 = vmax.f32 %v591, 0.0
  %v630 = vmax.f32 %v594, 0.0
  %v631 = vmax.f32 %v599, 0.0
  %v632 = vmax.f32 %v602, 0.0
  %v633 = vmax.f32 %v607, 0.0
  %v634 = vmax.f32 %v610, 0.0
  %v635 = vmax.f32 %v615, 0.0
  %v636 = vmax.f32 %v618, 0.0
  %v637 = vlaneseq
  %v638 = vshrl.u32 %v637, 7
  %v639 = vsub.s32 2, %v638
  %v640 = vrot.slane %v258, %v639
  %v641 = vadd.f32 %v621, %v640
  %v642 = vadd.f32 %v622, %v640
  %v643 = vadd.f32 %v623, %v640
  %v644 = vadd.f32 %v624, %v640
  %v645 = vadd.f32 %v625, %v640
  %v646 = vadd.f32 %v626, %v640
  %v647 = vadd.f32 %v627, %v640
  %v648 = vadd.f32 %v628, %v640
  %v649 = vadd.f32 %v629, %v640
  %v650 = vadd.f32 %v630, %v640
  %v651 = vadd.f32 %v631, %v640
  %v652 = vadd.f32 %v632, %v640
  %v653 = vadd.f32 %v633, %v640
  %v654 = vadd.f32 %v634, %v640
  %v655 = vadd.f32 %v635, %v640
  %v656 = vadd.f32 %v636, %v640
  %v657 = vpack.c.bf16 %v642, %v641
  %v658 = vpack.c.bf16 %v644, %v643
  %v659 = vpack.c.bf16 %v646, %v645
  %v660 = vpack.c.bf16 %v648, %v647
  %v661 = vpack.c.bf16 %v650, %v649
  %v662 = vpack.c.bf16 %v652, %v651
  %v663 = vpack.c.bf16 %v654, %v653
  %v664 = vpack.c.bf16 %v656, %v655
  %v673 = vunpack.c.l.b16 %v657
  %v674 = vunpack.c.h.b16 %v657
  %v675 = vunpack.c.l.b16 %v658
  %v676 = vunpack.c.h.b16 %v658
  %v677 = vunpack.c.l.b16 %v659
  %v678 = vunpack.c.h.b16 %v659
  %v679 = vunpack.c.l.b16 %v660
  %v680 = vunpack.c.h.b16 %v660
  %v681 = vunpack.c.l.b16 %v661
  %v682 = vunpack.c.h.b16 %v661
  %v683 = vunpack.c.l.b16 %v662
  %v684 = vunpack.c.h.b16 %v662
  %v685 = vunpack.c.l.b16 %v663
  %v686 = vunpack.c.h.b16 %v663
  %v687 = vunpack.c.l.b16 %v664
  %v688 = vunpack.c.h.b16 %v664
  %v689 = vpack.c.b16 %v673, %v673
  %v690 = vpack.c.b16 %v674, %v674
  %v691 = vpack.c.b16 %v675, %v675
  %v692 = vpack.c.b16 %v676, %v676
  %v693 = vpack.c.b16 %v677, %v677
  %v694 = vpack.c.b16 %v678, %v678
  %v695 = vpack.c.b16 %v679, %v679
  %v696 = vpack.c.b16 %v680, %v680
  %v697 = vpack.c.b16 %v681, %v681
  %v698 = vpack.c.b16 %v682, %v682
  %v699 = vpack.c.b16 %v683, %v683
  %v700 = vpack.c.b16 %v684, %v684
  %v701 = vpack.c.b16 %v685, %v685
  %v702 = vpack.c.b16 %v686, %v686
  %v703 = vpack.c.b16 %v687, %v687
  %v704 = vpack.c.b16 %v688, %v688
  %721 = vst [vmem:[#allocation2] sm:$0xf] %v689
  %722 = vst [vmem:[#allocation2 + $0x4] sm:$0xf] %v690
  %723 = vst [vmem:[#allocation2 + $0x8] sm:$0xf] %v691
  %724 = vst [vmem:[#allocation2 + $0xc] sm:$0xf] %v692
  %725 = vst [vmem:[#allocation2 + $0x10] sm:$0xf] %v693
  %726 = vst [vmem:[#allocation2 + $0x14] sm:$0xf] %v694
  %727 = vst [vmem:[#allocation2 + $0x18] sm:$0xf] %v695
  %728 = vst [vmem:[#allocation2 + $0x1c] sm:$0xf] %v696
  %729 = vst [vmem:[#allocation2 + $0x20] sm:$0xf] %v697
  %730 = vst [vmem:[#allocation2 + $0x24] sm:$0xf] %v698
  %731 = vst [vmem:[#allocation2 + $0x28] sm:$0xf] %v699
  %732 = vst [vmem:[#allocation2 + $0x2c] sm:$0xf] %v700
  %733 = vst [vmem:[#allocation2 + $0x30] sm:$0xf] %v701
  %734 = vst [vmem:[#allocation2 + $0x34] sm:$0xf] %v702
  %735 = vst [vmem:[#allocation2 + $0x38] sm:$0xf] %v703
  %736 = vst [vmem:[#allocation2 + $0x3c] sm:$0xf] %v704
  %v737 = vld [vmem:[#allocation2] sm:$0xf]
  %v738 = vld [vmem:[#allocation2 + $0x4] sm:$0xf]
  %v739 = vld [vmem:[#allocation2 + $0x8] sm:$0xf]
  %v740 = vld [vmem:[#allocation2 + $0xc] sm:$0xf]
  %v741 = vld [vmem:[#allocation2 + $0x10] sm:$0xf]
  %v742 = vld [vmem:[#allocation2 + $0x14] sm:$0xf]
  %v743 = vld [vmem:[#allocation2 + $0x18] sm:$0xf]
  %v744 = vld [vmem:[#allocation2 + $0x1c] sm:$0xf]
  %v745 = vld [vmem:[#allocation2 + $0x20] sm:$0xf]
  %v746 = vld [vmem:[#allocation2 + $0x24] sm:$0xf]
  %v747 = vld [vmem:[#allocation2 + $0x28] sm:$0xf]
  %v748 = vld [vmem:[#allocation2 + $0x2c] sm:$0xf]
  %v749 = vld [vmem:[#allocation2 + $0x30] sm:$0xf]
  %v750 = vld [vmem:[#allocation2 + $0x34] sm:$0xf]
  %v751 = vld [vmem:[#allocation2 + $0x38] sm:$0xf]
  %v752 = vld [vmem:[#allocation2 + $0x3c] sm:$0xf]
  %v753 = vld [vmem:[%s0] sm:$0xf]
  %v754 = vld [vmem:[%s0 + $0x4] sm:$0xf]
  %v755 = vld [vmem:[%s0 + $0x8] sm:$0xf]
  %v756 = vld [vmem:[%s0 + $0xc] sm:$0xf]
  %v757 = vld [vmem:[%s0 + $0x10] sm:$0xf]
  %v758 = vld [vmem:[%s0 + $0x14] sm:$0xf]
  %v759 = vld [vmem:[%s0 + $0x18] sm:$0xf]
  %v760 = vld [vmem:[%s0 + $0x1c] sm:$0xf]
  %v761 = vld [vmem:[%s0 + $0x20] sm:$0xf]
  %v762 = vld [vmem:[%s0 + $0x24] sm:$0xf]
  %v763 = vld [vmem:[%s0 + $0x28] sm:$0xf]
  %v764 = vld [vmem:[%s0 + $0x2c] sm:$0xf]
  %v765 = vld [vmem:[%s0 + $0x30] sm:$0xf]
  %v766 = vld [vmem:[%s0 + $0x34] sm:$0xf]
  %v767 = vld [vmem:[%s0 + $0x38] sm:$0xf]
  %v768 = vld [vmem:[%s0 + $0x3c] sm:$0xf]
  %v785 = vunpack.c.l.b16 %v753
  %v786 = vunpack.c.l.b16 %v754
  %v787 = vunpack.c.l.b16 %v755
  %v788 = vunpack.c.l.b16 %v756
  %v789 = vunpack.c.l.b16 %v757
  %v790 = vunpack.c.l.b16 %v758
  %v791 = vunpack.c.l.b16 %v759
  %v792 = vunpack.c.l.b16 %v760
  %v793 = vunpack.c.l.b16 %v761
  %v794 = vunpack.c.l.b16 %v762
  %v795 = vunpack.c.l.b16 %v763
  %v796 = vunpack.c.l.b16 %v764
  %v797 = vunpack.c.l.b16 %v765
  %v798 = vunpack.c.l.b16 %v766
  %v799 = vunpack.c.l.b16 %v767
  %v800 = vunpack.c.l.b16 %v768
  %v801 = vpack.c.b16 %v786, %v785
  %v802 = vpack.c.b16 %v788, %v787
  %v803 = vpack.c.b16 %v790, %v789
  %v804 = vpack.c.b16 %v792, %v791
  %v805 = vpack.c.b16 %v794, %v793
  %v806 = vpack.c.b16 %v796, %v795
  %v807 = vpack.c.b16 %v798, %v797
  %v808 = vpack.c.b16 %v800, %v799
  %v833 = vunpack.c.l.b16 %v737
  %v834 = vunpack.c.l.b16 %v738
  %v835 = vunpack.c.l.b16 %v739
  %v836 = vunpack.c.l.b16 %v740
  %v837 = vunpack.c.l.b16 %v741
  %v838 = vunpack.c.l.b16 %v742
  %v839 = vunpack.c.l.b16 %v743
  %v840 = vunpack.c.l.b16 %v744
  %v841 = vunpack.c.l.b16 %v745
  %v842 = vunpack.c.l.b16 %v746
  %v843 = vunpack.c.l.b16 %v747
  %v844 = vunpack.c.l.b16 %v748
  %v845 = vunpack.c.l.b16 %v749
  %v846 = vunpack.c.l.b16 %v750
  %v847 = vunpack.c.l.b16 %v751
  %v848 = vunpack.c.l.b16 %v752
  %v849 = vpack.c.b16 %v834, %v833
  %v850 = vpack.c.b16 %v836, %v835
  %v851 = vpack.c.b16 %v838, %v837
  %v852 = vpack.c.b16 %v840, %v839
  %v853 = vpack.c.b16 %v842, %v841
  %v854 = vpack.c.b16 %v844, %v843
  %v855 = vpack.c.b16 %v846, %v845
  %v856 = vpack.c.b16 %v848, %v847
  %865 = vmatprep.subr.bf16.mxu0 0
  %866 = vmatpush1.bf16.msra.mxu0 %v856
  %867 = vmatprep.subr.bf16.mxu0 0
  %868 = vmatpush1.bf16.msra.mxu0 %v855
  %869 = vmatprep.subr.bf16.mxu0 0
  %870 = vmatpush1.bf16.msra.mxu0 %v854
  %871 = vmatprep.subr.bf16.mxu0 0
  %872 = vmatpush1.bf16.msra.mxu0 %v853
  %873 = vmatprep.subr.bf16.mxu0 0
  %874 = vmatpush1.bf16.msra.mxu0 %v852
  %875 = vmatprep.subr.bf16.mxu0 0
  %876 = vmatpush1.bf16.msra.mxu0 %v851
  %877 = vmatprep.subr.bf16.mxu0 0
  %878 = vmatpush1.bf16.msra.mxu0 %v850
  %879 = vmatprep.subr.bf16.mxu0 0
  %880 = vmatpush1.bf16.msra.mxu0 %v849
  %881 = vmatprep.subr.bf16.mxu0 0
  %882 = vmatpush2.bf16.msra.mxu0 0
  %883 = vmatprep.subr.bf16.mxu0 0
  %884 = vmatpush2.bf16.msra.mxu0 0
  %885 = vmatprep.subr.bf16.mxu0 0
  %886 = vmatpush2.bf16.msra.mxu0 0
  %887 = vmatprep.subr.bf16.mxu0 0
  %888 = vmatpush2.bf16.msra.mxu0 0
  %889 = vmatprep.subr.bf16.mxu0 0
  %890 = vmatpush2.bf16.msra.mxu0 0
  %891 = vmatprep.subr.bf16.mxu0 0
  %892 = vmatpush2.bf16.msra.mxu0 0
  %893 = vmatprep.subr.bf16.mxu0 0
  %894 = vmatpush2.bf16.msra.mxu0 0
  %895 = vmatprep.subr.bf16.mxu0 0
  %896 = vmatpush2.bf16.msra.mxu0 0
  %897 = vmatprep.mubr.bf16.mxu0 0
  %898 = vmatmul.mubr.bf16.gmra.mxu0 %v801
  %v899 = vpop.f32.mrf.mxu0
  %v900 = vadd.f32 0.0, %v899
  %v901 = vpop.f32.mrf.mxu0
  %v902 = vpop.f32.mrf.mxu0
  %v903 = vadd.f32 0.0, %v902
  %v904 = vpop.f32.mrf.mxu0
  %905 = vmatprep.mubr.bf16.mxu0 0
  %906 = vmatmul.mubr.bf16.gmra.mxu0 %v802
  %v907 = vpop.f32.mrf.mxu0
  %v908 = vadd.f32 0.0, %v907
  %v909 = vpop.f32.mrf.mxu0
  %v910 = vpop.f32.mrf.mxu0
  %v911 = vadd.f32 0.0, %v910
  %v912 = vpop.f32.mrf.mxu0
  %913 = vmatprep.mubr.bf16.mxu0 0
  %914 = vmatmul.mubr.bf16.gmra.mxu0 %v803
  %v915 = vpop.f32.mrf.mxu0
  %v916 = vadd.f32 0.0, %v915
  %v917 = vpop.f32.mrf.mxu0
  %v918 = vpop.f32.mrf.mxu0
  %v919 = vadd.f32 0.0, %v918
  %v920 = vpop.f32.mrf.mxu0
  %921 = vmatprep.mubr.bf16.mxu0 0
  %922 = vmatmul.mubr.bf16.gmra.mxu0 %v804
  %v923 = vpop.f32.mrf.mxu0
  %v924 = vadd.f32 0.0, %v923
  %v925 = vpop.f32.mrf.mxu0
  %v926 = vpop.f32.mrf.mxu0
  %v927 = vadd.f32 0.0, %v926
  %v928 = vpop.f32.mrf.mxu0
  %929 = vmatprep.mubr.bf16.mxu0 0
  %930 = vmatmul.mubr.bf16.gmra.mxu0 %v805
  %v931 = vpop.f32.mrf.mxu0
  %v932 = vadd.f32 0.0, %v931
  %v933 = vpop.f32.mrf.mxu0
  %v934 = vpop.f32.mrf.mxu0
  %v935 = vadd.f32 0.0, %v934
  %v936 = vpop.f32.mrf.mxu0
  %937 = vmatprep.mubr.bf16.mxu0 0
  %938 = vmatmul.mubr.bf16.gmra.mxu0 %v806
  %v939 = vpop.f32.mrf.mxu0
  %v940 = vadd.f32 0.0, %v939
  %v941 = vpop.f32.mrf.mxu0
  %v942 = vpop.f32.mrf.mxu0
  %v943 = vadd.f32 0.0, %v942
  %v944 = vpop.f32.mrf.mxu0
  %945 = vmatprep.mubr.bf16.mxu0 0
  %946 = vmatmul.mubr.bf16.gmra.mxu0 %v807
  %v947 = vpop.f32.mrf.mxu0
  %v948 = vadd.f32 0.0, %v947
  %v949 = vpop.f32.mrf.mxu0
  %v950 = vpop.f32.mrf.mxu0
  %v951 = vadd.f32 0.0, %v950
  %v952 = vpop.f32.mrf.mxu0
  %953 = vmatprep.mubr.bf16.mxu0 0
  %954 = vmatmul.mubr.bf16.gmra.mxu0 %v808
  %v955 = vpop.f32.mrf.mxu0
  %v956 = vadd.f32 0.0, %v955
  %v957 = vpop.f32.mrf.mxu0
  %v958 = vpop.f32.mrf.mxu0
  %v959 = vadd.f32 0.0, %v958
  %v960 = vpop.f32.mrf.mxu0
  %961 = vdwg.mxu0
  %s962 = scalar_lea.vmem %s5, 8
  %v963 = vld [vmem:[%s962] sm:$0xff]
  %v964 = vpack.c.bf16 %v903, %v900
  %v965 = vpack.c.bf16 %v911, %v908
  %v966 = vpack.c.bf16 %v919, %v916
  %v967 = vpack.c.bf16 %v927, %v924
  %v968 = vpack.c.bf16 %v935, %v932
  %v969 = vpack.c.bf16 %v943, %v940
  %v970 = vpack.c.bf16 %v951, %v948
  %v971 = vpack.c.bf16 %v959, %v956
  %s972 = scalar_lea.vmem %s3, 64
  %v973 = vld [vmem:[%s972] sm:$0xf]
  %v974 = vld [vmem:[%s972 + $0x4] sm:$0xf]
  %v975 = vld [vmem:[%s972 + $0x8] sm:$0xf]
  %v976 = vld [vmem:[%s972 + $0xc] sm:$0xf]
  %v977 = vld [vmem:[%s972 + $0x10] sm:$0xf]
  %v978 = vld [vmem:[%s972 + $0x14] sm:$0xf]
  %v979 = vld [vmem:[%s972 + $0x18] sm:$0xf]
  %v980 = vld [vmem:[%s972 + $0x1c] sm:$0xf]
  %v981 = vld [vmem:[%s972 + $0x20] sm:$0xf]
  %v982 = vld [vmem:[%s972 + $0x24] sm:$0xf]
  %v983 = vld [vmem:[%s972 + $0x28] sm:$0xf]
  %v984 = vld [vmem:[%s972 + $0x2c] sm:$0xf]
  %v985 = vld [vmem:[%s972 + $0x30] sm:$0xf]
  %v986 = vld [vmem:[%s972 + $0x34] sm:$0xf]
  %v987 = vld [vmem:[%s972 + $0x38] sm:$0xf]
  %v988 = vld [vmem:[%s972 + $0x3c] sm:$0xf]
  %v989 = vlaneseq
  %v990 = vshrl.u32 %v989, 7
  %v991 = vsub.s32 0, %v990
  %v992 = vrot.slane %v963, %v991
  %v1009 = vunpack.c.l.b16 %v973
  %v1010 = vunpack.c.l.b16 %v974
  %v1011 = vunpack.c.l.b16 %v975
  %v1012 = vunpack.c.l.b16 %v976
  %v1013 = vunpack.c.l.b16 %v977
  %v1014 = vunpack.c.l.b16 %v978
  %v1015 = vunpack.c.l.b16 %v979
  %v1016 = vunpack.c.l.b16 %v980
  %v1017 = vunpack.c.l.b16 %v981
  %v1018 = vunpack.c.l.b16 %v982
  %v1019 = vunpack.c.l.b16 %v983
  %v1020 = vunpack.c.l.b16 %v984
  %v1021 = vunpack.c.l.b16 %v985
  %v1022 = vunpack.c.l.b16 %v986
  %v1023 = vunpack.c.l.b16 %v987
  %v1024 = vunpack.c.l.b16 %v988
  %v1025 = vpack.c.b16 %v1010, %v1009
  %v1026 = vpack.c.b16 %v1012, %v1011
  %v1027 = vpack.c.b16 %v1014, %v1013
  %v1028 = vpack.c.b16 %v1016, %v1015
  %v1029 = vpack.c.b16 %v1018, %v1017
  %v1030 = vpack.c.b16 %v1020, %v1019
  %v1031 = vpack.c.b16 %v1022, %v1021
  %v1032 = vpack.c.b16 %v1024, %v1023
  %1041 = vmatprep.subr.bf16.mxu0 0
  %1042 = vmatpush1.bf16.msra.mxu0 %v1032
  %1043 = vmatprep.subr.bf16.mxu0 0
  %1044 = vmatpush1.bf16.msra.mxu0 %v1031
  %1045 = vmatprep.subr.bf16.mxu0 0
  %1046 = vmatpush1.bf16.msra.mxu0 %v1030
  %1047 = vmatprep.subr.bf16.mxu0 0
  %1048 = vmatpush1.bf16.msra.mxu0 %v1029
  %1049 = vmatprep.subr.bf16.mxu0 0
  %1050 = vmatpush1.bf16.msra.mxu0 %v1028
  %1051 = vmatprep.subr.bf16.mxu0 0
  %1052 = vmatpush1.bf16.msra.mxu0 %v1027
  %1053 = vmatprep.subr.bf16.mxu0 0
  %1054 = vmatpush1.bf16.msra.mxu0 %v1026
  %1055 = vmatprep.subr.bf16.mxu0 0
  %1056 = vmatpush1.bf16.msra.mxu0 %v1025
  %1057 = vmatprep.subr.bf16.mxu0 0
  %1058 = vmatpush2.bf16.msra.mxu0 0
  %1059 = vmatprep.subr.bf16.mxu0 0
  %1060 = vmatpush2.bf16.msra.mxu0 0
  %1061 = vmatprep.subr.bf16.mxu0 0
  %1062 = vmatpush2.bf16.msra.mxu0 0
  %1063 = vmatprep.subr.bf16.mxu0 0
  %1064 = vmatpush2.bf16.msra.mxu0 0
  %1065 = vmatprep.subr.bf16.mxu0 0
  %1066 = vmatpush2.bf16.msra.mxu0 0
  %1067 = vmatprep.subr.bf16.mxu0 0
  %1068 = vmatpush2.bf16.msra.mxu0 0
  %1069 = vmatprep.subr.bf16.mxu0 0
  %1070 = vmatpush2.bf16.msra.mxu0 0
  %1071 = vmatprep.subr.bf16.mxu0 0
  %1072 = vmatpush2.bf16.msra.mxu0 0
  %1073 = vmatprep.mubr.bf16.mxu0 0
  %1074 = vmatmul.mubr.bf16.gmra.mxu0 %v964
  %v1075 = vpop.f32.mrf.mxu0
  %v1076 = vadd.f32 %v992, %v1075
  %v1077 = vpop.f32.mrf.mxu0
  %v1078 = vpop.f32.mrf.mxu0
  %v1079 = vadd.f32 %v992, %v1078
  %v1080 = vpop.f32.mrf.mxu0
  %1081 = vmatprep.mubr.bf16.mxu0 0
  %1082 = vmatmul.mubr.bf16.gmra.mxu0 %v965
  %v1083 = vpop.f32.mrf.mxu0
  %v1084 = vadd.f32 %v992, %v1083
  %v1085 = vpop.f32.mrf.mxu0
  %v1086 = vpop.f32.mrf.mxu0
  %v1087 = vadd.f32 %v992, %v1086
  %v1088 = vpop.f32.mrf.mxu0
  %1089 = vmatprep.mubr.bf16.mxu0 0
  %1090 = vmatmul.mubr.bf16.gmra.mxu0 %v966
  %v1091 = vpop.f32.mrf.mxu0
  %v1092 = vadd.f32 %v992, %v1091
  %v1093 = vpop.f32.mrf.mxu0
  %v1094 = vpop.f32.mrf.mxu0
  %v1095 = vadd.f32 %v992, %v1094
  %v1096 = vpop.f32.mrf.mxu0
  %1097 = vmatprep.mubr.bf16.mxu0 0
  %1098 = vmatmul.mubr.bf16.gmra.mxu0 %v967
  %v1099 = vpop.f32.mrf.mxu0
  %v1100 = vadd.f32 %v992, %v1099
  %v1101 = vpop.f32.mrf.mxu0
  %v1102 = vpop.f32.mrf.mxu0
  %v1103 = vadd.f32 %v992, %v1102
  %v1104 = vpop.f32.mrf.mxu0
  %1105 = vmatprep.mubr.bf16.mxu0 0
  %1106 = vmatmul.mubr.bf16.gmra.mxu0 %v968
  %v1107 = vpop.f32.mrf.mxu0
  %v1108 = vadd.f32 %v992, %v1107
  %v1109 = vpop.f32.mrf.mxu0
  %v1110 = vpop.f32.mrf.mxu0
  %v1111 = vadd.f32 %v992, %v1110
  %v1112 = vpop.f32.mrf.mxu0
  %1113 = vmatprep.mubr.bf16.mxu0 0
  %1114 = vmatmul.mubr.bf16.gmra.mxu0 %v969
  %v1115 = vpop.f32.mrf.mxu0
  %v1116 = vadd.f32 %v992, %v1115
  %v1117 = vpop.f32.mrf.mxu0
  %v1118 = vpop.f32.mrf.mxu0
  %v1119 = vadd.f32 %v992, %v1118
  %v1120 = vpop.f32.mrf.mxu0
  %1121 = vmatprep.mubr.bf16.mxu0 0
  %1122 = vmatmul.mubr.bf16.gmra.mxu0 %v970
  %v1123 = vpop.f32.mrf.mxu0
  %v1124 = vadd.f32 %v992, %v1123
  %v1125 = vpop.f32.mrf.mxu0
  %v1126 = vpop.f32.mrf.mxu0
  %v1127 = vadd.f32 %v992, %v1126
  %v1128 = vpop.f32.mrf.mxu0
  %1129 = vmatprep.mubr.bf16.mxu0 0
  %1130 = vmatmul.mubr.bf16.gmra.mxu0 %v971
  %v1131 = vpop.f32.mrf.mxu0
  %v1132 = vadd.f32 %v992, %v1131
  %v1133 = vpop.f32.mrf.mxu0
  %v1134 = vpop.f32.mrf.mxu0
  %v1135 = vadd.f32 %v992, %v1134
  %v1136 = vpop.f32.mrf.mxu0
  %1137 = vdwg.mxu0
  %v1138 = vmax.f32 %v1076, 0.0
  %v1139 = vmax.f32 %v1079, 0.0
  %v1140 = vmax.f32 %v1084, 0.0
  %v1141 = vmax.f32 %v1087, 0.0
  %v1142 = vmax.f32 %v1092, 0.0
  %v1143 = vmax.f32 %v1095, 0.0
  %v1144 = vmax.f32 %v1100, 0.0
  %v1145 = vmax.f32 %v1103, 0.0
  %v1146 = vmax.f32 %v1108, 0.0
  %v1147 = vmax.f32 %v1111, 0.0
  %v1148 = vmax.f32 %v1116, 0.0
  %v1149 = vmax.f32 %v1119, 0.0
  %v1150 = vmax.f32 %v1124, 0.0
  %v1151 = vmax.f32 %v1127, 0.0
  %v1152 = vmax.f32 %v1132, 0.0
  %v1153 = vmax.f32 %v1135, 0.0
  %v1154 = vpack.c.bf16 %v1139, %v1138
  %v1155 = vpack.c.bf16 %v1141, %v1140
  %v1156 = vpack.c.bf16 %v1143, %v1142
  %v1157 = vpack.c.bf16 %v1145, %v1144
  %v1158 = vpack.c.bf16 %v1147, %v1146
  %v1159 = vpack.c.bf16 %v1149, %v1148
  %v1160 = vpack.c.bf16 %v1151, %v1150
  %v1161 = vpack.c.bf16 %v1153, %v1152
  %s1162 = scalar_lea.vmem %s4, 64
  %v1163 = vld [vmem:[%s1162] sm:$0xf]
  %v1164 = vld [vmem:[%s1162 + $0x4] sm:$0xf]
  %v1165 = vld [vmem:[%s1162 + $0x8] sm:$0xf]
  %v1166 = vld [vmem:[%s1162 + $0xc] sm:$0xf]
  %v1167 = vld [vmem:[%s1162 + $0x10] sm:$0xf]
  %v1168 = vld [vmem:[%s1162 + $0x14] sm:$0xf]
  %v1169 = vld [vmem:[%s1162 + $0x18] sm:$0xf]
  %v1170 = vld [vmem:[%s1162 + $0x1c] sm:$0xf]
  %v1171 = vld [vmem:[%s1162 + $0x20] sm:$0xf]
  %v1172 = vld [vmem:[%s1162 + $0x24] sm:$0xf]
  %v1173 = vld [vmem:[%s1162 + $0x28] sm:$0xf]
  %v1174 = vld [vmem:[%s1162 + $0x2c] sm:$0xf]
  %v1175 = vld [vmem:[%s1162 + $0x30] sm:$0xf]
  %v1176 = vld [vmem:[%s1162 + $0x34] sm:$0xf]
  %v1177 = vld [vmem:[%s1162 + $0x38] sm:$0xf]
  %v1178 = vld [vmem:[%s1162 + $0x3c] sm:$0xf]
  %v1179 = vlaneseq
  %v1180 = vshrl.u32 %v1179, 7
  %v1181 = vsub.s32 1, %v1180
  %v1182 = vrot.slane %v963, %v1181
  %v1199 = vunpack.c.l.b16 %v1163
  %v1200 = vunpack.c.l.b16 %v1164
  %v1201 = vunpack.c.l.b16 %v1165
  %v1202 = vunpack.c.l.b16 %v1166
  %v1203 = vunpack.c.l.b16 %v1167
  %v1204 = vunpack.c.l.b16 %v1168
  %v1205 = vunpack.c.l.b16 %v1169
  %v1206 = vunpack.c.l.b16 %v1170
  %v1207 = vunpack.c.l.b16 %v1171
  %v1208 = vunpack.c.l.b16 %v1172
  %v1209 = vunpack.c.l.b16 %v1173
  %v1210 = vunpack.c.l.b16 %v1174
  %v1211 = vunpack.c.l.b16 %v1175
  %v1212 = vunpack.c.l.b16 %v1176
  %v1213 = vunpack.c.l.b16 %v1177
  %v1214 = vunpack.c.l.b16 %v1178
  %v1215 = vpack.c.b16 %v1200, %v1199
  %v1216 = vpack.c.b16 %v1202, %v1201
  %v1217 = vpack.c.b16 %v1204, %v1203
  %v1218 = vpack.c.b16 %v1206, %v1205
  %v1219 = vpack.c.b16 %v1208, %v1207
  %v1220 = vpack.c.b16 %v1210, %v1209
  %v1221 = vpack.c.b16 %v1212, %v1211
  %v1222 = vpack.c.b16 %v1214, %v1213
  %1231 = vmatprep.subr.bf16.mxu0 0
  %1232 = vmatpush1.bf16.msra.mxu0 %v1222
  %1233 = vmatprep.subr.bf16.mxu0 0
  %1234 = vmatpush1.bf16.msra.mxu0 %v1221
  %1235 = vmatprep.subr.bf16.mxu0 0
  %1236 = vmatpush1.bf16.msra.mxu0 %v1220
  %1237 = vmatprep.subr.bf16.mxu0 0
  %1238 = vmatpush1.bf16.msra.mxu0 %v1219
  %1239 = vmatprep.subr.bf16.mxu0 0
  %1240 = vmatpush1.bf16.msra.mxu0 %v1218
  %1241 = vmatprep.subr.bf16.mxu0 0
  %1242 = vmatpush1.bf16.msra.mxu0 %v1217
  %1243 = vmatprep.subr.bf16.mxu0 0
  %1244 = vmatpush1.bf16.msra.mxu0 %v1216
  %1245 = vmatprep.subr.bf16.mxu0 0
  %1246 = vmatpush1.bf16.msra.mxu0 %v1215
  %1247 = vmatprep.subr.bf16.mxu0 0
  %1248 = vmatpush2.bf16.msra.mxu0 0
  %1249 = vmatprep.subr.bf16.mxu0 0
  %1250 = vmatpush2.bf16.msra.mxu0 0
  %1251 = vmatprep.subr.bf16.mxu0 0
  %1252 = vmatpush2.bf16.msra.mxu0 0
  %1253 = vmatprep.subr.bf16.mxu0 0
  %1254 = vmatpush2.bf16.msra.mxu0 0
  %1255 = vmatprep.subr.bf16.mxu0 0
  %1256 = vmatpush2.bf16.msra.mxu0 0
  %1257 = vmatprep.subr.bf16.mxu0 0
  %1258 = vmatpush2.bf16.msra.mxu0 0
  %1259 = vmatprep.subr.bf16.mxu0 0
  %1260 = vmatpush2.bf16.msra.mxu0 0
  %1261 = vmatprep.subr.bf16.mxu0 0
  %1262 = vmatpush2.bf16.msra.mxu0 0
  %1263 = vmatprep.mubr.bf16.mxu0 0
  %1264 = vmatmul.mubr.bf16.gmra.mxu0 %v1154
  %v1265 = vpop.f32.mrf.mxu0
  %v1266 = vadd.f32 %v1182, %v1265
  %v1267 = vpop.f32.mrf.mxu0
  %v1268 = vpop.f32.mrf.mxu0
  %v1269 = vadd.f32 %v1182, %v1268
  %v1270 = vpop.f32.mrf.mxu0
  %1271 = vmatprep.mubr.bf16.mxu0 0
  %1272 = vmatmul.mubr.bf16.gmra.mxu0 %v1155
  %v1273 = vpop.f32.mrf.mxu0
  %v1274 = vadd.f32 %v1182, %v1273
  %v1275 = vpop.f32.mrf.mxu0
  %v1276 = vpop.f32.mrf.mxu0
  %v1277 = vadd.f32 %v1182, %v1276
  %v1278 = vpop.f32.mrf.mxu0
  %1279 = vmatprep.mubr.bf16.mxu0 0
  %1280 = vmatmul.mubr.bf16.gmra.mxu0 %v1156
  %v1281 = vpop.f32.mrf.mxu0
  %v1282 = vadd.f32 %v1182, %v1281
  %v1283 = vpop.f32.mrf.mxu0
  %v1284 = vpop.f32.mrf.mxu0
  %v1285 = vadd.f32 %v1182, %v1284
  %v1286 = vpop.f32.mrf.mxu0
  %1287 = vmatprep.mubr.bf16.mxu0 0
  %1288 = vmatmul.mubr.bf16.gmra.mxu0 %v1157
  %v1289 = vpop.f32.mrf.mxu0
  %v1290 = vadd.f32 %v1182, %v1289
  %v1291 = vpop.f32.mrf.mxu0
  %v1292 = vpop.f32.mrf.mxu0
  %v1293 = vadd.f32 %v1182, %v1292
  %v1294 = vpop.f32.mrf.mxu0
  %1295 = vmatprep.mubr.bf16.mxu0 0
  %1296 = vmatmul.mubr.bf16.gmra.mxu0 %v1158
  %v1297 = vpop.f32.mrf.mxu0
  %v1298 = vadd.f32 %v1182, %v1297
  %v1299 = vpop.f32.mrf.mxu0
  %v1300 = vpop.f32.mrf.mxu0
  %v1301 = vadd.f32 %v1182, %v1300
  %v1302 = vpop.f32.mrf.mxu0
  %1303 = vmatprep.mubr.bf16.mxu0 0
  %1304 = vmatmul.mubr.bf16.gmra.mxu0 %v1159
  %v1305 = vpop.f32.mrf.mxu0
  %v1306 = vadd.f32 %v1182, %v1305
  %v1307 = vpop.f32.mrf.mxu0
  %v1308 = vpop.f32.mrf.mxu0
  %v1309 = vadd.f32 %v1182, %v1308
  %v1310 = vpop.f32.mrf.mxu0
  %1311 = vmatprep.mubr.bf16.mxu0 0
  %1312 = vmatmul.mubr.bf16.gmra.mxu0 %v1160
  %v1313 = vpop.f32.mrf.mxu0
  %v1314 = vadd.f32 %v1182, %v1313
  %v1315 = vpop.f32.mrf.mxu0
  %v1316 = vpop.f32.mrf.mxu0
  %v1317 = vadd.f32 %v1182, %v1316
  %v1318 = vpop.f32.mrf.mxu0
  %1319 = vmatprep.mubr.bf16.mxu0 0
  %1320 = vmatmul.mubr.bf16.gmra.mxu0 %v1161
  %v1321 = vpop.f32.mrf.mxu0
  %v1322 = vadd.f32 %v1182, %v1321
  %v1323 = vpop.f32.mrf.mxu0
  %v1324 = vpop.f32.mrf.mxu0
  %v1325 = vadd.f32 %v1182, %v1324
  %v1326 = vpop.f32.mrf.mxu0
  %1327 = vdwg.mxu0
  %v1328 = vmax.f32 %v1266, 0.0
  %v1329 = vmax.f32 %v1269, 0.0
  %v1330 = vmax.f32 %v1274, 0.0
  %v1331 = vmax.f32 %v1277, 0.0
  %v1332 = vmax.f32 %v1282, 0.0
  %v1333 = vmax.f32 %v1285, 0.0
  %v1334 = vmax.f32 %v1290, 0.0
  %v1335 = vmax.f32 %v1293, 0.0
  %v1336 = vmax.f32 %v1298, 0.0
  %v1337 = vmax.f32 %v1301, 0.0
  %v1338 = vmax.f32 %v1306, 0.0
  %v1339 = vmax.f32 %v1309, 0.0
  %v1340 = vmax.f32 %v1314, 0.0
  %v1341 = vmax.f32 %v1317, 0.0
  %v1342 = vmax.f32 %v1322, 0.0
  %v1343 = vmax.f32 %v1325, 0.0
  %v1344 = vlaneseq
  %v1345 = vshrl.u32 %v1344, 7
  %v1346 = vsub.s32 2, %v1345
  %v1347 = vrot.slane %v963, %v1346
  %v1348 = vadd.f32 %v1328, %v1347
  %v1349 = vadd.f32 %v1329, %v1347
  %v1350 = vadd.f32 %v1330, %v1347
  %v1351 = vadd.f32 %v1331, %v1347
  %v1352 = vadd.f32 %v1332, %v1347
  %v1353 = vadd.f32 %v1333, %v1347
  %v1354 = vadd.f32 %v1334, %v1347
  %v1355 = vadd.f32 %v1335, %v1347
  %v1356 = vadd.f32 %v1336, %v1347
  %v1357 = vadd.f32 %v1337, %v1347
  %v1358 = vadd.f32 %v1338, %v1347
  %v1359 = vadd.f32 %v1339, %v1347
  %v1360 = vadd.f32 %v1340, %v1347
  %v1361 = vadd.f32 %v1341, %v1347
  %v1362 = vadd.f32 %v1342, %v1347
  %v1363 = vadd.f32 %v1343, %v1347
  %v1364 = vpack.c.bf16 %v1349, %v1348
  %v1365 = vpack.c.bf16 %v1351, %v1350
  %v1366 = vpack.c.bf16 %v1353, %v1352
  %v1367 = vpack.c.bf16 %v1355, %v1354
  %v1368 = vpack.c.bf16 %v1357, %v1356
  %v1369 = vpack.c.bf16 %v1359, %v1358
  %v1370 = vpack.c.bf16 %v1361, %v1360
  %v1371 = vpack.c.bf16 %v1363, %v1362
  %v1380 = vunpack.c.l.b16 %v1364
  %v1381 = vunpack.c.h.b16 %v1364
  %v1382 = vunpack.c.l.b16 %v1365
  %v1383 = vunpack.c.h.b16 %v1365
  %v1384 = vunpack.c.l.b16 %v1366
  %v1385 = vunpack.c.h.b16 %v1366
  %v1386 = vunpack.c.l.b16 %v1367
  %v1387 = vunpack.c.h.b16 %v1367
  %v1388 = vunpack.c.l.b16 %v1368
  %v1389 = vunpack.c.h.b16 %v1368
  %v1390 = vunpack.c.l.b16 %v1369
  %v1391 = vunpack.c.h.b16 %v1369
  %v1392 = vunpack.c.l.b16 %v1370
  %v1393 = vunpack.c.h.b16 %v1370
  %v1394 = vunpack.c.l.b16 %v1371
  %v1395 = vunpack.c.h.b16 %v1371
  %v1396 = vpack.c.b16 %v1380, %v1380
  %v1397 = vpack.c.b16 %v1381, %v1381
  %v1398 = vpack.c.b16 %v1382, %v1382
  %v1399 = vpack.c.b16 %v1383, %v1383
  %v1400 = vpack.c.b16 %v1384, %v1384
  %v1401 = vpack.c.b16 %v1385, %v1385
  %v1402 = vpack.c.b16 %v1386, %v1386
  %v1403 = vpack.c.b16 %v1387, %v1387
  %v1404 = vpack.c.b16 %v1388, %v1388
  %v1405 = vpack.c.b16 %v1389, %v1389
  %v1406 = vpack.c.b16 %v1390, %v1390
  %v1407 = vpack.c.b16 %v1391, %v1391
  %v1408 = vpack.c.b16 %v1392, %v1392
  %v1409 = vpack.c.b16 %v1393, %v1393
  %v1410 = vpack.c.b16 %v1394, %v1394
  %v1411 = vpack.c.b16 %v1395, %v1395
  %1428 = vst [vmem:[#allocation2] sm:$0xf] %v1396
  %1429 = vst [vmem:[#allocation2 + $0x4] sm:$0xf] %v1397
  %1430 = vst [vmem:[#allocation2 + $0x8] sm:$0xf] %v1398
  %1431 = vst [vmem:[#allocation2 + $0xc] sm:$0xf] %v1399
  %1432 = vst [vmem:[#allocation2 + $0x10] sm:$0xf] %v1400
  %1433 = vst [vmem:[#allocation2 + $0x14] sm:$0xf] %v1401
  %1434 = vst [vmem:[#allocation2 + $0x18] sm:$0xf] %v1402
  %1435 = vst [vmem:[#allocation2 + $0x1c] sm:$0xf] %v1403
  %1436 = vst [vmem:[#allocation2 + $0x20] sm:$0xf] %v1404
  %1437 = vst [vmem:[#allocation2 + $0x24] sm:$0xf] %v1405
  %1438 = vst [vmem:[#allocation2 + $0x28] sm:$0xf] %v1406
  %1439 = vst [vmem:[#allocation2 + $0x2c] sm:$0xf] %v1407
  %1440 = vst [vmem:[#allocation2 + $0x30] sm:$0xf] %v1408
  %1441 = vst [vmem:[#allocation2 + $0x34] sm:$0xf] %v1409
  %1442 = vst [vmem:[#allocation2 + $0x38] sm:$0xf] %v1410
  %1443 = vst [vmem:[#allocation2 + $0x3c] sm:$0xf] %v1411
  %v1444 = vld [vmem:[#allocation2] sm:$0xf]
  %v1445 = vld [vmem:[#allocation2 + $0x4] sm:$0xf]
  %v1446 = vld [vmem:[#allocation2 + $0x8] sm:$0xf]
  %v1447 = vld [vmem:[#allocation2 + $0xc] sm:$0xf]
  %v1448 = vld [vmem:[#allocation2 + $0x10] sm:$0xf]
  %v1449 = vld [vmem:[#allocation2 + $0x14] sm:$0xf]
  %v1450 = vld [vmem:[#allocation2 + $0x18] sm:$0xf]
  %v1451 = vld [vmem:[#allocation2 + $0x1c] sm:$0xf]
  %v1452 = vld [vmem:[#allocation2 + $0x20] sm:$0xf]
  %v1453 = vld [vmem:[#allocation2 + $0x24] sm:$0xf]
  %v1454 = vld [vmem:[#allocation2 + $0x28] sm:$0xf]
  %v1455 = vld [vmem:[#allocation2 + $0x2c] sm:$0xf]
  %v1456 = vld [vmem:[#allocation2 + $0x30] sm:$0xf]
  %v1457 = vld [vmem:[#allocation2 + $0x34] sm:$0xf]
  %v1458 = vld [vmem:[#allocation2 + $0x38] sm:$0xf]
  %v1459 = vld [vmem:[#allocation2 + $0x3c] sm:$0xf]
  %v1460 = vld [vmem:[%s0] sm:$0xf]
  %v1461 = vld [vmem:[%s0 + $0x4] sm:$0xf]
  %v1462 = vld [vmem:[%s0 + $0x8] sm:$0xf]
  %v1463 = vld [vmem:[%s0 + $0xc] sm:$0xf]
  %v1464 = vld [vmem:[%s0 + $0x10] sm:$0xf]
  %v1465 = vld [vmem:[%s0 + $0x14] sm:$0xf]
  %v1466 = vld [vmem:[%s0 + $0x18] sm:$0xf]
  %v1467 = vld [vmem:[%s0 + $0x1c] sm:$0xf]
  %v1468 = vld [vmem:[%s0 + $0x20] sm:$0xf]
  %v1469 = vld [vmem:[%s0 + $0x24] sm:$0xf]
  %v1470 = vld [vmem:[%s0 + $0x28] sm:$0xf]
  %v1471 = vld [vmem:[%s0 + $0x2c] sm:$0xf]
  %v1472 = vld [vmem:[%s0 + $0x30] sm:$0xf]
  %v1473 = vld [vmem:[%s0 + $0x34] sm:$0xf]
  %v1474 = vld [vmem:[%s0 + $0x38] sm:$0xf]
  %v1475 = vld [vmem:[%s0 + $0x3c] sm:$0xf]
  %v1492 = vunpack.c.l.b16 %v1460
  %v1493 = vunpack.c.l.b16 %v1461
  %v1494 = vunpack.c.l.b16 %v1462
  %v1495 = vunpack.c.l.b16 %v1463
  %v1496 = vunpack.c.l.b16 %v1464
  %v1497 = vunpack.c.l.b16 %v1465
  %v1498 = vunpack.c.l.b16 %v1466
  %v1499 = vunpack.c.l.b16 %v1467
  %v1500 = vunpack.c.l.b16 %v1468
  %v1501 = vunpack.c.l.b16 %v1469
  %v1502 = vunpack.c.l.b16 %v1470
  %v1503 = vunpack.c.l.b16 %v1471
  %v1504 = vunpack.c.l.b16 %v1472
  %v1505 = vunpack.c.l.b16 %v1473
  %v1506 = vunpack.c.l.b16 %v1474
  %v1507 = vunpack.c.l.b16 %v1475
  %v1508 = vpack.c.b16 %v1493, %v1492
  %v1509 = vpack.c.b16 %v1495, %v1494
  %v1510 = vpack.c.b16 %v1497, %v1496
  %v1511 = vpack.c.b16 %v1499, %v1498
  %v1512 = vpack.c.b16 %v1501, %v1500
  %v1513 = vpack.c.b16 %v1503, %v1502
  %v1514 = vpack.c.b16 %v1505, %v1504
  %v1515 = vpack.c.b16 %v1507, %v1506
  %v1540 = vunpack.c.l.b16 %v1444
  %v1541 = vunpack.c.l.b16 %v1445
  %v1542 = vunpack.c.l.b16 %v1446
  %v1543 = vunpack.c.l.b16 %v1447
  %v1544 = vunpack.c.l.b16 %v1448
  %v1545 = vunpack.c.l.b16 %v1449
  %v1546 = vunpack.c.l.b16 %v1450
  %v1547 = vunpack.c.l.b16 %v1451
  %v1548 = vunpack.c.l.b16 %v1452
  %v1549 = vunpack.c.l.b16 %v1453
  %v1550 = vunpack.c.l.b16 %v1454
  %v1551 = vunpack.c.l.b16 %v1455
  %v1552 = vunpack.c.l.b16 %v1456
  %v1553 = vunpack.c.l.b16 %v1457
  %v1554 = vunpack.c.l.b16 %v1458
  %v1555 = vunpack.c.l.b16 %v1459
  %v1556 = vpack.c.b16 %v1541, %v1540
  %v1557 = vpack.c.b16 %v1543, %v1542
  %v1558 = vpack.c.b16 %v1545, %v1544
  %v1559 = vpack.c.b16 %v1547, %v1546
  %v1560 = vpack.c.b16 %v1549, %v1548
  %v1561 = vpack.c.b16 %v1551, %v1550
  %v1562 = vpack.c.b16 %v1553, %v1552
  %v1563 = vpack.c.b16 %v1555, %v1554
  %1572 = vmatprep.subr.bf16.mxu0 0
  %1573 = vmatpush1.bf16.msra.mxu0 %v1563
  %1574 = vmatprep.subr.bf16.mxu0 0
  %1575 = vmatpush1.bf16.msra.mxu0 %v1562
  %1576 = vmatprep.subr.bf16.mxu0 0
  %1577 = vmatpush1.bf16.msra.mxu0 %v1561
  %1578 = vmatprep.subr.bf16.mxu0 0
  %1579 = vmatpush1.bf16.msra.mxu0 %v1560
  %1580 = vmatprep.subr.bf16.mxu0 0
  %1581 = vmatpush1.bf16.msra.mxu0 %v1559
  %1582 = vmatprep.subr.bf16.mxu0 0
  %1583 = vmatpush1.bf16.msra.mxu0 %v1558
  %1584 = vmatprep.subr.bf16.mxu0 0
  %1585 = vmatpush1.bf16.msra.mxu0 %v1557
  %1586 = vmatprep.subr.bf16.mxu0 0
  %1587 = vmatpush1.bf16.msra.mxu0 %v1556
  %1588 = vmatprep.subr.bf16.mxu0 0
  %1589 = vmatpush2.bf16.msra.mxu0 0
  %1590 = vmatprep.subr.bf16.mxu0 0
  %1591 = vmatpush2.bf16.msra.mxu0 0
  %1592 = vmatprep.subr.bf16.mxu0 0
  %1593 = vmatpush2.bf16.msra.mxu0 0
  %1594 = vmatprep.subr.bf16.mxu0 0
  %1595 = vmatpush2.bf16.msra.mxu0 0
  %1596 = vmatprep.subr.bf16.mxu0 0
  %1597 = vmatpush2.bf16.msra.mxu0 0
  %1598 = vmatprep.subr.bf16.mxu0 0
  %1599 = vmatpush2.bf16.msra.mxu0 0
  %1600 = vmatprep.subr.bf16.mxu0 0
  %1601 = vmatpush2.bf16.msra.mxu0 0
  %1602 = vmatprep.subr.bf16.mxu0 0
  %1603 = vmatpush2.bf16.msra.mxu0 0
  %1604 = vmatprep.mubr.bf16.mxu0 0
  %1605 = vmatmul.mubr.bf16.gmra.mxu0 %v1508
  %v1606 = vpop.f32.mrf.mxu0
  %v1607 = vadd.f32 0.0, %v1606
  %v1608 = vpop.f32.mrf.mxu0
  %v1609 = vpop.f32.mrf.mxu0
  %v1610 = vadd.f32 0.0, %v1609
  %v1611 = vpop.f32.mrf.mxu0
  %1612 = vmatprep.mubr.bf16.mxu0 0
  %1613 = vmatmul.mubr.bf16.gmra.mxu0 %v1509
  %v1614 = vpop.f32.mrf.mxu0
  %v1615 = vadd.f32 0.0, %v1614
  %v1616 = vpop.f32.mrf.mxu0
  %v1617 = vpop.f32.mrf.mxu0
  %v1618 = vadd.f32 0.0, %v1617
  %v1619 = vpop.f32.mrf.mxu0
  %1620 = vmatprep.mubr.bf16.mxu0 0
  %1621 = vmatmul.mubr.bf16.gmra.mxu0 %v1510
  %v1622 = vpop.f32.mrf.mxu0
  %v1623 = vadd.f32 0.0, %v1622
  %v1624 = vpop.f32.mrf.mxu0
  %v1625 = vpop.f32.mrf.mxu0
  %v1626 = vadd.f32 0.0, %v1625
  %v1627 = vpop.f32.mrf.mxu0
  %1628 = vmatprep.mubr.bf16.mxu0 0
  %1629 = vmatmul.mubr.bf16.gmra.mxu0 %v1511
  %v1630 = vpop.f32.mrf.mxu0
  %v1631 = vadd.f32 0.0, %v1630
  %v1632 = vpop.f32.mrf.mxu0
  %v1633 = vpop.f32.mrf.mxu0
  %v1634 = vadd.f32 0.0, %v1633
  %v1635 = vpop.f32.mrf.mxu0
  %1636 = vmatprep.mubr.bf16.mxu0 0
  %1637 = vmatmul.mubr.bf16.gmra.mxu0 %v1512
  %v1638 = vpop.f32.mrf.mxu0
  %v1639 = vadd.f32 0.0, %v1638
  %v1640 = vpop.f32.mrf.mxu0
  %v1641 = vpop.f32.mrf.mxu0
  %v1642 = vadd.f32 0.0, %v1641
  %v1643 = vpop.f32.mrf.mxu0
  %1644 = vmatprep.mubr.bf16.mxu0 0
  %1645 = vmatmul.mubr.bf16.gmra.mxu0 %v1513
  %v1646 = vpop.f32.mrf.mxu0
  %v1647 = vadd.f32 0.0, %v1646
  %v1648 = vpop.f32.mrf.mxu0
  %v1649 = vpop.f32.mrf.mxu0
  %v1650 = vadd.f32 0.0, %v1649
  %v1651 = vpop.f32.mrf.mxu0
  %1652 = vmatprep.mubr.bf16.mxu0 0
  %1653 = vmatmul.mubr.bf16.gmra.mxu0 %v1514
  %v1654 = vpop.f32.mrf.mxu0
  %v1655 = vadd.f32 0.0, %v1654
  %v1656 = vpop.f32.mrf.mxu0
  %v1657 = vpop.f32.mrf.mxu0
  %v1658 = vadd.f32 0.0, %v1657
  %v1659 = vpop.f32.mrf.mxu0
  %1660 = vmatprep.mubr.bf16.mxu0 0
  %1661 = vmatmul.mubr.bf16.gmra.mxu0 %v1515
  %v1662 = vpop.f32.mrf.mxu0
  %v1663 = vadd.f32 0.0, %v1662
  %v1664 = vpop.f32.mrf.mxu0
  %v1665 = vpop.f32.mrf.mxu0
  %v1666 = vadd.f32 0.0, %v1665
  %v1667 = vpop.f32.mrf.mxu0
  %1668 = vdwg.mxu0
  %s1669 = scalar_lea.vmem %s5, 16
  %v1670 = vld [vmem:[%s1669] sm:$0xff]
  %v1671 = vpack.c.bf16 %v1610, %v1607
  %v1672 = vpack.c.bf16 %v1618, %v1615
  %v1673 = vpack.c.bf16 %v1626, %v1623
  %v1674 = vpack.c.bf16 %v1634, %v1631
  %v1675 = vpack.c.bf16 %v1642, %v1639
  %v1676 = vpack.c.bf16 %v1650, %v1647
  %v1677 = vpack.c.bf16 %v1658, %v1655
  %v1678 = vpack.c.bf16 %v1666, %v1663
  %s1679 = scalar_lea.vmem %s3, 128
  %v1680 = vld [vmem:[%s1679] sm:$0xf]
  %v1681 = vld [vmem:[%s1679 + $0x4] sm:$0xf]
  %v1682 = vld [vmem:[%s1679 + $0x8] sm:$0xf]
  %v1683 = vld [vmem:[%s1679 + $0xc] sm:$0xf]
  %v1684 = vld [vmem:[%s1679 + $0x10] sm:$0xf]
  %v1685 = vld [vmem:[%s1679 + $0x14] sm:$0xf]
  %v1686 = vld [vmem:[%s1679 + $0x18] sm:$0xf]
  %v1687 = vld [vmem:[%s1679 + $0x1c] sm:$0xf]
  %v1688 = vld [vmem:[%s1679 + $0x20] sm:$0xf]
  %v1689 = vld [vmem:[%s1679 + $0x24] sm:$0xf]
  %v1690 = vld [vmem:[%s1679 + $0x28] sm:$0xf]
  %v1691 = vld [vmem:[%s1679 + $0x2c] sm:$0xf]
  %v1692 = vld [vmem:[%s1679 + $0x30] sm:$0xf]
  %v1693 = vld [vmem:[%s1679 + $0x34] sm:$0xf]
  %v1694 = vld [vmem:[%s1679 + $0x38] sm:$0xf]
  %v1695 = vld [vmem:[%s1679 + $0x3c] sm:$0xf]
  %v1696 = vlaneseq
  %v1697 = vshrl.u32 %v1696, 7
  %v1698 = vsub.s32 0, %v1697
  %v1699 = vrot.slane %v1670, %v1698
  %v1716 = vunpack.c.l.b16 %v1680
  %v1717 = vunpack.c.l.b16 %v1681
  %v1718 = vunpack.c.l.b16 %v1682
  %v1719 = vunpack.c.l.b16 %v1683
  %v1720 = vunpack.c.l.b16 %v1684
  %v1721 = vunpack.c.l.b16 %v1685
  %v1722 = vunpack.c.l.b16 %v1686
  %v1723 = vunpack.c.l.b16 %v1687
  %v1724 = vunpack.c.l.b16 %v1688
  %v1725 = vunpack.c.l.b16 %v1689
  %v1726 = vunpack.c.l.b16 %v1690
  %v1727 = vunpack.c.l.b16 %v1691
  %v1728 = vunpack.c.l.b16 %v1692
  %v1729 = vunpack.c.l.b16 %v1693
  %v1730 = vunpack.c.l.b16 %v1694
  %v1731 = vunpack.c.l.b16 %v1695
  %v1732 = vpack.c.b16 %v1717, %v1716
  %v1733 = vpack.c.b16 %v1719, %v1718
  %v1734 = vpack.c.b16 %v1721, %v1720
  %v1735 = vpack.c.b16 %v1723, %v1722
  %v1736 = vpack.c.b16 %v1725, %v1724
  %v1737 = vpack.c.b16 %v1727, %v1726
  %v1738 = vpack.c.b16 %v1729, %v1728
  %v1739 = vpack.c.b16 %v1731, %v1730
  %1748 = vmatprep.subr.bf16.mxu0 0
  %1749 = vmatpush1.bf16.msra.mxu0 %v1739
  %1750 = vmatprep.subr.bf16.mxu0 0
  %1751 = vmatpush1.bf16.msra.mxu0 %v1738
  %1752 = vmatprep.subr.bf16.mxu0 0
  %1753 = vmatpush1.bf16.msra.mxu0 %v1737
  %1754 = vmatprep.subr.bf16.mxu0 0
  %1755 = vmatpush1.bf16.msra.mxu0 %v1736
  %1756 = vmatprep.subr.bf16.mxu0 0
  %1757 = vmatpush1.bf16.msra.mxu0 %v1735
  %1758 = vmatprep.subr.bf16.mxu0 0
  %1759 = vmatpush1.bf16.msra.mxu0 %v1734
  %1760 = vmatprep.subr.bf16.mxu0 0
  %1761 = vmatpush1.bf16.msra.mxu0 %v1733
  %1762 = vmatprep.subr.bf16.mxu0 0
  %1763 = vmatpush1.bf16.msra.mxu0 %v1732
  %1764 = vmatprep.subr.bf16.mxu0 0
  %1765 = vmatpush2.bf16.msra.mxu0 0
  %1766 = vmatprep.subr.bf16.mxu0 0
  %1767 = vmatpush2.bf16.msra.mxu0 0
  %1768 = vmatprep.subr.bf16.mxu0 0
  %1769 = vmatpush2.bf16.msra.mxu0 0
  %1770 = vmatprep.subr.bf16.mxu0 0
  %1771 = vmatpush2.bf16.msra.mxu0 0
  %1772 = vmatprep.subr.bf16.mxu0 0
  %1773 = vmatpush2.bf16.msra.mxu0 0
  %1774 = vmatprep.subr.bf16.mxu0 0
  %1775 = vmatpush2.bf16.msra.mxu0 0
  %1776 = vmatprep.subr.bf16.mxu0 0
  %1777 = vmatpush2.bf16.msra.mxu0 0
  %1778 = vmatprep.subr.bf16.mxu0 0
  %1779 = vmatpush2.bf16.msra.mxu0 0
  %1780 = vmatprep.mubr.bf16.mxu0 0
  %1781 = vmatmul.mubr.bf16.gmra.mxu0 %v1671
  %v1782 = vpop.f32.mrf.mxu0
  %v1783 = vadd.f32 %v1699, %v1782
  %v1784 = vpop.f32.mrf.mxu0
  %v1785 = vpop.f32.mrf.mxu0
  %v1786 = vadd.f32 %v1699, %v1785
  %v1787 = vpop.f32.mrf.mxu0
  %1788 = vmatprep.mubr.bf16.mxu0 0
  %1789 = vmatmul.mubr.bf16.gmra.mxu0 %v1672
  %v1790 = vpop.f32.mrf.mxu0
  %v1791 = vadd.f32 %v1699, %v1790
  %v1792 = vpop.f32.mrf.mxu0
  %v1793 = vpop.f32.mrf.mxu0
  %v1794 = vadd.f32 %v1699, %v1793
  %v1795 = vpop.f32.mrf.mxu0
  %1796 = vmatprep.mubr.bf16.mxu0 0
  %1797 = vmatmul.mubr.bf16.gmra.mxu0 %v1673
  %v1798 = vpop.f32.mrf.mxu0
  %v1799 = vadd.f32 %v1699, %v1798
  %v1800 = vpop.f32.mrf.mxu0
  %v1801 = vpop.f32.mrf.mxu0
  %v1802 = vadd.f32 %v1699, %v1801
  %v1803 = vpop.f32.mrf.mxu0
  %1804 = vmatprep.mubr.bf16.mxu0 0
  %1805 = vmatmul.mubr.bf16.gmra.mxu0 %v1674
  %v1806 = vpop.f32.mrf.mxu0
  %v1807 = vadd.f32 %v1699, %v1806
  %v1808 = vpop.f32.mrf.mxu0
  %v1809 = vpop.f32.mrf.mxu0
  %v1810 = vadd.f32 %v1699, %v1809
  %v1811 = vpop.f32.mrf.mxu0
  %1812 = vmatprep.mubr.bf16.mxu0 0
  %1813 = vmatmul.mubr.bf16.gmra.mxu0 %v1675
  %v1814 = vpop.f32.mrf.mxu0
  %v1815 = vadd.f32 %v1699, %v1814
  %v1816 = vpop.f32.mrf.mxu0
  %v1817 = vpop.f32.mrf.mxu0
  %v1818 = vadd.f32 %v1699, %v1817
  %v1819 = vpop.f32.mrf.mxu0
  %1820 = vmatprep.mubr.bf16.mxu0 0
  %1821 = vmatmul.mubr.bf16.gmra.mxu0 %v1676
  %v1822 = vpop.f32.mrf.mxu0
  %v1823 = vadd.f32 %v1699, %v1822
  %v1824 = vpop.f32.mrf.mxu0
  %v1825 = vpop.f32.mrf.mxu0
  %v1826 = vadd.f32 %v1699, %v1825
  %v1827 = vpop.f32.mrf.mxu0
  %1828 = vmatprep.mubr.bf16.mxu0 0
  %1829 = vmatmul.mubr.bf16.gmra.mxu0 %v1677
  %v1830 = vpop.f32.mrf.mxu0
  %v1831 = vadd.f32 %v1699, %v1830
  %v1832 = vpop.f32.mrf.mxu0
  %v1833 = vpop.f32.mrf.mxu0
  %v1834 = vadd.f32 %v1699, %v1833
  %v1835 = vpop.f32.mrf.mxu0
  %1836 = vmatprep.mubr.bf16.mxu0 0
  %1837 = vmatmul.mubr.bf16.gmra.mxu0 %v1678
  %v1838 = vpop.f32.mrf.mxu0
  %v1839 = vadd.f32 %v1699, %v1838
  %v1840 = vpop.f32.mrf.mxu0
  %v1841 = vpop.f32.mrf.mxu0
  %v1842 = vadd.f32 %v1699, %v1841
  %v1843 = vpop.f32.mrf.mxu0
  %1844 = vdwg.mxu0
  %v1845 = vmax.f32 %v1783, 0.0
  %v1846 = vmax.f32 %v1786, 0.0
  %v1847 = vmax.f32 %v1791, 0.0
  %v1848 = vmax.f32 %v1794, 0.0
  %v1849 = vmax.f32 %v1799, 0.0
  %v1850 = vmax.f32 %v1802, 0.0
  %v1851 = vmax.f32 %v1807, 0.0
  %v1852 = vmax.f32 %v1810, 0.0
  %v1853 = vmax.f32 %v1815, 0.0
  %v1854 = vmax.f32 %v1818, 0.0
  %v1855 = vmax.f32 %v1823, 0.0
  %v1856 = vmax.f32 %v1826, 0.0
  %v1857 = vmax.f32 %v1831, 0.0
  %v1858 = vmax.f32 %v1834, 0.0
  %v1859 = vmax.f32 %v1839, 0.0
  %v1860 = vmax.f32 %v1842, 0.0
  %v1861 = vpack.c.bf16 %v1846, %v1845
  %v1862 = vpack.c.bf16 %v1848, %v1847
  %v1863 = vpack.c.bf16 %v1850, %v1849
  %v1864 = vpack.c.bf16 %v1852, %v1851
  %v1865 = vpack.c.bf16 %v1854, %v1853
  %v1866 = vpack.c.bf16 %v1856, %v1855
  %v1867 = vpack.c.bf16 %v1858, %v1857
  %v1868 = vpack.c.bf16 %v1860, %v1859
  %s1869 = scalar_lea.vmem %s4, 128
  %v1870 = vld [vmem:[%s1869] sm:$0xf]
  %v1871 = vld [vmem:[%s1869 + $0x4] sm:$0xf]
  %v1872 = vld [vmem:[%s1869 + $0x8] sm:$0xf]
  %v1873 = vld [vmem:[%s1869 + $0xc] sm:$0xf]
  %v1874 = vld [vmem:[%s1869 + $0x10] sm:$0xf]
  %v1875 = vld [vmem:[%s1869 + $0x14] sm:$0xf]
  %v1876 = vld [vmem:[%s1869 + $0x18] sm:$0xf]
  %v1877 = vld [vmem:[%s1869 + $0x1c] sm:$0xf]
  %v1878 = vld [vmem:[%s1869 + $0x20] sm:$0xf]
  %v1879 = vld [vmem:[%s1869 + $0x24] sm:$0xf]
  %v1880 = vld [vmem:[%s1869 + $0x28] sm:$0xf]
  %v1881 = vld [vmem:[%s1869 + $0x2c] sm:$0xf]
  %v1882 = vld [vmem:[%s1869 + $0x30] sm:$0xf]
  %v1883 = vld [vmem:[%s1869 + $0x34] sm:$0xf]
  %v1884 = vld [vmem:[%s1869 + $0x38] sm:$0xf]
  %v1885 = vld [vmem:[%s1869 + $0x3c] sm:$0xf]
  %v1886 = vlaneseq
  %v1887 = vshrl.u32 %v1886, 7
  %v1888 = vsub.s32 1, %v1887
  %v1889 = vrot.slane %v1670, %v1888
  %v1906 = vunpack.c.l.b16 %v1870
  %v1907 = vunpack.c.l.b16 %v1871
  %v1908 = vunpack.c.l.b16 %v1872
  %v1909 = vunpack.c.l.b16 %v1873
  %v1910 = vunpack.c.l.b16 %v1874
  %v1911 = vunpack.c.l.b16 %v1875
  %v1912 = vunpack.c.l.b16 %v1876
  %v1913 = vunpack.c.l.b16 %v1877
  %v1914 = vunpack.c.l.b16 %v1878
  %v1915 = vunpack.c.l.b16 %v1879
  %v1916 = vunpack.c.l.b16 %v1880
  %v1917 = vunpack.c.l.b16 %v1881
  %v1918 = vunpack.c.l.b16 %v1882
  %v1919 = vunpack.c.l.b16 %v1883
  %v1920 = vunpack.c.l.b16 %v1884
  %v1921 = vunpack.c.l.b16 %v1885
  %v1922 = vpack.c.b16 %v1907, %v1906
  %v1923 = vpack.c.b16 %v1909, %v1908
  %v1924 = vpack.c.b16 %v1911, %v1910
  %v1925 = vpack.c.b16 %v1913, %v1912
  %v1926 = vpack.c.b16 %v1915, %v1914
  %v1927 = vpack.c.b16 %v1917, %v1916
  %v1928 = vpack.c.b16 %v1919, %v1918
  %v1929 = vpack.c.b16 %v1921, %v1920
  %1938 = vmatprep.subr.bf16.mxu0 0
  %1939 = vmatpush1.bf16.msra.mxu0 %v1929
  %1940 = vmatprep.subr.bf16.mxu0 0
  %1941 = vmatpush1.bf16.msra.mxu0 %v1928
  %1942 = vmatprep.subr.bf16.mxu0 0
  %1943 = vmatpush1.bf16.msra.mxu0 %v1927
  %1944 = vmatprep.subr.bf16.mxu0 0
  %1945 = vmatpush1.bf16.msra.mxu0 %v1926
  %1946 = vmatprep.subr.bf16.mxu0 0
  %1947 = vmatpush1.bf16.msra.mxu0 %v1925
  %1948 = vmatprep.subr.bf16.mxu0 0
  %1949 = vmatpush1.bf16.msra.mxu0 %v1924
  %1950 = vmatprep.subr.bf16.mxu0 0
  %1951 = vmatpush1.bf16.msra.mxu0 %v1923
  %1952 = vmatprep.subr.bf16.mxu0 0
  %1953 = vmatpush1.bf16.msra.mxu0 %v1922
  %1954 = vmatprep.subr.bf16.mxu0 0
  %1955 = vmatpush2.bf16.msra.mxu0 0
  %1956 = vmatprep.subr.bf16.mxu0 0
  %1957 = vmatpush2.bf16.msra.mxu0 0
  %1958 = vmatprep.subr.bf16.mxu0 0
  %1959 = vmatpush2.bf16.msra.mxu0 0
  %1960 = vmatprep.subr.bf16.mxu0 0
  %1961 = vmatpush2.bf16.msra.mxu0 0
  %1962 = vmatprep.subr.bf16.mxu0 0
  %1963 = vmatpush2.bf16.msra.mxu0 0
  %1964 = vmatprep.subr.bf16.mxu0 0
  %1965 = vmatpush2.bf16.msra.mxu0 0
  %1966 = vmatprep.subr.bf16.mxu0 0
  %1967 = vmatpush2.bf16.msra.mxu0 0
  %1968 = vmatprep.subr.bf16.mxu0 0
  %1969 = vmatpush2.bf16.msra.mxu0 0
  %1970 = vmatprep.mubr.bf16.mxu0 0
  %1971 = vmatmul.mubr.bf16.gmra.mxu0 %v1861
  %v1972 = vpop.f32.mrf.mxu0
  %v1973 = vadd.f32 %v1889, %v1972
  %v1974 = vpop.f32.mrf.mxu0
  %v1975 = vpop.f32.mrf.mxu0
  %v1976 = vadd.f32 %v1889, %v1975
  %v1977 = vpop.f32.mrf.mxu0
  %1978 = vmatprep.mubr.bf16.mxu0 0
  %1979 = vmatmul.mubr.bf16.gmra.mxu0 %v1862
  %v1980 = vpop.f32.mrf.mxu0
  %v1981 = vadd.f32 %v1889, %v1980
  %v1982 = vpop.f32.mrf.mxu0
  %v1983 = vpop.f32.mrf.mxu0
  %v1984 = vadd.f32 %v1889, %v1983
  %v1985 = vpop.f32.mrf.mxu0
  %1986 = vmatprep.mubr.bf16.mxu0 0
  %1987 = vmatmul.mubr.bf16.gmra.mxu0 %v1863
  %v1988 = vpop.f32.mrf.mxu0
  %v1989 = vadd.f32 %v1889, %v1988
  %v1990 = vpop.f32.mrf.mxu0
  %v1991 = vpop.f32.mrf.mxu0
  %v1992 = vadd.f32 %v1889, %v1991
  %v1993 = vpop.f32.mrf.mxu0
  %1994 = vmatprep.mubr.bf16.mxu0 0
  %1995 = vmatmul.mubr.bf16.gmra.mxu0 %v1864
  %v1996 = vpop.f32.mrf.mxu0
  %v1997 = vadd.f32 %v1889, %v1996
  %v1998 = vpop.f32.mrf.mxu0
  %v1999 = vpop.f32.mrf.mxu0
  %v2000 = vadd.f32 %v1889, %v1999
  %v2001 = vpop.f32.mrf.mxu0
  %2002 = vmatprep.mubr.bf16.mxu0 0
  %2003 = vmatmul.mubr.bf16.gmra.mxu0 %v1865
  %v2004 = vpop.f32.mrf.mxu0
  %v2005 = vadd.f32 %v1889, %v2004
  %v2006 = vpop.f32.mrf.mxu0
  %v2007 = vpop.f32.mrf.mxu0
  %v2008 = vadd.f32 %v1889, %v2007
  %v2009 = vpop.f32.mrf.mxu0
  %2010 = vmatprep.mubr.bf16.mxu0 0
  %2011 = vmatmul.mubr.bf16.gmra.mxu0 %v1866
  %v2012 = vpop.f32.mrf.mxu0
  %v2013 = vadd.f32 %v1889, %v2012
  %v2014 = vpop.f32.mrf.mxu0
  %v2015 = vpop.f32.mrf.mxu0
  %v2016 = vadd.f32 %v1889, %v2015
  %v2017 = vpop.f32.mrf.mxu0
  %2018 = vmatprep.mubr.bf16.mxu0 0
  %2019 = vmatmul.mubr.bf16.gmra.mxu0 %v1867
  %v2020 = vpop.f32.mrf.mxu0
  %v2021 = vadd.f32 %v1889, %v2020
  %v2022 = vpop.f32.mrf.mxu0
  %v2023 = vpop.f32.mrf.mxu0
  %v2024 = vadd.f32 %v1889, %v2023
  %v2025 = vpop.f32.mrf.mxu0
  %2026 = vmatprep.mubr.bf16.mxu0 0
  %2027 = vmatmul.mubr.bf16.gmra.mxu0 %v1868
  %v2028 = vpop.f32.mrf.mxu0
  %v2029 = vadd.f32 %v1889, %v2028
  %v2030 = vpop.f32.mrf.mxu0
  %v2031 = vpop.f32.mrf.mxu0
  %v2032 = vadd.f32 %v1889, %v2031
  %v2033 = vpop.f32.mrf.mxu0
  %2034 = vdwg.mxu0
  %v2035 = vmax.f32 %v1973, 0.0
  %v2036 = vmax.f32 %v1976, 0.0
  %v2037 = vmax.f32 %v1981, 0.0
  %v2038 = vmax.f32 %v1984, 0.0
  %v2039 = vmax.f32 %v1989, 0.0
  %v2040 = vmax.f32 %v1992, 0.0
  %v2041 = vmax.f32 %v1997, 0.0
  %v2042 = vmax.f32 %v2000, 0.0
  %v2043 = vmax.f32 %v2005, 0.0
  %v2044 = vmax.f32 %v2008, 0.0
  %v2045 = vmax.f32 %v2013, 0.0
  %v2046 = vmax.f32 %v2016, 0.0
  %v2047 = vmax.f32 %v2021, 0.0
  %v2048 = vmax.f32 %v2024, 0.0
  %v2049 = vmax.f32 %v2029, 0.0
  %v2050 = vmax.f32 %v2032, 0.0
  %v2051 = vlaneseq
  %v2052 = vshrl.u32 %v2051, 7
  %v2053 = vsub.s32 2, %v2052
  %v2054 = vrot.slane %v1670, %v2053
  %v2055 = vadd.f32 %v2035, %v2054
  %v2056 = vadd.f32 %v2036, %v2054
  %v2057 = vadd.f32 %v2037, %v2054
  %v2058 = vadd.f32 %v2038, %v2054
  %v2059 = vadd.f32 %v2039, %v2054
  %v2060 = vadd.f32 %v2040, %v2054
  %v2061 = vadd.f32 %v2041, %v2054
  %v2062 = vadd.f32 %v2042, %v2054
  %v2063 = vadd.f32 %v2043, %v2054
  %v2064 = vadd.f32 %v2044, %v2054
  %v2065 = vadd.f32 %v2045, %v2054
  %v2066 = vadd.f32 %v2046, %v2054
  %v2067 = vadd.f32 %v2047, %v2054
  %v2068 = vadd.f32 %v2048, %v2054
  %v2069 = vadd.f32 %v2049, %v2054
  %v2070 = vadd.f32 %v2050, %v2054
  %v2071 = vpack.c.bf16 %v2056, %v2055
  %v2072 = vpack.c.bf16 %v2058, %v2057
  %v2073 = vpack.c.bf16 %v2060, %v2059
  %v2074 = vpack.c.bf16 %v2062, %v2061
  %v2075 = vpack.c.bf16 %v2064, %v2063
  %v2076 = vpack.c.bf16 %v2066, %v2065
  %v2077 = vpack.c.bf16 %v2068, %v2067
  %v2078 = vpack.c.bf16 %v2070, %v2069
  %v2087 = vunpack.c.l.b16 %v2071
  %v2088 = vunpack.c.h.b16 %v2071
  %v2089 = vunpack.c.l.b16 %v2072
  %v2090 = vunpack.c.h.b16 %v2072
  %v2091 = vunpack.c.l.b16 %v2073
  %v2092 = vunpack.c.h.b16 %v2073
  %v2093 = vunpack.c.l.b16 %v2074
  %v2094 = vunpack.c.h.b16 %v2074
  %v2095 = vunpack.c.l.b16 %v2075
  %v2096 = vunpack.c.h.b16 %v2075
  %v2097 = vunpack.c.l.b16 %v2076
  %v2098 = vunpack.c.h.b16 %v2076
  %v2099 = vunpack.c.l.b16 %v2077
  %v2100 = vunpack.c.h.b16 %v2077
  %v2101 = vunpack.c.l.b16 %v2078
  %v2102 = vunpack.c.h.b16 %v2078
  %v2103 = vpack.c.b16 %v2087, %v2087
  %v2104 = vpack.c.b16 %v2088, %v2088
  %v2105 = vpack.c.b16 %v2089, %v2089
  %v2106 = vpack.c.b16 %v2090, %v2090
  %v2107 = vpack.c.b16 %v2091, %v2091
  %v2108 = vpack.c.b16 %v2092, %v2092
  %v2109 = vpack.c.b16 %v2093, %v2093
  %v2110 = vpack.c.b16 %v2094, %v2094
  %v2111 = vpack.c.b16 %v2095, %v2095
  %v2112 = vpack.c.b16 %v2096, %v2096
  %v2113 = vpack.c.b16 %v2097, %v2097
  %v2114 = vpack.c.b16 %v2098, %v2098
  %v2115 = vpack.c.b16 %v2099, %v2099
  %v2116 = vpack.c.b16 %v2100, %v2100
  %v2117 = vpack.c.b16 %v2101, %v2101
  %v2118 = vpack.c.b16 %v2102, %v2102
  %2135 = vst [vmem:[#allocation2] sm:$0xf] %v2103
  %2136 = vst [vmem:[#allocation2 + $0x4] sm:$0xf] %v2104
  %2137 = vst [vmem:[#allocation2 + $0x8] sm:$0xf] %v2105
  %2138 = vst [vmem:[#allocation2 + $0xc] sm:$0xf] %v2106
  %2139 = vst [vmem:[#allocation2 + $0x10] sm:$0xf] %v2107
  %2140 = vst [vmem:[#allocation2 + $0x14] sm:$0xf] %v2108
  %2141 = vst [vmem:[#allocation2 + $0x18] sm:$0xf] %v2109
  %2142 = vst [vmem:[#allocation2 + $0x1c] sm:$0xf] %v2110
  %2143 = vst [vmem:[#allocation2 + $0x20] sm:$0xf] %v2111
  %2144 = vst [vmem:[#allocation2 + $0x24] sm:$0xf] %v2112
  %2145 = vst [vmem:[#allocation2 + $0x28] sm:$0xf] %v2113
  %2146 = vst [vmem:[#allocation2 + $0x2c] sm:$0xf] %v2114
  %2147 = vst [vmem:[#allocation2 + $0x30] sm:$0xf] %v2115
  %2148 = vst [vmem:[#allocation2 + $0x34] sm:$0xf] %v2116
  %2149 = vst [vmem:[#allocation2 + $0x38] sm:$0xf] %v2117
  %2150 = vst [vmem:[#allocation2 + $0x3c] sm:$0xf] %v2118
  %v2151 = vld [vmem:[#allocation2] sm:$0xf]
  %v2152 = vld [vmem:[#allocation2 + $0x4] sm:$0xf]
  %v2153 = vld [vmem:[#allocation2 + $0x8] sm:$0xf]
  %v2154 = vld [vmem:[#allocation2 + $0xc] sm:$0xf]
  %v2155 = vld [vmem:[#allocation2 + $0x10] sm:$0xf]
  %v2156 = vld [vmem:[#allocation2 + $0x14] sm:$0xf]
  %v2157 = vld [vmem:[#allocation2 + $0x18] sm:$0xf]
  %v2158 = vld [vmem:[#allocation2 + $0x1c] sm:$0xf]
  %v2159 = vld [vmem:[#allocation2 + $0x20] sm:$0xf]
  %v2160 = vld [vmem:[#allocation2 + $0x24] sm:$0xf]
  %v2161 = vld [vmem:[#allocation2 + $0x28] sm:$0xf]
  %v2162 = vld [vmem:[#allocation2 + $0x2c] sm:$0xf]
  %v2163 = vld [vmem:[#allocation2 + $0x30] sm:$0xf]
  %v2164 = vld [vmem:[#allocation2 + $0x34] sm:$0xf]
  %v2165 = vld [vmem:[#allocation2 + $0x38] sm:$0xf]
  %v2166 = vld [vmem:[#allocation2 + $0x3c] sm:$0xf]
  %v2167 = vld [vmem:[%s0] sm:$0xf]
  %v2168 = vld [vmem:[%s0 + $0x4] sm:$0xf]
  %v2169 = vld [vmem:[%s0 + $0x8] sm:$0xf]
  %v2170 = vld [vmem:[%s0 + $0xc] sm:$0xf]
  %v2171 = vld [vmem:[%s0 + $0x10] sm:$0xf]
  %v2172 = vld [vmem:[%s0 + $0x14] sm:$0xf]
  %v2173 = vld [vmem:[%s0 + $0x18] sm:$0xf]
  %v2174 = vld [vmem:[%s0 + $0x1c] sm:$0xf]
  %v2175 = vld [vmem:[%s0 + $0x20] sm:$0xf]
  %v2176 = vld [vmem:[%s0 + $0x24] sm:$0xf]
  %v2177 = vld [vmem:[%s0 + $0x28] sm:$0xf]
  %v2178 = vld [vmem:[%s0 + $0x2c] sm:$0xf]
  %v2179 = vld [vmem:[%s0 + $0x30] sm:$0xf]
  %v2180 = vld [vmem:[%s0 + $0x34] sm:$0xf]
  %v2181 = vld [vmem:[%s0 + $0x38] sm:$0xf]
  %v2182 = vld [vmem:[%s0 + $0x3c] sm:$0xf]
  %v2199 = vunpack.c.l.b16 %v2167
  %v2200 = vunpack.c.l.b16 %v2168
  %v2201 = vunpack.c.l.b16 %v2169
  %v2202 = vunpack.c.l.b16 %v2170
  %v2203 = vunpack.c.l.b16 %v2171
  %v2204 = vunpack.c.l.b16 %v2172
  %v2205 = vunpack.c.l.b16 %v2173
  %v2206 = vunpack.c.l.b16 %v2174
  %v2207 = vunpack.c.l.b16 %v2175
  %v2208 = vunpack.c.l.b16 %v2176
  %v2209 = vunpack.c.l.b16 %v2177
  %v2210 = vunpack.c.l.b16 %v2178
  %v2211 = vunpack.c.l.b16 %v2179
  %v2212 = vunpack.c.l.b16 %v2180
  %v2213 = vunpack.c.l.b16 %v2181
  %v2214 = vunpack.c.l.b16 %v2182
  %v2215 = vpack.c.b16 %v2200, %v2199
  %v2216 = vpack.c.b16 %v2202, %v2201
  %v2217 = vpack.c.b16 %v2204, %v2203
  %v2218 = vpack.c.b16 %v2206, %v2205
  %v2219 = vpack.c.b16 %v2208, %v2207
  %v2220 = vpack.c.b16 %v2210, %v2209
  %v2221 = vpack.c.b16 %v2212, %v2211
  %v2222 = vpack.c.b16 %v2214, %v2213
  %v2247 = vunpack.c.l.b16 %v2151
  %v2248 = vunpack.c.l.b16 %v2152
  %v2249 = vunpack.c.l.b16 %v2153
  %v2250 = vunpack.c.l.b16 %v2154
  %v2251 = vunpack.c.l.b16 %v2155
  %v2252 = vunpack.c.l.b16 %v2156
  %v2253 = vunpack.c.l.b16 %v2157
  %v2254 = vunpack.c.l.b16 %v2158
  %v2255 = vunpack.c.l.b16 %v2159
  %v2256 = vunpack.c.l.b16 %v2160
  %v2257 = vunpack.c.l.b16 %v2161
  %v2258 = vunpack.c.l.b16 %v2162
  %v2259 = vunpack.c.l.b16 %v2163
  %v2260 = vunpack.c.l.b16 %v2164
  %v2261 = vunpack.c.l.b16 %v2165
  %v2262 = vunpack.c.l.b16 %v2166
  %v2263 = vpack.c.b16 %v2248, %v2247
  %v2264 = vpack.c.b16 %v2250, %v2249
  %v2265 = vpack.c.b16 %v2252, %v2251
  %v2266 = vpack.c.b16 %v2254, %v2253
  %v2267 = vpack.c.b16 %v2256, %v2255
  %v2268 = vpack.c.b16 %v2258, %v2257
  %v2269 = vpack.c.b16 %v2260, %v2259
  %v2270 = vpack.c.b16 %v2262, %v2261
  %2279 = vmatprep.subr.bf16.mxu0 0
  %2280 = vmatpush1.bf16.msra.mxu0 %v2270
  %2281 = vmatprep.subr.bf16.mxu0 0
  %2282 = vmatpush1.bf16.msra.mxu0 %v2269
  %2283 = vmatprep.subr.bf16.mxu0 0
  %2284 = vmatpush1.bf16.msra.mxu0 %v2268
  %2285 = vmatprep.subr.bf16.mxu0 0
  %2286 = vmatpush1.bf16.msra.mxu0 %v2267
  %2287 = vmatprep.subr.bf16.mxu0 0
  %2288 = vmatpush1.bf16.msra.mxu0 %v2266
  %2289 = vmatprep.subr.bf16.mxu0 0
  %2290 = vmatpush1.bf16.msra.mxu0 %v2265
  %2291 = vmatprep.subr.bf16.mxu0 0
  %2292 = vmatpush1.bf16.msra.mxu0 %v2264
  %2293 = vmatprep.subr.bf16.mxu0 0
  %2294 = vmatpush1.bf16.msra.mxu0 %v2263
  %2295 = vmatprep.subr.bf16.mxu0 0
  %2296 = vmatpush2.bf16.msra.mxu0 0
  %2297 = vmatprep.subr.bf16.mxu0 0
  %2298 = vmatpush2.bf16.msra.mxu0 0
  %2299 = vmatprep.subr.bf16.mxu0 0
  %2300 = vmatpush2.bf16.msra.mxu0 0
  %2301 = vmatprep.subr.bf16.mxu0 0
  %2302 = vmatpush2.bf16.msra.mxu0 0
  %2303 = vmatprep.subr.bf16.mxu0 0
  %2304 = vmatpush2.bf16.msra.mxu0 0
  %2305 = vmatprep.subr.bf16.mxu0 0
  %2306 = vmatpush2.bf16.msra.mxu0 0
  %2307 = vmatprep.subr.bf16.mxu0 0
  %2308 = vmatpush2.bf16.msra.mxu0 0
  %2309 = vmatprep.subr.bf16.mxu0 0
  %2310 = vmatpush2.bf16.msra.mxu0 0
  %2311 = vmatprep.mubr.bf16.mxu0 0
  %2312 = vmatmul.mubr.bf16.gmra.mxu0 %v2215
  %v2313 = vpop.f32.mrf.mxu0
  %v2314 = vadd.f32 0.0, %v2313
  %v2315 = vpop.f32.mrf.mxu0
  %v2316 = vpop.f32.mrf.mxu0
  %v2317 = vadd.f32 0.0, %v2316
  %v2318 = vpop.f32.mrf.mxu0
  %2319 = vmatprep.mubr.bf16.mxu0 0
  %2320 = vmatmul.mubr.bf16.gmra.mxu0 %v2216
  %v2321 = vpop.f32.mrf.mxu0
  %v2322 = vadd.f32 0.0, %v2321
  %v2323 = vpop.f32.mrf.mxu0
  %v2324 = vpop.f32.mrf.mxu0
  %v2325 = vadd.f32 0.0, %v2324
  %v2326 = vpop.f32.mrf.mxu0
  %2327 = vmatprep.mubr.bf16.mxu0 0
  %2328 = vmatmul.mubr.bf16.gmra.mxu0 %v2217
  %v2329 = vpop.f32.mrf.mxu0
  %v2330 = vadd.f32 0.0, %v2329
  %v2331 = vpop.f32.mrf.mxu0
  %v2332 = vpop.f32.mrf.mxu0
  %v2333 = vadd.f32 0.0, %v2332
  %v2334 = vpop.f32.mrf.mxu0
  %2335 = vmatprep.mubr.bf16.mxu0 0
  %2336 = vmatmul.mubr.bf16.gmra.mxu0 %v2218
  %v2337 = vpop.f32.mrf.mxu0
  %v2338 = vadd.f32 0.0, %v2337
  %v2339 = vpop.f32.mrf.mxu0
  %v2340 = vpop.f32.mrf.mxu0
  %v2341 = vadd.f32 0.0, %v2340
  %v2342 = vpop.f32.mrf.mxu0
  %2343 = vmatprep.mubr.bf16.mxu0 0
  %2344 = vmatmul.mubr.bf16.gmra.mxu0 %v2219
  %v2345 = vpop.f32.mrf.mxu0
  %v2346 = vadd.f32 0.0, %v2345
  %v2347 = vpop.f32.mrf.mxu0
  %v2348 = vpop.f32.mrf.mxu0
  %v2349 = vadd.f32 0.0, %v2348
  %v2350 = vpop.f32.mrf.mxu0
  %2351 = vmatprep.mubr.bf16.mxu0 0
  %2352 = vmatmul.mubr.bf16.gmra.mxu0 %v2220
  %v2353 = vpop.f32.mrf.mxu0
  %v2354 = vadd.f32 0.0, %v2353
  %v2355 = vpop.f32.mrf.mxu0
  %v2356 = vpop.f32.mrf.mxu0
  %v2357 = vadd.f32 0.0, %v2356
  %v2358 = vpop.f32.mrf.mxu0
  %2359 = vmatprep.mubr.bf16.mxu0 0
  %2360 = vmatmul.mubr.bf16.gmra.mxu0 %v2221
  %v2361 = vpop.f32.mrf.mxu0
  %v2362 = vadd.f32 0.0, %v2361
  %v2363 = vpop.f32.mrf.mxu0
  %v2364 = vpop.f32.mrf.mxu0
  %v2365 = vadd.f32 0.0, %v2364
  %v2366 = vpop.f32.mrf.mxu0
  %2367 = vmatprep.mubr.bf16.mxu0 0
  %2368 = vmatmul.mubr.bf16.gmra.mxu0 %v2222
  %v2369 = vpop.f32.mrf.mxu0
  %v2370 = vadd.f32 0.0, %v2369
  %v2371 = vpop.f32.mrf.mxu0
  %v2372 = vpop.f32.mrf.mxu0
  %v2373 = vadd.f32 0.0, %v2372
  %v2374 = vpop.f32.mrf.mxu0
  %2375 = vdwg.mxu0
  %s2376 = scalar_lea.vmem %s5, 24
  %v2377 = vld [vmem:[%s2376] sm:$0xff]
  %v2378 = vpack.c.bf16 %v2317, %v2314
  %v2379 = vpack.c.bf16 %v2325, %v2322
  %v2380 = vpack.c.bf16 %v2333, %v2330
  %v2381 = vpack.c.bf16 %v2341, %v2338
  %v2382 = vpack.c.bf16 %v2349, %v2346
  %v2383 = vpack.c.bf16 %v2357, %v2354
  %v2384 = vpack.c.bf16 %v2365, %v2362
  %v2385 = vpack.c.bf16 %v2373, %v2370
  %s2386 = scalar_lea.vmem %s3, 192
  %v2387 = vld [vmem:[%s2386] sm:$0xf]
  %v2388 = vld [vmem:[%s2386 + $0x4] sm:$0xf]
  %v2389 = vld [vmem:[%s2386 + $0x8] sm:$0xf]
  %v2390 = vld [vmem:[%s2386 + $0xc] sm:$0xf]
  %v2391 = vld [vmem:[%s2386 + $0x10] sm:$0xf]
  %v2392 = vld [vmem:[%s2386 + $0x14] sm:$0xf]
  %v2393 = vld [vmem:[%s2386 + $0x18] sm:$0xf]
  %v2394 = vld [vmem:[%s2386 + $0x1c] sm:$0xf]
  %v2395 = vld [vmem:[%s2386 + $0x20] sm:$0xf]
  %v2396 = vld [vmem:[%s2386 + $0x24] sm:$0xf]
  %v2397 = vld [vmem:[%s2386 + $0x28] sm:$0xf]
  %v2398 = vld [vmem:[%s2386 + $0x2c] sm:$0xf]
  %v2399 = vld [vmem:[%s2386 + $0x30] sm:$0xf]
  %v2400 = vld [vmem:[%s2386 + $0x34] sm:$0xf]
  %v2401 = vld [vmem:[%s2386 + $0x38] sm:$0xf]
  %v2402 = vld [vmem:[%s2386 + $0x3c] sm:$0xf]
  %v2403 = vlaneseq
  %v2404 = vshrl.u32 %v2403, 7
  %v2405 = vsub.s32 0, %v2404
  %v2406 = vrot.slane %v2377, %v2405
  %v2423 = vunpack.c.l.b16 %v2387
  %v2424 = vunpack.c.l.b16 %v2388
  %v2425 = vunpack.c.l.b16 %v2389
  %v2426 = vunpack.c.l.b16 %v2390
  %v2427 = vunpack.c.l.b16 %v2391
  %v2428 = vunpack.c.l.b16 %v2392
  %v2429 = vunpack.c.l.b16 %v2393
  %v2430 = vunpack.c.l.b16 %v2394
  %v2431 = vunpack.c.l.b16 %v2395
  %v2432 = vunpack.c.l.b16 %v2396
  %v2433 = vunpack.c.l.b16 %v2397
  %v2434 = vunpack.c.l.b16 %v2398
  %v2435 = vunpack.c.l.b16 %v2399
  %v2436 = vunpack.c.l.b16 %v2400
  %v2437 = vunpack.c.l.b16 %v2401
  %v2438 = vunpack.c.l.b16 %v2402
  %v2439 = vpack.c.b16 %v2424, %v2423
  %v2440 = vpack.c.b16 %v2426, %v2425
  %v2441 = vpack.c.b16 %v2428, %v2427
  %v2442 = vpack.c.b16 %v2430, %v2429
  %v2443 = vpack.c.b16 %v2432, %v2431
  %v2444 = vpack.c.b16 %v2434, %v2433
  %v2445 = vpack.c.b16 %v2436, %v2435
  %v2446 = vpack.c.b16 %v2438, %v2437
  %2455 = vmatprep.subr.bf16.mxu0 0
  %2456 = vmatpush1.bf16.msra.mxu0 %v2446
  %2457 = vmatprep.subr.bf16.mxu0 0
  %2458 = vmatpush1.bf16.msra.mxu0 %v2445
  %2459 = vmatprep.subr.bf16.mxu0 0
  %2460 = vmatpush1.bf16.msra.mxu0 %v2444
  %2461 = vmatprep.subr.bf16.mxu0 0
  %2462 = vmatpush1.bf16.msra.mxu0 %v2443
  %2463 = vmatprep.subr.bf16.mxu0 0
  %2464 = vmatpush1.bf16.msra.mxu0 %v2442
  %2465 = vmatprep.subr.bf16.mxu0 0
  %2466 = vmatpush1.bf16.msra.mxu0 %v2441
  %2467 = vmatprep.subr.bf16.mxu0 0
  %2468 = vmatpush1.bf16.msra.mxu0 %v2440
  %2469 = vmatprep.subr.bf16.mxu0 0
  %2470 = vmatpush1.bf16.msra.mxu0 %v2439
  %2471 = vmatprep.subr.bf16.mxu0 0
  %2472 = vmatpush2.bf16.msra.mxu0 0
  %2473 = vmatprep.subr.bf16.mxu0 0
  %2474 = vmatpush2.bf16.msra.mxu0 0
  %2475 = vmatprep.subr.bf16.mxu0 0
  %2476 = vmatpush2.bf16.msra.mxu0 0
  %2477 = vmatprep.subr.bf16.mxu0 0
  %2478 = vmatpush2.bf16.msra.mxu0 0
  %2479 = vmatprep.subr.bf16.mxu0 0
  %2480 = vmatpush2.bf16.msra.mxu0 0
  %2481 = vmatprep.subr.bf16.mxu0 0
  %2482 = vmatpush2.bf16.msra.mxu0 0
  %2483 = vmatprep.subr.bf16.mxu0 0
  %2484 = vmatpush2.bf16.msra.mxu0 0
  %2485 = vmatprep.subr.bf16.mxu0 0
  %2486 = vmatpush2.bf16.msra.mxu0 0
  %2487 = vmatprep.mubr.bf16.mxu0 0
  %2488 = vmatmul.mubr.bf16.gmra.mxu0 %v2378
  %v2489 = vpop.f32.mrf.mxu0
  %v2490 = vadd.f32 %v2406, %v2489
  %v2491 = vpop.f32.mrf.mxu0
  %v2492 = vpop.f32.mrf.mxu0
  %v2493 = vadd.f32 %v2406, %v2492
  %v2494 = vpop.f32.mrf.mxu0
  %2495 = vmatprep.mubr.bf16.mxu0 0
  %2496 = vmatmul.mubr.bf16.gmra.mxu0 %v2379
  %v2497 = vpop.f32.mrf.mxu0
  %v2498 = vadd.f32 %v2406, %v2497
  %v2499 = vpop.f32.mrf.mxu0
  %v2500 = vpop.f32.mrf.mxu0
  %v2501 = vadd.f32 %v2406, %v2500
  %v2502 = vpop.f32.mrf.mxu0
  %2503 = vmatprep.mubr.bf16.mxu0 0
  %2504 = vmatmul.mubr.bf16.gmra.mxu0 %v2380
  %v2505 = vpop.f32.mrf.mxu0
  %v2506 = vadd.f32 %v2406, %v2505
  %v2507 = vpop.f32.mrf.mxu0
  %v2508 = vpop.f32.mrf.mxu0
  %v2509 = vadd.f32 %v2406, %v2508
  %v2510 = vpop.f32.mrf.mxu0
  %2511 = vmatprep.mubr.bf16.mxu0 0
  %2512 = vmatmul.mubr.bf16.gmra.mxu0 %v2381
  %v2513 = vpop.f32.mrf.mxu0
  %v2514 = vadd.f32 %v2406, %v2513
  %v2515 = vpop.f32.mrf.mxu0
  %v2516 = vpop.f32.mrf.mxu0
  %v2517 = vadd.f32 %v2406, %v2516
  %v2518 = vpop.f32.mrf.mxu0
  %2519 = vmatprep.mubr.bf16.mxu0 0
  %2520 = vmatmul.mubr.bf16.gmra.mxu0 %v2382
  %v2521 = vpop.f32.mrf.mxu0
  %v2522 = vadd.f32 %v2406, %v2521
  %v2523 = vpop.f32.mrf.mxu0
  %v2524 = vpop.f32.mrf.mxu0
  %v2525 = vadd.f32 %v2406, %v2524
  %v2526 = vpop.f32.mrf.mxu0
  %2527 = vmatprep.mubr.bf16.mxu0 0
  %2528 = vmatmul.mubr.bf16.gmra.mxu0 %v2383
  %v2529 = vpop.f32.mrf.mxu0
  %v2530 = vadd.f32 %v2406, %v2529
  %v2531 = vpop.f32.mrf.mxu0
  %v2532 = vpop.f32.mrf.mxu0
  %v2533 = vadd.f32 %v2406, %v2532
  %v2534 = vpop.f32.mrf.mxu0
  %2535 = vmatprep.mubr.bf16.mxu0 0
  %2536 = vmatmul.mubr.bf16.gmra.mxu0 %v2384
  %v2537 = vpop.f32.mrf.mxu0
  %v2538 = vadd.f32 %v2406, %v2537
  %v2539 = vpop.f32.mrf.mxu0
  %v2540 = vpop.f32.mrf.mxu0
  %v2541 = vadd.f32 %v2406, %v2540
  %v2542 = vpop.f32.mrf.mxu0
  %2543 = vmatprep.mubr.bf16.mxu0 0
  %2544 = vmatmul.mubr.bf16.gmra.mxu0 %v2385
  %v2545 = vpop.f32.mrf.mxu0
  %v2546 = vadd.f32 %v2406, %v2545
  %v2547 = vpop.f32.mrf.mxu0
  %v2548 = vpop.f32.mrf.mxu0
  %v2549 = vadd.f32 %v2406, %v2548
  %v2550 = vpop.f32.mrf.mxu0
  %2551 = vdwg.mxu0
  %v2552 = vmax.f32 %v2490, 0.0
  %v2553 = vmax.f32 %v2493, 0.0
  %v2554 = vmax.f32 %v2498, 0.0
  %v2555 = vmax.f32 %v2501, 0.0
  %v2556 = vmax.f32 %v2506, 0.0
  %v2557 = vmax.f32 %v2509, 0.0
  %v2558 = vmax.f32 %v2514, 0.0
  %v2559 = vmax.f32 %v2517, 0.0
  %v2560 = vmax.f32 %v2522, 0.0
  %v2561 = vmax.f32 %v2525, 0.0
  %v2562 = vmax.f32 %v2530, 0.0
  %v2563 = vmax.f32 %v2533, 0.0
  %v2564 = vmax.f32 %v2538, 0.0
  %v2565 = vmax.f32 %v2541, 0.0
  %v2566 = vmax.f32 %v2546, 0.0
  %v2567 = vmax.f32 %v2549, 0.0
  %v2568 = vpack.c.bf16 %v2553, %v2552
  %v2569 = vpack.c.bf16 %v2555, %v2554
  %v2570 = vpack.c.bf16 %v2557, %v2556
  %v2571 = vpack.c.bf16 %v2559, %v2558
  %v2572 = vpack.c.bf16 %v2561, %v2560
  %v2573 = vpack.c.bf16 %v2563, %v2562
  %v2574 = vpack.c.bf16 %v2565, %v2564
  %v2575 = vpack.c.bf16 %v2567, %v2566
  %s2576 = scalar_lea.vmem %s4, 192
  %v2577 = vld [vmem:[%s2576] sm:$0xf]
  %v2578 = vld [vmem:[%s2576 + $0x4] sm:$0xf]
  %v2579 = vld [vmem:[%s2576 + $0x8] sm:$0xf]
  %v2580 = vld [vmem:[%s2576 + $0xc] sm:$0xf]
  %v2581 = vld [vmem:[%s2576 + $0x10] sm:$0xf]
  %v2582 = vld [vmem:[%s2576 + $0x14] sm:$0xf]
  %v2583 = vld [vmem:[%s2576 + $0x18] sm:$0xf]
  %v2584 = vld [vmem:[%s2576 + $0x1c] sm:$0xf]
  %v2585 = vld [vmem:[%s2576 + $0x20] sm:$0xf]
  %v2586 = vld [vmem:[%s2576 + $0x24] sm:$0xf]
  %v2587 = vld [vmem:[%s2576 + $0x28] sm:$0xf]
  %v2588 = vld [vmem:[%s2576 + $0x2c] sm:$0xf]
  %v2589 = vld [vmem:[%s2576 + $0x30] sm:$0xf]
  %v2590 = vld [vmem:[%s2576 + $0x34] sm:$0xf]
  %v2591 = vld [vmem:[%s2576 + $0x38] sm:$0xf]
  %v2592 = vld [vmem:[%s2576 + $0x3c] sm:$0xf]
  %v2593 = vlaneseq
  %v2594 = vshrl.u32 %v2593, 7
  %v2595 = vsub.s32 1, %v2594
  %v2596 = vrot.slane %v2377, %v2595
  %v2613 = vunpack.c.l.b16 %v2577
  %v2614 = vunpack.c.l.b16 %v2578
  %v2615 = vunpack.c.l.b16 %v2579
  %v2616 = vunpack.c.l.b16 %v2580
  %v2617 = vunpack.c.l.b16 %v2581
  %v2618 = vunpack.c.l.b16 %v2582
  %v2619 = vunpack.c.l.b16 %v2583
  %v2620 = vunpack.c.l.b16 %v2584
  %v2621 = vunpack.c.l.b16 %v2585
  %v2622 = vunpack.c.l.b16 %v2586
  %v2623 = vunpack.c.l.b16 %v2587
  %v2624 = vunpack.c.l.b16 %v2588
  %v2625 = vunpack.c.l.b16 %v2589
  %v2626 = vunpack.c.l.b16 %v2590
  %v2627 = vunpack.c.l.b16 %v2591
  %v2628 = vunpack.c.l.b16 %v2592
  %v2629 = vpack.c.b16 %v2614, %v2613
  %v2630 = vpack.c.b16 %v2616, %v2615
  %v2631 = vpack.c.b16 %v2618, %v2617
  %v2632 = vpack.c.b16 %v2620, %v2619
  %v2633 = vpack.c.b16 %v2622, %v2621
  %v2634 = vpack.c.b16 %v2624, %v2623
  %v2635 = vpack.c.b16 %v2626, %v2625
  %v2636 = vpack.c.b16 %v2628, %v2627
  %2645 = vmatprep.subr.bf16.mxu0 0
  %2646 = vmatpush1.bf16.msra.mxu0 %v2636
  %2647 = vmatprep.subr.bf16.mxu0 0
  %2648 = vmatpush1.bf16.msra.mxu0 %v2635
  %2649 = vmatprep.subr.bf16.mxu0 0
  %2650 = vmatpush1.bf16.msra.mxu0 %v2634
  %2651 = vmatprep.subr.bf16.mxu0 0
  %2652 = vmatpush1.bf16.msra.mxu0 %v2633
  %2653 = vmatprep.subr.bf16.mxu0 0
  %2654 = vmatpush1.bf16.msra.mxu0 %v2632
  %2655 = vmatprep.subr.bf16.mxu0 0
  %2656 = vmatpush1.bf16.msra.mxu0 %v2631
  %2657 = vmatprep.subr.bf16.mxu0 0
  %2658 = vmatpush1.bf16.msra.mxu0 %v2630
  %2659 = vmatprep.subr.bf16.mxu0 0
  %2660 = vmatpush1.bf16.msra.mxu0 %v2629
  %2661 = vmatprep.subr.bf16.mxu0 0
  %2662 = vmatpush2.bf16.msra.mxu0 0
  %2663 = vmatprep.subr.bf16.mxu0 0
  %2664 = vmatpush2.bf16.msra.mxu0 0
  %2665 = vmatprep.subr.bf16.mxu0 0
  %2666 = vmatpush2.bf16.msra.mxu0 0
  %2667 = vmatprep.subr.bf16.mxu0 0
  %2668 = vmatpush2.bf16.msra.mxu0 0
  %2669 = vmatprep.subr.bf16.mxu0 0
  %2670 = vmatpush2.bf16.msra.mxu0 0
  %2671 = vmatprep.subr.bf16.mxu0 0
  %2672 = vmatpush2.bf16.msra.mxu0 0
  %2673 = vmatprep.subr.bf16.mxu0 0
  %2674 = vmatpush2.bf16.msra.mxu0 0
  %2675 = vmatprep.subr.bf16.mxu0 0
  %2676 = vmatpush2.bf16.msra.mxu0 0
  %2677 = vmatprep.mubr.bf16.mxu0 0
  %2678 = vmatmul.mubr.bf16.gmra.mxu0 %v2568
  %v2679 = vpop.f32.mrf.mxu0
  %v2680 = vadd.f32 %v2596, %v2679
  %v2681 = vpop.f32.mrf.mxu0
  %v2682 = vpop.f32.mrf.mxu0
  %v2683 = vadd.f32 %v2596, %v2682
  %v2684 = vpop.f32.mrf.mxu0
  %2685 = vmatprep.mubr.bf16.mxu0 0
  %2686 = vmatmul.mubr.bf16.gmra.mxu0 %v2569
  %v2687 = vpop.f32.mrf.mxu0
  %v2688 = vadd.f32 %v2596, %v2687
  %v2689 = vpop.f32.mrf.mxu0
  %v2690 = vpop.f32.mrf.mxu0
  %v2691 = vadd.f32 %v2596, %v2690
  %v2692 = vpop.f32.mrf.mxu0
  %2693 = vmatprep.mubr.bf16.mxu0 0
  %2694 = vmatmul.mubr.bf16.gmra.mxu0 %v2570
  %v2695 = vpop.f32.mrf.mxu0
  %v2696 = vadd.f32 %v2596, %v2695
  %v2697 = vpop.f32.mrf.mxu0
  %v2698 = vpop.f32.mrf.mxu0
  %v2699 = vadd.f32 %v2596, %v2698
  %v2700 = vpop.f32.mrf.mxu0
  %2701 = vmatprep.mubr.bf16.mxu0 0
  %2702 = vmatmul.mubr.bf16.gmra.mxu0 %v2571
  %v2703 = vpop.f32.mrf.mxu0
  %v2704 = vadd.f32 %v2596, %v2703
  %v2705 = vpop.f32.mrf.mxu0
  %v2706 = vpop.f32.mrf.mxu0
  %v2707 = vadd.f32 %v2596, %v2706
  %v2708 = vpop.f32.mrf.mxu0
  %2709 = vmatprep.mubr.bf16.mxu0 0
  %2710 = vmatmul.mubr.bf16.gmra.mxu0 %v2572
  %v2711 = vpop.f32.mrf.mxu0
  %v2712 = vadd.f32 %v2596, %v2711
  %v2713 = vpop.f32.mrf.mxu0
  %v2714 = vpop.f32.mrf.mxu0
  %v2715 = vadd.f32 %v2596, %v2714
  %v2716 = vpop.f32.mrf.mxu0
  %2717 = vmatprep.mubr.bf16.mxu0 0
  %2718 = vmatmul.mubr.bf16.gmra.mxu0 %v2573
  %v2719 = vpop.f32.mrf.mxu0
  %v2720 = vadd.f32 %v2596, %v2719
  %v2721 = vpop.f32.mrf.mxu0
  %v2722 = vpop.f32.mrf.mxu0
  %v2723 = vadd.f32 %v2596, %v2722
  %v2724 = vpop.f32.mrf.mxu0
  %2725 = vmatprep.mubr.bf16.mxu0 0
  %2726 = vmatmul.mubr.bf16.gmra.mxu0 %v2574
  %v2727 = vpop.f32.mrf.mxu0
  %v2728 = vadd.f32 %v2596, %v2727
  %v2729 = vpop.f32.mrf.mxu0
  %v2730 = vpop.f32.mrf.mxu0
  %v2731 = vadd.f32 %v2596, %v2730
  %v2732 = vpop.f32.mrf.mxu0
  %2733 = vmatprep.mubr.bf16.mxu0 0
  %2734 = vmatmul.mubr.bf16.gmra.mxu0 %v2575
  %v2735 = vpop.f32.mrf.mxu0
  %v2736 = vadd.f32 %v2596, %v2735
  %v2737 = vpop.f32.mrf.mxu0
  %v2738 = vpop.f32.mrf.mxu0
  %v2739 = vadd.f32 %v2596, %v2738
  %v2740 = vpop.f32.mrf.mxu0
  %2741 = vdwg.mxu0
  %v2742 = vmax.f32 %v2680, 0.0
  %v2743 = vmax.f32 %v2683, 0.0
  %v2744 = vmax.f32 %v2688, 0.0
  %v2745 = vmax.f32 %v2691, 0.0
  %v2746 = vmax.f32 %v2696, 0.0
  %v2747 = vmax.f32 %v2699, 0.0
  %v2748 = vmax.f32 %v2704, 0.0
  %v2749 = vmax.f32 %v2707, 0.0
  %v2750 = vmax.f32 %v2712, 0.0
  %v2751 = vmax.f32 %v2715, 0.0
  %v2752 = vmax.f32 %v2720, 0.0
  %v2753 = vmax.f32 %v2723, 0.0
  %v2754 = vmax.f32 %v2728, 0.0
  %v2755 = vmax.f32 %v2731, 0.0
  %v2756 = vmax.f32 %v2736, 0.0
  %v2757 = vmax.f32 %v2739, 0.0
  %v2758 = vlaneseq
  %v2759 = vshrl.u32 %v2758, 7
  %v2760 = vsub.s32 2, %v2759
  %v2761 = vrot.slane %v2377, %v2760
  %v2762 = vadd.f32 %v2742, %v2761
  %v2763 = vadd.f32 %v2743, %v2761
  %v2764 = vadd.f32 %v2744, %v2761
  %v2765 = vadd.f32 %v2745, %v2761
  %v2766 = vadd.f32 %v2746, %v2761
  %v2767 = vadd.f32 %v2747, %v2761
  %v2768 = vadd.f32 %v2748, %v2761
  %v2769 = vadd.f32 %v2749, %v2761
  %v2770 = vadd.f32 %v2750, %v2761
  %v2771 = vadd.f32 %v2751, %v2761
  %v2772 = vadd.f32 %v2752, %v2761
  %v2773 = vadd.f32 %v2753, %v2761
  %v2774 = vadd.f32 %v2754, %v2761
  %v2775 = vadd.f32 %v2755, %v2761
  %v2776 = vadd.f32 %v2756, %v2761
  %v2777 = vadd.f32 %v2757, %v2761
  %v2778 = vpack.c.bf16 %v2763, %v2762
  %v2779 = vpack.c.bf16 %v2765, %v2764
  %v2780 = vpack.c.bf16 %v2767, %v2766
  %v2781 = vpack.c.bf16 %v2769, %v2768
  %v2782 = vpack.c.bf16 %v2771, %v2770
  %v2783 = vpack.c.bf16 %v2773, %v2772
  %v2784 = vpack.c.bf16 %v2775, %v2774
  %v2785 = vpack.c.bf16 %v2777, %v2776
  %v2794 = vunpack.c.l.b16 %v2778
  %v2795 = vunpack.c.h.b16 %v2778
  %v2796 = vunpack.c.l.b16 %v2779
  %v2797 = vunpack.c.h.b16 %v2779
  %v2798 = vunpack.c.l.b16 %v2780
  %v2799 = vunpack.c.h.b16 %v2780
  %v2800 = vunpack.c.l.b16 %v2781
  %v2801 = vunpack.c.h.b16 %v2781
  %v2802 = vunpack.c.l.b16 %v2782
  %v2803 = vunpack.c.h.b16 %v2782
  %v2804 = vunpack.c.l.b16 %v2783
  %v2805 = vunpack.c.h.b16 %v2783
  %v2806 = vunpack.c.l.b16 %v2784
  %v2807 = vunpack.c.h.b16 %v2784
  %v2808 = vunpack.c.l.b16 %v2785
  %v2809 = vunpack.c.h.b16 %v2785
  %v2810 = vpack.c.b16 %v2794, %v2794
  %v2811 = vpack.c.b16 %v2795, %v2795
  %v2812 = vpack.c.b16 %v2796, %v2796
  %v2813 = vpack.c.b16 %v2797, %v2797
  %v2814 = vpack.c.b16 %v2798, %v2798
  %v2815 = vpack.c.b16 %v2799, %v2799
  %v2816 = vpack.c.b16 %v2800, %v2800
  %v2817 = vpack.c.b16 %v2801, %v2801
  %v2818 = vpack.c.b16 %v2802, %v2802
  %v2819 = vpack.c.b16 %v2803, %v2803
  %v2820 = vpack.c.b16 %v2804, %v2804
  %v2821 = vpack.c.b16 %v2805, %v2805
  %v2822 = vpack.c.b16 %v2806, %v2806
  %v2823 = vpack.c.b16 %v2807, %v2807
  %v2824 = vpack.c.b16 %v2808, %v2808
  %v2825 = vpack.c.b16 %v2809, %v2809
  %2842 = vst [vmem:[#allocation2] sm:$0xf] %v2810
  %2843 = vst [vmem:[#allocation2 + $0x4] sm:$0xf] %v2811
  %2844 = vst [vmem:[#allocation2 + $0x8] sm:$0xf] %v2812
  %2845 = vst [vmem:[#allocation2 + $0xc] sm:$0xf] %v2813
  %2846 = vst [vmem:[#allocation2 + $0x10] sm:$0xf] %v2814
  %2847 = vst [vmem:[#allocation2 + $0x14] sm:$0xf] %v2815
  %2848 = vst [vmem:[#allocation2 + $0x18] sm:$0xf] %v2816
  %2849 = vst [vmem:[#allocation2 + $0x1c] sm:$0xf] %v2817
  %2850 = vst [vmem:[#allocation2 + $0x20] sm:$0xf] %v2818
  %2851 = vst [vmem:[#allocation2 + $0x24] sm:$0xf] %v2819
  %2852 = vst [vmem:[#allocation2 + $0x28] sm:$0xf] %v2820
  %2853 = vst [vmem:[#allocation2 + $0x2c] sm:$0xf] %v2821
  %2854 = vst [vmem:[#allocation2 + $0x30] sm:$0xf] %v2822
  %2855 = vst [vmem:[#allocation2 + $0x34] sm:$0xf] %v2823
  %2856 = vst [vmem:[#allocation2 + $0x38] sm:$0xf] %v2824
  %2857 = vst [vmem:[#allocation2 + $0x3c] sm:$0xf] %v2825
  %v2858 = vld [vmem:[#allocation2] sm:$0xf]
  %v2859 = vld [vmem:[#allocation2 + $0x4] sm:$0xf]
  %v2860 = vld [vmem:[#allocation2 + $0x8] sm:$0xf]
  %v2861 = vld [vmem:[#allocation2 + $0xc] sm:$0xf]
  %v2862 = vld [vmem:[#allocation2 + $0x10] sm:$0xf]
  %v2863 = vld [vmem:[#allocation2 + $0x14] sm:$0xf]
  %v2864 = vld [vmem:[#allocation2 + $0x18] sm:$0xf]
  %v2865 = vld [vmem:[#allocation2 + $0x1c] sm:$0xf]
  %v2866 = vld [vmem:[#allocation2 + $0x20] sm:$0xf]
  %v2867 = vld [vmem:[#allocation2 + $0x24] sm:$0xf]
  %v2868 = vld [vmem:[#allocation2 + $0x28] sm:$0xf]
  %v2869 = vld [vmem:[#allocation2 + $0x2c] sm:$0xf]
  %v2870 = vld [vmem:[#allocation2 + $0x30] sm:$0xf]
  %v2871 = vld [vmem:[#allocation2 + $0x34] sm:$0xf]
  %v2872 = vld [vmem:[#allocation2 + $0x38] sm:$0xf]
  %v2873 = vld [vmem:[#allocation2 + $0x3c] sm:$0xf]
  %v2874 = vld [vmem:[%s0] sm:$0xf]
  %v2875 = vld [vmem:[%s0 + $0x4] sm:$0xf]
  %v2876 = vld [vmem:[%s0 + $0x8] sm:$0xf]
  %v2877 = vld [vmem:[%s0 + $0xc] sm:$0xf]
  %v2878 = vld [vmem:[%s0 + $0x10] sm:$0xf]
  %v2879 = vld [vmem:[%s0 + $0x14] sm:$0xf]
  %v2880 = vld [vmem:[%s0 + $0x18] sm:$0xf]
  %v2881 = vld [vmem:[%s0 + $0x1c] sm:$0xf]
  %v2882 = vld [vmem:[%s0 + $0x20] sm:$0xf]
  %v2883 = vld [vmem:[%s0 + $0x24] sm:$0xf]
  %v2884 = vld [vmem:[%s0 + $0x28] sm:$0xf]
  %v2885 = vld [vmem:[%s0 + $0x2c] sm:$0xf]
  %v2886 = vld [vmem:[%s0 + $0x30] sm:$0xf]
  %v2887 = vld [vmem:[%s0 + $0x34] sm:$0xf]
  %v2888 = vld [vmem:[%s0 + $0x38] sm:$0xf]
  %v2889 = vld [vmem:[%s0 + $0x3c] sm:$0xf]
  %v2906 = vunpack.c.l.b16 %v2874
  %v2907 = vunpack.c.l.b16 %v2875
  %v2908 = vunpack.c.l.b16 %v2876
  %v2909 = vunpack.c.l.b16 %v2877
  %v2910 = vunpack.c.l.b16 %v2878
  %v2911 = vunpack.c.l.b16 %v2879
  %v2912 = vunpack.c.l.b16 %v2880
  %v2913 = vunpack.c.l.b16 %v2881
  %v2914 = vunpack.c.l.b16 %v2882
  %v2915 = vunpack.c.l.b16 %v2883
  %v2916 = vunpack.c.l.b16 %v2884
  %v2917 = vunpack.c.l.b16 %v2885
  %v2918 = vunpack.c.l.b16 %v2886
  %v2919 = vunpack.c.l.b16 %v2887
  %v2920 = vunpack.c.l.b16 %v2888
  %v2921 = vunpack.c.l.b16 %v2889
  %v2922 = vpack.c.b16 %v2907, %v2906
  %v2923 = vpack.c.b16 %v2909, %v2908
  %v2924 = vpack.c.b16 %v2911, %v2910
  %v2925 = vpack.c.b16 %v2913, %v2912
  %v2926 = vpack.c.b16 %v2915, %v2914
  %v2927 = vpack.c.b16 %v2917, %v2916
  %v2928 = vpack.c.b16 %v2919, %v2918
  %v2929 = vpack.c.b16 %v2921, %v2920
  %v2954 = vunpack.c.l.b16 %v2858
  %v2955 = vunpack.c.l.b16 %v2859
  %v2956 = vunpack.c.l.b16 %v2860
  %v2957 = vunpack.c.l.b16 %v2861
  %v2958 = vunpack.c.l.b16 %v2862
  %v2959 = vunpack.c.l.b16 %v2863
  %v2960 = vunpack.c.l.b16 %v2864
  %v2961 = vunpack.c.l.b16 %v2865
  %v2962 = vunpack.c.l.b16 %v2866
  %v2963 = vunpack.c.l.b16 %v2867
  %v2964 = vunpack.c.l.b16 %v2868
  %v2965 = vunpack.c.l.b16 %v2869
  %v2966 = vunpack.c.l.b16 %v2870
  %v2967 = vunpack.c.l.b16 %v2871
  %v2968 = vunpack.c.l.b16 %v2872
  %v2969 = vunpack.c.l.b16 %v2873
  %v2970 = vpack.c.b16 %v2955, %v2954
  %v2971 = vpack.c.b16 %v2957, %v2956
  %v2972 = vpack.c.b16 %v2959, %v2958
  %v2973 = vpack.c.b16 %v2961, %v2960
  %v2974 = vpack.c.b16 %v2963, %v2962
  %v2975 = vpack.c.b16 %v2965, %v2964
  %v2976 = vpack.c.b16 %v2967, %v2966
  %v2977 = vpack.c.b16 %v2969, %v2968
  %2986 = vmatprep.subr.bf16.mxu0 0
  %2987 = vmatpush1.bf16.msra.mxu0 %v2977
  %2988 = vmatprep.subr.bf16.mxu0 0
  %2989 = vmatpush1.bf16.msra.mxu0 %v2976
  %2990 = vmatprep.subr.bf16.mxu0 0
  %2991 = vmatpush1.bf16.msra.mxu0 %v2975
  %2992 = vmatprep.subr.bf16.mxu0 0
  %2993 = vmatpush1.bf16.msra.mxu0 %v2974
  %2994 = vmatprep.subr.bf16.mxu0 0
  %2995 = vmatpush1.bf16.msra.mxu0 %v2973
  %2996 = vmatprep.subr.bf16.mxu0 0
  %2997 = vmatpush1.bf16.msra.mxu0 %v2972
  %2998 = vmatprep.subr.bf16.mxu0 0
  %2999 = vmatpush1.bf16.msra.mxu0 %v2971
  %3000 = vmatprep.subr.bf16.mxu0 0
  %3001 = vmatpush1.bf16.msra.mxu0 %v2970
  %3002 = vmatprep.subr.bf16.mxu0 0
  %3003 = vmatpush2.bf16.msra.mxu0 0
  %3004 = vmatprep.subr.bf16.mxu0 0
  %3005 = vmatpush2.bf16.msra.mxu0 0
  %3006 = vmatprep.subr.bf16.mxu0 0
  %3007 = vmatpush2.bf16.msra.mxu0 0
  %3008 = vmatprep.subr.bf16.mxu0 0
  %3009 = vmatpush2.bf16.msra.mxu0 0
  %3010 = vmatprep.subr.bf16.mxu0 0
  %3011 = vmatpush2.bf16.msra.mxu0 0
  %3012 = vmatprep.subr.bf16.mxu0 0
  %3013 = vmatpush2.bf16.msra.mxu0 0
  %3014 = vmatprep.subr.bf16.mxu0 0
  %3015 = vmatpush2.bf16.msra.mxu0 0
  %3016 = vmatprep.subr.bf16.mxu0 0
  %3017 = vmatpush2.bf16.msra.mxu0 0
  %3018 = vmatprep.mubr.bf16.mxu0 0
  %3019 = vmatmul.mubr.bf16.gmra.mxu0 %v2922
  %v3020 = vpop.f32.mrf.mxu0
  %v3021 = vadd.f32 0.0, %v3020
  %v3022 = vpop.f32.mrf.mxu0
  %v3023 = vpop.f32.mrf.mxu0
  %v3024 = vadd.f32 0.0, %v3023
  %v3025 = vpop.f32.mrf.mxu0
  %3026 = vmatprep.mubr.bf16.mxu0 0
  %3027 = vmatmul.mubr.bf16.gmra.mxu0 %v2923
  %v3028 = vpop.f32.mrf.mxu0
  %v3029 = vadd.f32 0.0, %v3028
  %v3030 = vpop.f32.mrf.mxu0
  %v3031 = vpop.f32.mrf.mxu0
  %v3032 = vadd.f32 0.0, %v3031
  %v3033 = vpop.f32.mrf.mxu0
  %3034 = vmatprep.mubr.bf16.mxu0 0
  %3035 = vmatmul.mubr.bf16.gmra.mxu0 %v2924
  %v3036 = vpop.f32.mrf.mxu0
  %v3037 = vadd.f32 0.0, %v3036
  %v3038 = vpop.f32.mrf.mxu0
  %v3039 = vpop.f32.mrf.mxu0
  %v3040 = vadd.f32 0.0, %v3039
  %v3041 = vpop.f32.mrf.mxu0
  %3042 = vmatprep.mubr.bf16.mxu0 0
  %3043 = vmatmul.mubr.bf16.gmra.mxu0 %v2925
  %v3044 = vpop.f32.mrf.mxu0
  %v3045 = vadd.f32 0.0, %v3044
  %v3046 = vpop.f32.mrf.mxu0
  %v3047 = vpop.f32.mrf.mxu0
  %v3048 = vadd.f32 0.0, %v3047
  %v3049 = vpop.f32.mrf.mxu0
  %3050 = vmatprep.mubr.bf16.mxu0 0
  %3051 = vmatmul.mubr.bf16.gmra.mxu0 %v2926
  %v3052 = vpop.f32.mrf.mxu0
  %v3053 = vadd.f32 0.0, %v3052
  %v3054 = vpop.f32.mrf.mxu0
  %v3055 = vpop.f32.mrf.mxu0
  %v3056 = vadd.f32 0.0, %v3055
  %v3057 = vpop.f32.mrf.mxu0
  %3058 = vmatprep.mubr.bf16.mxu0 0
  %3059 = vmatmul.mubr.bf16.gmra.mxu0 %v2927
  %v3060 = vpop.f32.mrf.mxu0
  %v3061 = vadd.f32 0.0, %v3060
  %v3062 = vpop.f32.mrf.mxu0
  %v3063 = vpop.f32.mrf.mxu0
  %v3064 = vadd.f32 0.0, %v3063
  %v3065 = vpop.f32.mrf.mxu0
  %3066 = vmatprep.mubr.bf16.mxu0 0
  %3067 = vmatmul.mubr.bf16.gmra.mxu0 %v2928
  %v3068 = vpop.f32.mrf.mxu0
  %v3069 = vadd.f32 0.0, %v3068
  %v3070 = vpop.f32.mrf.mxu0
  %v3071 = vpop.f32.mrf.mxu0
  %v3072 = vadd.f32 0.0, %v3071
  %v3073 = vpop.f32.mrf.mxu0
  %3074 = vmatprep.mubr.bf16.mxu0 0
  %3075 = vmatmul.mubr.bf16.gmra.mxu0 %v2929
  %v3076 = vpop.f32.mrf.mxu0
  %v3077 = vadd.f32 0.0, %v3076
  %v3078 = vpop.f32.mrf.mxu0
  %v3079 = vpop.f32.mrf.mxu0
  %v3080 = vadd.f32 0.0, %v3079
  %v3081 = vpop.f32.mrf.mxu0
  %3082 = vdwg.mxu0
  %s3083 = scalar_lea.vmem %s5, 32
  %v3084 = vld [vmem:[%s3083] sm:$0xff]
  %v3085 = vpack.c.bf16 %v3024, %v3021
  %v3086 = vpack.c.bf16 %v3032, %v3029
  %v3087 = vpack.c.bf16 %v3040, %v3037
  %v3088 = vpack.c.bf16 %v3048, %v3045
  %v3089 = vpack.c.bf16 %v3056, %v3053
  %v3090 = vpack.c.bf16 %v3064, %v3061
  %v3091 = vpack.c.bf16 %v3072, %v3069
  %v3092 = vpack.c.bf16 %v3080, %v3077
  %s3093 = scalar_lea.vmem %s3, 256
  %v3094 = vld [vmem:[%s3093] sm:$0xf]
  %v3095 = vld [vmem:[%s3093 + $0x4] sm:$0xf]
  %v3096 = vld [vmem:[%s3093 + $0x8] sm:$0xf]
  %v3097 = vld [vmem:[%s3093 + $0xc] sm:$0xf]
  %v3098 = vld [vmem:[%s3093 + $0x10] sm:$0xf]
  %v3099 = vld [vmem:[%s3093 + $0x14] sm:$0xf]
  %v3100 = vld [vmem:[%s3093 + $0x18] sm:$0xf]
  %v3101 = vld [vmem:[%s3093 + $0x1c] sm:$0xf]
  %v3102 = vld [vmem:[%s3093 + $0x20] sm:$0xf]
  %v3103 = vld [vmem:[%s3093 + $0x24] sm:$0xf]
  %v3104 = vld [vmem:[%s3093 + $0x28] sm:$0xf]
  %v3105 = vld [vmem:[%s3093 + $0x2c] sm:$0xf]
  %v3106 = vld [vmem:[%s3093 + $0x30] sm:$0xf]
  %v3107 = vld [vmem:[%s3093 + $0x34] sm:$0xf]
  %v3108 = vld [vmem:[%s3093 + $0x38] sm:$0xf]
  %v3109 = vld [vmem:[%s3093 + $0x3c] sm:$0xf]
  %v3110 = vlaneseq
  %v3111 = vshrl.u32 %v3110, 7
  %v3112 = vsub.s32 0, %v3111
  %v3113 = vrot.slane %v3084, %v3112
  %v3130 = vunpack.c.l.b16 %v3094
  %v3131 = vunpack.c.l.b16 %v3095
  %v3132 = vunpack.c.l.b16 %v3096
  %v3133 = vunpack.c.l.b16 %v3097
  %v3134 = vunpack.c.l.b16 %v3098
  %v3135 = vunpack.c.l.b16 %v3099
  %v3136 = vunpack.c.l.b16 %v3100
  %v3137 = vunpack.c.l.b16 %v3101
  %v3138 = vunpack.c.l.b16 %v3102
  %v3139 = vunpack.c.l.b16 %v3103
  %v3140 = vunpack.c.l.b16 %v3104
  %v3141 = vunpack.c.l.b16 %v3105
  %v3142 = vunpack.c.l.b16 %v3106
  %v3143 = vunpack.c.l.b16 %v3107
  %v3144 = vunpack.c.l.b16 %v3108
  %v3145 = vunpack.c.l.b16 %v3109
  %v3146 = vpack.c.b16 %v3131, %v3130
  %v3147 = vpack.c.b16 %v3133, %v3132
  %v3148 = vpack.c.b16 %v3135, %v3134
  %v3149 = vpack.c.b16 %v3137, %v3136
  %v3150 = vpack.c.b16 %v3139, %v3138
  %v3151 = vpack.c.b16 %v3141, %v3140
  %v3152 = vpack.c.b16 %v3143, %v3142
  %v3153 = vpack.c.b16 %v3145, %v3144
  %3162 = vmatprep.subr.bf16.mxu0 0
  %3163 = vmatpush1.bf16.msra.mxu0 %v3153
  %3164 = vmatprep.subr.bf16.mxu0 0
  %3165 = vmatpush1.bf16.msra.mxu0 %v3152
  %3166 = vmatprep.subr.bf16.mxu0 0
  %3167 = vmatpush1.bf16.msra.mxu0 %v3151
  %3168 = vmatprep.subr.bf16.mxu0 0
  %3169 = vmatpush1.bf16.msra.mxu0 %v3150
  %3170 = vmatprep.subr.bf16.mxu0 0
  %3171 = vmatpush1.bf16.msra.mxu0 %v3149
  %3172 = vmatprep.subr.bf16.mxu0 0
  %3173 = vmatpush1.bf16.msra.mxu0 %v3148
  %3174 = vmatprep.subr.bf16.mxu0 0
  %3175 = vmatpush1.bf16.msra.mxu0 %v3147
  %3176 = vmatprep.subr.bf16.mxu0 0
  %3177 = vmatpush1.bf16.msra.mxu0 %v3146
  %3178 = vmatprep.subr.bf16.mxu0 0
  %3179 = vmatpush2.bf16.msra.mxu0 0
  %3180 = vmatprep.subr.bf16.mxu0 0
  %3181 = vmatpush2.bf16.msra.mxu0 0
  %3182 = vmatprep.subr.bf16.mxu0 0
  %3183 = vmatpush2.bf16.msra.mxu0 0
  %3184 = vmatprep.subr.bf16.mxu0 0
  %3185 = vmatpush2.bf16.msra.mxu0 0
  %3186 = vmatprep.subr.bf16.mxu0 0
  %3187 = vmatpush2.bf16.msra.mxu0 0
  %3188 = vmatprep.subr.bf16.mxu0 0
  %3189 = vmatpush2.bf16.msra.mxu0 0
  %3190 = vmatprep.subr.bf16.mxu0 0
  %3191 = vmatpush2.bf16.msra.mxu0 0
  %3192 = vmatprep.subr.bf16.mxu0 0
  %3193 = vmatpush2.bf16.msra.mxu0 0
  %3194 = vmatprep.mubr.bf16.mxu0 0
  %3195 = vmatmul.mubr.bf16.gmra.mxu0 %v3085
  %v3196 = vpop.f32.mrf.mxu0
  %v3197 = vadd.f32 %v3113, %v3196
  %v3198 = vpop.f32.mrf.mxu0
  %v3199 = vpop.f32.mrf.mxu0
  %v3200 = vadd.f32 %v3113, %v3199
  %v3201 = vpop.f32.mrf.mxu0
  %3202 = vmatprep.mubr.bf16.mxu0 0
  %3203 = vmatmul.mubr.bf16.gmra.mxu0 %v3086
  %v3204 = vpop.f32.mrf.mxu0
  %v3205 = vadd.f32 %v3113, %v3204
  %v3206 = vpop.f32.mrf.mxu0
  %v3207 = vpop.f32.mrf.mxu0
  %v3208 = vadd.f32 %v3113, %v3207
  %v3209 = vpop.f32.mrf.mxu0
  %3210 = vmatprep.mubr.bf16.mxu0 0
  %3211 = vmatmul.mubr.bf16.gmra.mxu0 %v3087
  %v3212 = vpop.f32.mrf.mxu0
  %v3213 = vadd.f32 %v3113, %v3212
  %v3214 = vpop.f32.mrf.mxu0
  %v3215 = vpop.f32.mrf.mxu0
  %v3216 = vadd.f32 %v3113, %v3215
  %v3217 = vpop.f32.mrf.mxu0
  %3218 = vmatprep.mubr.bf16.mxu0 0
  %3219 = vmatmul.mubr.bf16.gmra.mxu0 %v3088
  %v3220 = vpop.f32.mrf.mxu0
  %v3221 = vadd.f32 %v3113, %v3220
  %v3222 = vpop.f32.mrf.mxu0
  %v3223 = vpop.f32.mrf.mxu0
  %v3224 = vadd.f32 %v3113, %v3223
  %v3225 = vpop.f32.mrf.mxu0
  %3226 = vmatprep.mubr.bf16.mxu0 0
  %3227 = vmatmul.mubr.bf16.gmra.mxu0 %v3089
  %v3228 = vpop.f32.mrf.mxu0
  %v3229 = vadd.f32 %v3113, %v3228
  %v3230 = vpop.f32.mrf.mxu0
  %v3231 = vpop.f32.mrf.mxu0
  %v3232 = vadd.f32 %v3113, %v3231
  %v3233 = vpop.f32.mrf.mxu0
  %3234 = vmatprep.mubr.bf16.mxu0 0
  %3235 = vmatmul.mubr.bf16.gmra.mxu0 %v3090
  %v3236 = vpop.f32.mrf.mxu0
  %v3237 = vadd.f32 %v3113, %v3236
  %v3238 = vpop.f32.mrf.mxu0
  %v3239 = vpop.f32.mrf.mxu0
  %v3240 = vadd.f32 %v3113, %v3239
  %v3241 = vpop.f32.mrf.mxu0
  %3242 = vmatprep.mubr.bf16.mxu0 0
  %3243 = vmatmul.mubr.bf16.gmra.mxu0 %v3091
  %v3244 = vpop.f32.mrf.mxu0
  %v3245 = vadd.f32 %v3113, %v3244
  %v3246 = vpop.f32.mrf.mxu0
  %v3247 = vpop.f32.mrf.mxu0
  %v3248 = vadd.f32 %v3113, %v3247
  %v3249 = vpop.f32.mrf.mxu0
  %3250 = vmatprep.mubr.bf16.mxu0 0
  %3251 = vmatmul.mubr.bf16.gmra.mxu0 %v3092
  %v3252 = vpop.f32.mrf.mxu0
  %v3253 = vadd.f32 %v3113, %v3252
  %v3254 = vpop.f32.mrf.mxu0
  %v3255 = vpop.f32.mrf.mxu0
  %v3256 = vadd.f32 %v3113, %v3255
  %v3257 = vpop.f32.mrf.mxu0
  %3258 = vdwg.mxu0
  %v3259 = vmax.f32 %v3197, 0.0
  %v3260 = vmax.f32 %v3200, 0.0
  %v3261 = vmax.f32 %v3205, 0.0
  %v3262 = vmax.f32 %v3208, 0.0
  %v3263 = vmax.f32 %v3213, 0.0
  %v3264 = vmax.f32 %v3216, 0.0
  %v3265 = vmax.f32 %v3221, 0.0
  %v3266 = vmax.f32 %v3224, 0.0
  %v3267 = vmax.f32 %v3229, 0.0
  %v3268 = vmax.f32 %v3232, 0.0
  %v3269 = vmax.f32 %v3237, 0.0
  %v3270 = vmax.f32 %v3240, 0.0
  %v3271 = vmax.f32 %v3245, 0.0
  %v3272 = vmax.f32 %v3248, 0.0
  %v3273 = vmax.f32 %v3253, 0.0
  %v3274 = vmax.f32 %v3256, 0.0
  %v3275 = vpack.c.bf16 %v3260, %v3259
  %v3276 = vpack.c.bf16 %v3262, %v3261
  %v3277 = vpack.c.bf16 %v3264, %v3263
  %v3278 = vpack.c.bf16 %v3266, %v3265
  %v3279 = vpack.c.bf16 %v3268, %v3267
  %v3280 = vpack.c.bf16 %v3270, %v3269
  %v3281 = vpack.c.bf16 %v3272, %v3271
  %v3282 = vpack.c.bf16 %v3274, %v3273
  %s3283 = scalar_lea.vmem %s4, 256
  %v3284 = vld [vmem:[%s3283] sm:$0xf]
  %v3285 = vld [vmem:[%s3283 + $0x4] sm:$0xf]
  %v3286 = vld [vmem:[%s3283 + $0x8] sm:$0xf]
  %v3287 = vld [vmem:[%s3283 + $0xc] sm:$0xf]
  %v3288 = vld [vmem:[%s3283 + $0x10] sm:$0xf]
  %v3289 = vld [vmem:[%s3283 + $0x14] sm:$0xf]
  %v3290 = vld [vmem:[%s3283 + $0x18] sm:$0xf]
  %v3291 = vld [vmem:[%s3283 + $0x1c] sm:$0xf]
  %v3292 = vld [vmem:[%s3283 + $0x20] sm:$0xf]
  %v3293 = vld [vmem:[%s3283 + $0x24] sm:$0xf]
  %v3294 = vld [vmem:[%s3283 + $0x28] sm:$0xf]
  %v3295 = vld [vmem:[%s3283 + $0x2c] sm:$0xf]
  %v3296 = vld [vmem:[%s3283 + $0x30] sm:$0xf]
  %v3297 = vld [vmem:[%s3283 + $0x34] sm:$0xf]
  %v3298 = vld [vmem:[%s3283 + $0x38] sm:$0xf]
  %v3299 = vld [vmem:[%s3283 + $0x3c] sm:$0xf]
  %v3300 = vlaneseq
  %v3301 = vshrl.u32 %v3300, 7
  %v3302 = vsub.s32 1, %v3301
  %v3303 = vrot.slane %v3084, %v3302
  %v3320 = vunpack.c.l.b16 %v3284
  %v3321 = vunpack.c.l.b16 %v3285
  %v3322 = vunpack.c.l.b16 %v3286
  %v3323 = vunpack.c.l.b16 %v3287
  %v3324 = vunpack.c.l.b16 %v3288
  %v3325 = vunpack.c.l.b16 %v3289
  %v3326 = vunpack.c.l.b16 %v3290
  %v3327 = vunpack.c.l.b16 %v3291
  %v3328 = vunpack.c.l.b16 %v3292
  %v3329 = vunpack.c.l.b16 %v3293
  %v3330 = vunpack.c.l.b16 %v3294
  %v3331 = vunpack.c.l.b16 %v3295
  %v3332 = vunpack.c.l.b16 %v3296
  %v3333 = vunpack.c.l.b16 %v3297
  %v3334 = vunpack.c.l.b16 %v3298
  %v3335 = vunpack.c.l.b16 %v3299
  %v3336 = vpack.c.b16 %v3321, %v3320
  %v3337 = vpack.c.b16 %v3323, %v3322
  %v3338 = vpack.c.b16 %v3325, %v3324
  %v3339 = vpack.c.b16 %v3327, %v3326
  %v3340 = vpack.c.b16 %v3329, %v3328
  %v3341 = vpack.c.b16 %v3331, %v3330
  %v3342 = vpack.c.b16 %v3333, %v3332
  %v3343 = vpack.c.b16 %v3335, %v3334
  %3352 = vmatprep.subr.bf16.mxu0 0
  %3353 = vmatpush1.bf16.msra.mxu0 %v3343
  %3354 = vmatprep.subr.bf16.mxu0 0
  %3355 = vmatpush1.bf16.msra.mxu0 %v3342
  %3356 = vmatprep.subr.bf16.mxu0 0
  %3357 = vmatpush1.bf16.msra.mxu0 %v3341
  %3358 = vmatprep.subr.bf16.mxu0 0
  %3359 = vmatpush1.bf16.msra.mxu0 %v3340
  %3360 = vmatprep.subr.bf16.mxu0 0
  %3361 = vmatpush1.bf16.msra.mxu0 %v3339
  %3362 = vmatprep.subr.bf16.mxu0 0
  %3363 = vmatpush1.bf16.msra.mxu0 %v3338
  %3364 = vmatprep.subr.bf16.mxu0 0
  %3365 = vmatpush1.bf16.msra.mxu0 %v3337
  %3366 = vmatprep.subr.bf16.mxu0 0
  %3367 = vmatpush1.bf16.msra.mxu0 %v3336
  %3368 = vmatprep.subr.bf16.mxu0 0
  %3369 = vmatpush2.bf16.msra.mxu0 0
  %3370 = vmatprep.subr.bf16.mxu0 0
  %3371 = vmatpush2.bf16.msra.mxu0 0
  %3372 = vmatprep.subr.bf16.mxu0 0
  %3373 = vmatpush2.bf16.msra.mxu0 0
  %3374 = vmatprep.subr.bf16.mxu0 0
  %3375 = vmatpush2.bf16.msra.mxu0 0
  %3376 = vmatprep.subr.bf16.mxu0 0
  %3377 = vmatpush2.bf16.msra.mxu0 0
  %3378 = vmatprep.subr.bf16.mxu0 0
  %3379 = vmatpush2.bf16.msra.mxu0 0
  %3380 = vmatprep.subr.bf16.mxu0 0
  %3381 = vmatpush2.bf16.msra.mxu0 0
  %3382 = vmatprep.subr.bf16.mxu0 0
  %3383 = vmatpush2.bf16.msra.mxu0 0
  %3384 = vmatprep.mubr.bf16.mxu0 0
  %3385 = vmatmul.mubr.bf16.gmra.mxu0 %v3275
  %v3386 = vpop.f32.mrf.mxu0
  %v3387 = vadd.f32 %v3303, %v3386
  %v3388 = vpop.f32.mrf.mxu0
  %v3389 = vpop.f32.mrf.mxu0
  %v3390 = vadd.f32 %v3303, %v3389
  %v3391 = vpop.f32.mrf.mxu0
  %3392 = vmatprep.mubr.bf16.mxu0 0
  %3393 = vmatmul.mubr.bf16.gmra.mxu0 %v3276
  %v3394 = vpop.f32.mrf.mxu0
  %v3395 = vadd.f32 %v3303, %v3394
  %v3396 = vpop.f32.mrf.mxu0
  %v3397 = vpop.f32.mrf.mxu0
  %v3398 = vadd.f32 %v3303, %v3397
  %v3399 = vpop.f32.mrf.mxu0
  %3400 = vmatprep.mubr.bf16.mxu0 0
  %3401 = vmatmul.mubr.bf16.gmra.mxu0 %v3277
  %v3402 = vpop.f32.mrf.mxu0
  %v3403 = vadd.f32 %v3303, %v3402
  %v3404 = vpop.f32.mrf.mxu0
  %v3405 = vpop.f32.mrf.mxu0
  %v3406 = vadd.f32 %v3303, %v3405
  %v3407 = vpop.f32.mrf.mxu0
  %3408 = vmatprep.mubr.bf16.mxu0 0
  %3409 = vmatmul.mubr.bf16.gmra.mxu0 %v3278
  %v3410 = vpop.f32.mrf.mxu0
  %v3411 = vadd.f32 %v3303, %v3410
  %v3412 = vpop.f32.mrf.mxu0
  %v3413 = vpop.f32.mrf.mxu0
  %v3414 = vadd.f32 %v3303, %v3413
  %v3415 = vpop.f32.mrf.mxu0
  %3416 = vmatprep.mubr.bf16.mxu0 0
  %3417 = vmatmul.mubr.bf16.gmra.mxu0 %v3279
  %v3418 = vpop.f32.mrf.mxu0
  %v3419 = vadd.f32 %v3303, %v3418
  %v3420 = vpop.f32.mrf.mxu0
  %v3421 = vpop.f32.mrf.mxu0
  %v3422 = vadd.f32 %v3303, %v3421
  %v3423 = vpop.f32.mrf.mxu0
  %3424 = vmatprep.mubr.bf16.mxu0 0
  %3425 = vmatmul.mubr.bf16.gmra.mxu0 %v3280
  %v3426 = vpop.f32.mrf.mxu0
  %v3427 = vadd.f32 %v3303, %v3426
  %v3428 = vpop.f32.mrf.mxu0
  %v3429 = vpop.f32.mrf.mxu0
  %v3430 = vadd.f32 %v3303, %v3429
  %v3431 = vpop.f32.mrf.mxu0
  %3432 = vmatprep.mubr.bf16.mxu0 0
  %3433 = vmatmul.mubr.bf16.gmra.mxu0 %v3281
  %v3434 = vpop.f32.mrf.mxu0
  %v3435 = vadd.f32 %v3303, %v3434
  %v3436 = vpop.f32.mrf.mxu0
  %v3437 = vpop.f32.mrf.mxu0
  %v3438 = vadd.f32 %v3303, %v3437
  %v3439 = vpop.f32.mrf.mxu0
  %3440 = vmatprep.mubr.bf16.mxu0 0
  %3441 = vmatmul.mubr.bf16.gmra.mxu0 %v3282
  %v3442 = vpop.f32.mrf.mxu0
  %v3443 = vadd.f32 %v3303, %v3442
  %v3444 = vpop.f32.mrf.mxu0
  %v3445 = vpop.f32.mrf.mxu0
  %v3446 = vadd.f32 %v3303, %v3445
  %v3447 = vpop.f32.mrf.mxu0
  %3448 = vdwg.mxu0
  %v3449 = vmax.f32 %v3387, 0.0
  %v3450 = vmax.f32 %v3390, 0.0
  %v3451 = vmax.f32 %v3395, 0.0
  %v3452 = vmax.f32 %v3398, 0.0
  %v3453 = vmax.f32 %v3403, 0.0
  %v3454 = vmax.f32 %v3406, 0.0
  %v3455 = vmax.f32 %v3411, 0.0
  %v3456 = vmax.f32 %v3414, 0.0
  %v3457 = vmax.f32 %v3419, 0.0
  %v3458 = vmax.f32 %v3422, 0.0
  %v3459 = vmax.f32 %v3427, 0.0
  %v3460 = vmax.f32 %v3430, 0.0
  %v3461 = vmax.f32 %v3435, 0.0
  %v3462 = vmax.f32 %v3438, 0.0
  %v3463 = vmax.f32 %v3443, 0.0
  %v3464 = vmax.f32 %v3446, 0.0
  %v3465 = vlaneseq
  %v3466 = vshrl.u32 %v3465, 7
  %v3467 = vsub.s32 2, %v3466
  %v3468 = vrot.slane %v3084, %v3467
  %v3469 = vadd.f32 %v3449, %v3468
  %v3470 = vadd.f32 %v3450, %v3468
  %v3471 = vadd.f32 %v3451, %v3468
  %v3472 = vadd.f32 %v3452, %v3468
  %v3473 = vadd.f32 %v3453, %v3468
  %v3474 = vadd.f32 %v3454, %v3468
  %v3475 = vadd.f32 %v3455, %v3468
  %v3476 = vadd.f32 %v3456, %v3468
  %v3477 = vadd.f32 %v3457, %v3468
  %v3478 = vadd.f32 %v3458, %v3468
  %v3479 = vadd.f32 %v3459, %v3468
  %v3480 = vadd.f32 %v3460, %v3468
  %v3481 = vadd.f32 %v3461, %v3468
  %v3482 = vadd.f32 %v3462, %v3468
  %v3483 = vadd.f32 %v3463, %v3468
  %v3484 = vadd.f32 %v3464, %v3468
  %v3485 = vpack.c.bf16 %v3470, %v3469
  %v3486 = vpack.c.bf16 %v3472, %v3471
  %v3487 = vpack.c.bf16 %v3474, %v3473
  %v3488 = vpack.c.bf16 %v3476, %v3475
  %v3489 = vpack.c.bf16 %v3478, %v3477
  %v3490 = vpack.c.bf16 %v3480, %v3479
  %v3491 = vpack.c.bf16 %v3482, %v3481
  %v3492 = vpack.c.bf16 %v3484, %v3483
  %v3501 = vunpack.c.l.b16 %v3485
  %v3502 = vunpack.c.h.b16 %v3485
  %v3503 = vunpack.c.l.b16 %v3486
  %v3504 = vunpack.c.h.b16 %v3486
  %v3505 = vunpack.c.l.b16 %v3487
  %v3506 = vunpack.c.h.b16 %v3487
  %v3507 = vunpack.c.l.b16 %v3488
  %v3508 = vunpack.c.h.b16 %v3488
  %v3509 = vunpack.c.l.b16 %v3489
  %v3510 = vunpack.c.h.b16 %v3489
  %v3511 = vunpack.c.l.b16 %v3490
  %v3512 = vunpack.c.h.b16 %v3490
  %v3513 = vunpack.c.l.b16 %v3491
  %v3514 = vunpack.c.h.b16 %v3491
  %v3515 = vunpack.c.l.b16 %v3492
  %v3516 = vunpack.c.h.b16 %v3492
  %v3517 = vpack.c.b16 %v3501, %v3501
  %v3518 = vpack.c.b16 %v3502, %v3502
  %v3519 = vpack.c.b16 %v3503, %v3503
  %v3520 = vpack.c.b16 %v3504, %v3504
  %v3521 = vpack.c.b16 %v3505, %v3505
  %v3522 = vpack.c.b16 %v3506, %v3506
  %v3523 = vpack.c.b16 %v3507, %v3507
  %v3524 = vpack.c.b16 %v3508, %v3508
  %v3525 = vpack.c.b16 %v3509, %v3509
  %v3526 = vpack.c.b16 %v3510, %v3510
  %v3527 = vpack.c.b16 %v3511, %v3511
  %v3528 = vpack.c.b16 %v3512, %v3512
  %v3529 = vpack.c.b16 %v3513, %v3513
  %v3530 = vpack.c.b16 %v3514, %v3514
  %v3531 = vpack.c.b16 %v3515, %v3515
  %v3532 = vpack.c.b16 %v3516, %v3516
  %3549 = vst [vmem:[#allocation2] sm:$0xf] %v3517
  %3550 = vst [vmem:[#allocation2 + $0x4] sm:$0xf] %v3518
  %3551 = vst [vmem:[#allocation2 + $0x8] sm:$0xf] %v3519
  %3552 = vst [vmem:[#allocation2 + $0xc] sm:$0xf] %v3520
  %3553 = vst [vmem:[#allocation2 + $0x10] sm:$0xf] %v3521
  %3554 = vst [vmem:[#allocation2 + $0x14] sm:$0xf] %v3522
  %3555 = vst [vmem:[#allocation2 + $0x18] sm:$0xf] %v3523
  %3556 = vst [vmem:[#allocation2 + $0x1c] sm:$0xf] %v3524
  %3557 = vst [vmem:[#allocation2 + $0x20] sm:$0xf] %v3525
  %3558 = vst [vmem:[#allocation2 + $0x24] sm:$0xf] %v3526
  %3559 = vst [vmem:[#allocation2 + $0x28] sm:$0xf] %v3527
  %3560 = vst [vmem:[#allocation2 + $0x2c] sm:$0xf] %v3528
  %3561 = vst [vmem:[#allocation2 + $0x30] sm:$0xf] %v3529
  %3562 = vst [vmem:[#allocation2 + $0x34] sm:$0xf] %v3530
  %3563 = vst [vmem:[#allocation2 + $0x38] sm:$0xf] %v3531
  %3564 = vst [vmem:[#allocation2 + $0x3c] sm:$0xf] %v3532
  %v3565 = vld [vmem:[%s2] sm:$0xf]
  %v3566 = vld [vmem:[#allocation2] sm:$0xf]
  %v3567 = vld [vmem:[#allocation2 + $0x4] sm:$0xf]
  %v3568 = vld [vmem:[#allocation2 + $0x8] sm:$0xf]
  %v3569 = vld [vmem:[#allocation2 + $0xc] sm:$0xf]
  %v3570 = vld [vmem:[#allocation2 + $0x10] sm:$0xf]
  %v3571 = vld [vmem:[#allocation2 + $0x14] sm:$0xf]
  %v3572 = vld [vmem:[#allocation2 + $0x18] sm:$0xf]
  %v3573 = vld [vmem:[#allocation2 + $0x1c] sm:$0xf]
  %v3574 = vld [vmem:[#allocation2 + $0x20] sm:$0xf]
  %v3575 = vld [vmem:[#allocation2 + $0x24] sm:$0xf]
  %v3576 = vld [vmem:[#allocation2 + $0x28] sm:$0xf]
  %v3577 = vld [vmem:[#allocation2 + $0x2c] sm:$0xf]
  %v3578 = vld [vmem:[#allocation2 + $0x30] sm:$0xf]
  %v3579 = vld [vmem:[#allocation2 + $0x34] sm:$0xf]
  %v3580 = vld [vmem:[#allocation2 + $0x38] sm:$0xf]
  %v3581 = vld [vmem:[#allocation2 + $0x3c] sm:$0xf]
  %v3598 = vunpack.c.l.b16 %v3566
  %v3599 = vunpack.c.l.b16 %v3567
  %v3600 = vunpack.c.l.b16 %v3568
  %v3601 = vunpack.c.l.b16 %v3569
  %v3602 = vunpack.c.l.b16 %v3570
  %v3603 = vunpack.c.l.b16 %v3571
  %v3604 = vunpack.c.l.b16 %v3572
  %v3605 = vunpack.c.l.b16 %v3573
  %v3606 = vunpack.c.l.b16 %v3574
  %v3607 = vunpack.c.l.b16 %v3575
  %v3608 = vunpack.c.l.b16 %v3576
  %v3609 = vunpack.c.l.b16 %v3577
  %v3610 = vunpack.c.l.b16 %v3578
  %v3611 = vunpack.c.l.b16 %v3579
  %v3612 = vunpack.c.l.b16 %v3580
  %v3613 = vunpack.c.l.b16 %v3581
  %v3614 = vpack.c.b16 %v3599, %v3598
  %v3615 = vpack.c.b16 %v3601, %v3600
  %v3616 = vpack.c.b16 %v3603, %v3602
  %v3617 = vpack.c.b16 %v3605, %v3604
  %v3618 = vpack.c.b16 %v3607, %v3606
  %v3619 = vpack.c.b16 %v3609, %v3608
  %v3620 = vpack.c.b16 %v3611, %v3610
  %v3621 = vpack.c.b16 %v3613, %v3612
  %3630 = vmatprep.subr.bf16.mxu0 0
  %3631 = vmatpush1.bf16.msra.mxu0 %v3621
  %3632 = vmatprep.subr.bf16.mxu0 0
  %3633 = vmatpush1.bf16.msra.mxu0 %v3620
  %3634 = vmatprep.subr.bf16.mxu0 0
  %3635 = vmatpush1.bf16.msra.mxu0 %v3619
  %3636 = vmatprep.subr.bf16.mxu0 0
  %3637 = vmatpush1.bf16.msra.mxu0 %v3618
  %3638 = vmatprep.subr.bf16.mxu0 0
  %3639 = vmatpush1.bf16.msra.mxu0 %v3617
  %3640 = vmatprep.subr.bf16.mxu0 0
  %3641 = vmatpush1.bf16.msra.mxu0 %v3616
  %3642 = vmatprep.subr.bf16.mxu0 0
  %3643 = vmatpush1.bf16.msra.mxu0 %v3615
  %3644 = vmatprep.subr.bf16.mxu0 0
  %3645 = vmatpush1.bf16.msra.mxu0 %v3614
  %3646 = vmatprep.subr.bf16.mxu0 0
  %3647 = vmatpush2.bf16.msra.mxu0 0
  %3648 = vmatprep.subr.bf16.mxu0 0
  %3649 = vmatpush2.bf16.msra.mxu0 0
  %3650 = vmatprep.subr.bf16.mxu0 0
  %3651 = vmatpush2.bf16.msra.mxu0 0
  %3652 = vmatprep.subr.bf16.mxu0 0
  %3653 = vmatpush2.bf16.msra.mxu0 0
  %3654 = vmatprep.subr.bf16.mxu0 0
  %3655 = vmatpush2.bf16.msra.mxu0 0
  %3656 = vmatprep.subr.bf16.mxu0 0
  %3657 = vmatpush2.bf16.msra.mxu0 0
  %3658 = vmatprep.subr.bf16.mxu0 0
  %3659 = vmatpush2.bf16.msra.mxu0 0
  %3660 = vmatprep.subr.bf16.mxu0 0
  %3661 = vmatpush2.bf16.msra.mxu0 0
  %3662 = vmatprep.mubr.bf16.mxu0 0
  %3663 = vmatmul.mubr.bf16.gmra.mxu0 %v3565
  %v3664 = vpop.f32.mrf.mxu0
  %v3665 = vadd.f32 0.0, %v3664
  %v3666 = vpop.f32.mrf.mxu0
  %v3667 = vpop.f32.mrf.mxu0
  %v3668 = vpop.f32.mrf.mxu0
  %3669 = vdwg.mxu0
  %v3670 = vld [vmem:[%s8] sm:$0xff]
  %v3671 = vpack.c.bf16 %v3665, %v3665
  %v3672 = vld [vmem:[%s6] sm:$0xf]
  %v3673 = vld [vmem:[%s6 + $0x4] sm:$0xf]
  %v3674 = vld [vmem:[%s6 + $0x8] sm:$0xf]
  %v3675 = vld [vmem:[%s6 + $0xc] sm:$0xf]
  %v3676 = vld [vmem:[%s6 + $0x10] sm:$0xf]
  %v3677 = vld [vmem:[%s6 + $0x14] sm:$0xf]
  %v3678 = vld [vmem:[%s6 + $0x18] sm:$0xf]
  %v3679 = vld [vmem:[%s6 + $0x1c] sm:$0xf]
  %v3680 = vld [vmem:[%s6 + $0x20] sm:$0xf]
  %v3681 = vld [vmem:[%s6 + $0x24] sm:$0xf]
  %v3682 = vld [vmem:[%s6 + $0x28] sm:$0xf]
  %v3683 = vld [vmem:[%s6 + $0x2c] sm:$0xf]
  %v3684 = vld [vmem:[%s6 + $0x30] sm:$0xf]
  %v3685 = vld [vmem:[%s6 + $0x34] sm:$0xf]
  %v3686 = vld [vmem:[%s6 + $0x38] sm:$0xf]
  %v3687 = vld [vmem:[%s6 + $0x3c] sm:$0xf]
  %v3688 = vlaneseq
  %v3689 = vshrl.u32 %v3688, 7
  %v3690 = vsub.s32 0, %v3689
  %v3691 = vrot.slane %v3670, %v3690
  %v3708 = vunpack.c.l.b16 %v3672
  %v3709 = vunpack.c.l.b16 %v3673
  %v3710 = vunpack.c.l.b16 %v3674
  %v3711 = vunpack.c.l.b16 %v3675
  %v3712 = vunpack.c.l.b16 %v3676
  %v3713 = vunpack.c.l.b16 %v3677
  %v3714 = vunpack.c.l.b16 %v3678
  %v3715 = vunpack.c.l.b16 %v3679
  %v3716 = vunpack.c.l.b16 %v3680
  %v3717 = vunpack.c.l.b16 %v3681
  %v3718 = vunpack.c.l.b16 %v3682
  %v3719 = vunpack.c.l.b16 %v3683
  %v3720 = vunpack.c.l.b16 %v3684
  %v3721 = vunpack.c.l.b16 %v3685
  %v3722 = vunpack.c.l.b16 %v3686
  %v3723 = vunpack.c.l.b16 %v3687
  %v3724 = vpack.c.b16 %v3709, %v3708
  %v3725 = vpack.c.b16 %v3711, %v3710
  %v3726 = vpack.c.b16 %v3713, %v3712
  %v3727 = vpack.c.b16 %v3715, %v3714
  %v3728 = vpack.c.b16 %v3717, %v3716
  %v3729 = vpack.c.b16 %v3719, %v3718
  %v3730 = vpack.c.b16 %v3721, %v3720
  %v3731 = vpack.c.b16 %v3723, %v3722
  %3740 = vmatprep.subr.bf16.mxu0 0
  %3741 = vmatpush1.bf16.msra.mxu0 %v3731
  %3742 = vmatprep.subr.bf16.mxu0 0
  %3743 = vmatpush1.bf16.msra.mxu0 %v3730
  %3744 = vmatprep.subr.bf16.mxu0 0
  %3745 = vmatpush1.bf16.msra.mxu0 %v3729
  %3746 = vmatprep.subr.bf16.mxu0 0
  %3747 = vmatpush1.bf16.msra.mxu0 %v3728
  %3748 = vmatprep.subr.bf16.mxu0 0
  %3749 = vmatpush1.bf16.msra.mxu0 %v3727
  %3750 = vmatprep.subr.bf16.mxu0 0
  %3751 = vmatpush1.bf16.msra.mxu0 %v3726
  %3752 = vmatprep.subr.bf16.mxu0 0
  %3753 = vmatpush1.bf16.msra.mxu0 %v3725
  %3754 = vmatprep.subr.bf16.mxu0 0
  %3755 = vmatpush1.bf16.msra.mxu0 %v3724
  %3756 = vmatprep.subr.bf16.mxu0 0
  %3757 = vmatpush2.bf16.msra.mxu0 0
  %3758 = vmatprep.subr.bf16.mxu0 0
  %3759 = vmatpush2.bf16.msra.mxu0 0
  %3760 = vmatprep.subr.bf16.mxu0 0
  %3761 = vmatpush2.bf16.msra.mxu0 0
  %3762 = vmatprep.subr.bf16.mxu0 0
  %3763 = vmatpush2.bf16.msra.mxu0 0
  %3764 = vmatprep.subr.bf16.mxu0 0
  %3765 = vmatpush2.bf16.msra.mxu0 0
  %3766 = vmatprep.subr.bf16.mxu0 0
  %3767 = vmatpush2.bf16.msra.mxu0 0
  %3768 = vmatprep.subr.bf16.mxu0 0
  %3769 = vmatpush2.bf16.msra.mxu0 0
  %3770 = vmatprep.subr.bf16.mxu0 0
  %3771 = vmatpush2.bf16.msra.mxu0 0
  %3772 = vmatprep.mubr.bf16.mxu0 0
  %3773 = vmatmul.mubr.bf16.gmra.mxu0 %v3671
  %v3774 = vpop.f32.mrf.mxu0
  %v3775 = vadd.f32 %v3691, %v3774
  %v3776 = vpop.f32.mrf.mxu0
  %v3777 = vpop.f32.mrf.mxu0
  %v3778 = vpop.f32.mrf.mxu0
  %3779 = vdwg.mxu0
  %v3780 = vmax.f32 %v3775, 0.0
  %v3781 = vpack.c.bf16 %v3780, %v3780
  %v3782 = vld [vmem:[%s7] sm:$0xf]
  %v3783 = vld [vmem:[%s7 + $0x4] sm:$0xf]
  %v3784 = vld [vmem:[%s7 + $0x8] sm:$0xf]
  %v3785 = vld [vmem:[%s7 + $0xc] sm:$0xf]
  %v3786 = vld [vmem:[%s7 + $0x10] sm:$0xf]
  %v3787 = vld [vmem:[%s7 + $0x14] sm:$0xf]
  %v3788 = vld [vmem:[%s7 + $0x18] sm:$0xf]
  %v3789 = vld [vmem:[%s7 + $0x1c] sm:$0xf]
  %v3790 = vld [vmem:[%s7 + $0x20] sm:$0xf]
  %v3791 = vld [vmem:[%s7 + $0x24] sm:$0xf]
  %v3792 = vld [vmem:[%s7 + $0x28] sm:$0xf]
  %v3793 = vld [vmem:[%s7 + $0x2c] sm:$0xf]
  %v3794 = vld [vmem:[%s7 + $0x30] sm:$0xf]
  %v3795 = vld [vmem:[%s7 + $0x34] sm:$0xf]
  %v3796 = vld [vmem:[%s7 + $0x38] sm:$0xf]
  %v3797 = vld [vmem:[%s7 + $0x3c] sm:$0xf]
  %v3798 = vlaneseq
  %v3799 = vshrl.u32 %v3798, 7
  %v3800 = vsub.s32 1, %v3799
  %v3801 = vrot.slane %v3670, %v3800
  %v3818 = vunpack.c.l.b16 %v3782
  %v3819 = vunpack.c.l.b16 %v3783
  %v3820 = vunpack.c.l.b16 %v3784
  %v3821 = vunpack.c.l.b16 %v3785
  %v3822 = vunpack.c.l.b16 %v3786
  %v3823 = vunpack.c.l.b16 %v3787
  %v3824 = vunpack.c.l.b16 %v3788
  %v3825 = vunpack.c.l.b16 %v3789
  %v3826 = vunpack.c.l.b16 %v3790
  %v3827 = vunpack.c.l.b16 %v3791
  %v3828 = vunpack.c.l.b16 %v3792
  %v3829 = vunpack.c.l.b16 %v3793
  %v3830 = vunpack.c.l.b16 %v3794
  %v3831 = vunpack.c.l.b16 %v3795
  %v3832 = vunpack.c.l.b16 %v3796
  %v3833 = vunpack.c.l.b16 %v3797
  %v3834 = vpack.c.b16 %v3819, %v3818
  %v3835 = vpack.c.b16 %v3821, %v3820
  %v3836 = vpack.c.b16 %v3823, %v3822
  %v3837 = vpack.c.b16 %v3825, %v3824
  %v3838 = vpack.c.b16 %v3827, %v3826
  %v3839 = vpack.c.b16 %v3829, %v3828
  %v3840 = vpack.c.b16 %v3831, %v3830
  %v3841 = vpack.c.b16 %v3833, %v3832
  %3850 = vmatprep.subr.bf16.mxu0 0
  %3851 = vmatpush1.bf16.msra.mxu0 %v3841
  %3852 = vmatprep.subr.bf16.mxu0 0
  %3853 = vmatpush1.bf16.msra.mxu0 %v3840
  %3854 = vmatprep.subr.bf16.mxu0 0
  %3855 = vmatpush1.bf16.msra.mxu0 %v3839
  %3856 = vmatprep.subr.bf16.mxu0 0
  %3857 = vmatpush1.bf16.msra.mxu0 %v3838
  %3858 = vmatprep.subr.bf16.mxu0 0
  %3859 = vmatpush1.bf16.msra.mxu0 %v3837
  %3860 = vmatprep.subr.bf16.mxu0 0
  %3861 = vmatpush1.bf16.msra.mxu0 %v3836
  %3862 = vmatprep.subr.bf16.mxu0 0
  %3863 = vmatpush1.bf16.msra.mxu0 %v3835
  %3864 = vmatprep.subr.bf16.mxu0 0
  %3865 = vmatpush1.bf16.msra.mxu0 %v3834
  %3866 = vmatprep.subr.bf16.mxu0 0
  %3867 = vmatpush2.bf16.msra.mxu0 0
  %3868 = vmatprep.subr.bf16.mxu0 0
  %3869 = vmatpush2.bf16.msra.mxu0 0
  %3870 = vmatprep.subr.bf16.mxu0 0
  %3871 = vmatpush2.bf16.msra.mxu0 0
  %3872 = vmatprep.subr.bf16.mxu0 0
  %3873 = vmatpush2.bf16.msra.mxu0 0
  %3874 = vmatprep.subr.bf16.mxu0 0
  %3875 = vmatpush2.bf16.msra.mxu0 0
  %3876 = vmatprep.subr.bf16.mxu0 0
  %3877 = vmatpush2.bf16.msra.mxu0 0
  %3878 = vmatprep.subr.bf16.mxu0 0
  %3879 = vmatpush2.bf16.msra.mxu0 0
  %3880 = vmatprep.subr.bf16.mxu0 0
  %3881 = vmatpush2.bf16.msra.mxu0 0
  %3882 = vmatprep.mubr.bf16.mxu0 0
  %3883 = vmatmul.mubr.bf16.gmra.mxu0 %v3781
  %v3884 = vpop.f32.mrf.mxu0
  %v3885 = vadd.f32 %v3801, %v3884
  %v3886 = vpop.f32.mrf.mxu0
  %v3887 = vpop.f32.mrf.mxu0
  %v3888 = vpop.f32.mrf.mxu0
  %3889 = vdwg.mxu0
  %3890 = vst [vmem:[%s9] sm:$0xff] %v3885
  // Predicated region
  $region38: #{gin_forward.1} parent=0 // pred_check
    _
  $region39: #{gin_forward.1} parent=0 // pred_check_branch
    %3892 = sbr.rel (0) target = $region41
  $region40: #{gin_forward.1} parent=0 // pred_region
    _
  $region41: #{gin_forward.1} parent=0 // pred_fallthru
    _
  // Predicated region
  $region42: #{gin_forward.1} parent=0 // pred_check
    _
  $region43: #{gin_forward.1} parent=0 // pred_check_branch
    %3894 = sbr.rel (0) target = $region45
  $region44: #{gin_forward.1} parent=0 // pred_region
    _
  $region45: #{gin_forward.1} parent=0 // pred_fallthru
    _

</llo_original>
